<compile_context>
chip_gen: v6e
topology: v6e:2x2x1
jax: 0.10.0
libtpu: 0.0.40
codegen_flags: <defaults>
</compile_context>

<pallas_src>
import functools
import numpy as np
import jax
import jax.numpy as jnp
from jax.experimental import pallas as pl
from jax.experimental.pallas import tpu as pltpu


# ----------------------------------------------------------------------------
# db2 wavelet filters (mirrors create_wavelet_filter, hardcoded instead of pywt)
# ----------------------------------------------------------------------------
def make_db2_bands():
    s3 = np.sqrt(3.0)
    d = 4.0 * np.sqrt(2.0)
    rec_lo = np.array([(1 + s3) / d, (3 + s3) / d,
                       (3 - s3) / d, (1 - s3) / d], np.float64)
    rec_hi = np.array([rec_lo[3], -rec_lo[2], rec_lo[1], -rec_lo[0]], np.float64)
    dec_lo = rec_lo[::-1].copy()
    dec_hi = rec_hi[::-1].copy()

    # create_wavelet_filter reverses dec_* once; rec_* are reversed twice (noop)
    dlo, dhi = dec_lo[::-1], dec_hi[::-1]
    dec_bands = np.stack([np.outer(dlo, dlo), np.outer(dhi, dlo),
                          np.outer(dlo, dhi), np.outer(dhi, dhi)], 0)   # (4,4,4)
    rec_bands = np.stack([np.outer(rec_lo, rec_lo), np.outer(rec_hi, rec_lo),
                          np.outer(rec_lo, rec_hi), np.outer(rec_hi, rec_hi)], 0)
    return dec_bands.astype(np.float32), rec_bands.astype(np.float32)


# ----------------------------------------------------------------------------
# constant spatial operator matrices (numpy, built once on host)
# ----------------------------------------------------------------------------
def build_dwt_ops(dec_bands, H, W):
    """F.conv2d(stride=2, pad=1, 4x4, grouped) as 4 (H*W, h2*w2) operators."""
    h2, w2 = H // 2, W // 2
    ops = np.zeros((4, H * W, h2 * w2), np.float32)
    for band in range(4):
        f = dec_bands[band]
        for yc in range(h2):
            for xc in range(w2):
                for ky in range(4):
                    for kx in range(4):
                        y, x = 2 * yc + ky - 1, 2 * xc + kx - 1
                        if 0 <= y < H and 0 <= x < W:
                            ops[band, y * W + x, yc * w2 + xc] += f[ky, kx]
    return ops


def build_iwt_ops(rec_bands, H, W):
    """conv_transpose2d(stride=2, pad=1, 4x4) as 4 (h2*w2, H*W) operators.

    Only the real stride-2 taps are present (structural zeros removed)."""
    h2, w2 = H // 2, W // 2
    ops = np.zeros((4, h2 * w2, H * W), np.float32)
    for band in range(4):
        f = rec_bands[band]
        for yc in range(h2):
            for xc in range(w2):
                for ky in range(4):
                    for kx in range(4):
                        y, x = 2 * yc + ky - 1, 2 * xc + kx - 1
                        if 0 <= y < H and 0 <= x < W:
                            ops[band, yc * w2 + xc, y * W + x] += f[ky, kx]
    return ops


def build_conv1d_shifts_rowmajor(h2, w2, k):
    """Conv1d over the row-major flattened (y*w2+x) sequence (CH path)."""
    L = h2 * w2
    p = k // 2
    S = np.zeros((k, L, L), np.float32)
    for dk in range(k):
        for t_out in range(L):
            t_in = t_out + dk - p
            if 0 <= t_in < L:
                S[dk, t_in, t_out] = 1.0
    return S


def build_conv1d_shifts_colmajor(h2, w2, k):
    """Conv1d over the transpose-flattened (x*h2+y) sequence, with the output
    reshaped row-major WITHOUT permuting back (exactly the CV path)."""
    L = h2 * w2
    p = k // 2
    S = np.zeros((k, L, L), np.float32)
    for dk in range(k):
        for t_out in range(L):
            t_in = t_out + dk - p
            if 0 <= t_in < L:
                x_in, y_in = divmod(t_in, h2)          # t_in = x*h2 + y
                S[dk, y_in * w2 + x_in, t_out] = 1.0
    return S


def build_conv2d_shifts(h2, w2, k):
    """Conv2d(k x k, pad=k//2) spatial shifts over row-major (y*w2+x)."""
    L = h2 * w2
    p = k // 2
    S = np.zeros((k * k, L, L), np.float32)
    for dy in range(k):
        for dx in range(k):
            idx = dy * k + dx
            for y in range(h2):
                for x in range(w2):
                    yi, xi = y + dy - p, x + dx - p
                    if 0 <= yi < h2 and 0 <= xi < w2:
                        S[idx, yi * w2 + xi, y * w2 + x] = 1.0
    return S


def build_bilinear_up_op(H, W):
    """UpsamplingBilinear2d(scale_factor=2), align_corners=True, as one
    (h2*w2, H*W) right-operator."""
    def mat(out_size, in_size):
        A = np.zeros((out_size, in_size), np.float32)
        if in_size == 1:
            A[:, 0] = 1.0
            return A
        for i in range(out_size):
            src = i * (in_size - 1) / (out_size - 1)
            i0 = min(int(np.floor(src)), in_size - 2)
            f = src - i0
            A[i, i0] += 1.0 - f
            A[i, i0 + 1] += f
        return A
    Ah, Aw = mat(H, H // 2), mat(W, W // 2)
    return np.kron(Ah, Aw).T.copy().astype(np.float32)   # (h2*w2, H*W)


# ----------------------------------------------------------------------------
# parameters (deterministic, synthetic) + eval-mode BN folding
# ----------------------------------------------------------------------------
def fold_1x1_bn(w, b, gamma, beta, mean, var, eps=1e-5):
    """1x1 conv + eval-mode BN -> (cout, cin) matrix and (cout,) bias."""
    scale = gamma / jnp.sqrt(var + eps)
    Wm = w.reshape(w.shape[0], w.shape[1]) * scale[:, None]
    beff = (b - mean) * scale + beta
    return Wm, beff


def init_params(key, C, Cout, k):
    assert C == Cout, "residual wtx + x requires in_chans == out_chans"
    assert k % 2 == 1, "Conv1d/Conv2d padding=k//2 preserves length only for odd k"
    ks = jax.random.split(key, 32)

    def rnd(i, shape, scale=0.2):
        return jax.random.normal(ks[i], shape, dtype=jnp.float32) * scale

    def bn_stats(i, n):
        gamma = 1.0 + 0.1 * jax.random.normal(ks[i], (n,), jnp.float32)
        beta = 0.05 * jax.random.normal(ks[i + 1], (n,), jnp.float32)
        mean = 0.02 * jax.random.normal(ks[i + 2], (n,), jnp.float32)
        var = 1.0 + 0.1 * jnp.abs(jax.random.normal(ks[i + 3], (n,), jnp.float32))
        return gamma, beta, mean, var

    P = {}
    P['wtch_w'], P['wtch_b'] = rnd(0, (Cout, C, k)), rnd(1, (Cout,))
    P['wtcv_w'], P['wtcv_b'] = rnd(2, (Cout, C, k)), rnd(3, (Cout,))
    P['wtcd_w'], P['wtcd_b'] = rnd(4, (Cout, C, k, k)), rnd(5, (Cout,))

    # hwt_conv: Conv2d(3C->C,1x1)+BN+ReLU+Conv2d(C->Cout,1x1)+BN
    P['hwt_w1'], P['hwt_b1'] = rnd(6, (C, 3 * C, 1, 1)), rnd(7, (C,))
    P['hwt_bn1'] = bn_stats(8, C)
    P['hwt_w2'], P['hwt_b2'] = rnd(12, (Cout, C, 1, 1)), rnd(13, (Cout,))
    P['hwt_bn2'] = bn_stats(14, Cout)

    # iwt_conv: Conv2d(2C->C,1x1)+BN+ReLU+Conv2d(C->Cout,1x1)+BN
    P['iwt_w1'], P['iwt_b1'] = rnd(18, (C, 2 * C, 1, 1)), rnd(19, (C,))
    P['iwt_bn1'] = bn_stats(20, C)
    P['iwt_w2'], P['iwt_b2'] = rnd(24, (Cout, C, 1, 1)), rnd(25, (Cout,))
    P['iwt_bn2'] = bn_stats(26, Cout)
    return P


def build_operands(P, B, C, H, W):
    """Build all constant operator matrices, in the kernel argument order."""
    h2, w2 = H // 2, W // 2
    S2, S = h2 * w2, H * W
    R = B * C                                  # rows per grid block
    eye = jnp.eye(B, dtype=jnp.float32)

    def kron_b(Wm):                            # block-diag channel mixer
        return jnp.kron(eye, Wm)

    def bias_rows(bias, width):                # per-channel bias, pre-broadcast
        return jnp.broadcast_to(jnp.tile(bias, B)[:, None], (R, width))

    dec_bands, rec_bands = make_db2_bands()
    D = jnp.asarray(build_dwt_ops(dec_bands, H, W))          # (4, S, S2)
    Riwt = build_iwt_ops(rec_bands, H, W)                    # (4, S2, S)
    r0 = jnp.asarray(Riwt[0])
    rsum = jnp.asarray(Riwt[1] + Riwt[2] + Riwt[3])          # bands 1..3 folded

    k1 = P['wtch_w'].shape[-1]
    k2 = P['wtcd_w'].shape[-1]
    sch = jnp.asarray(build_conv1d_shifts_rowmajor(h2, w2, k1))
    scv = jnp.asarray(build_conv1d_shifts_colmajor(h2, w2, k1))
    scd = jnp.asarray(build_conv2d_shifts(h2, w2, k2))

    ach = jnp.stack([kron_b(P['wtch_w'][:, :, dk]) for dk in range(k1)])
    acv = jnp.stack([kron_b(P['wtcv_w'][:, :, dk]) for dk in range(k1)])
    acd = jnp.stack([kron_b(P['wtcd_w'][:, :, dy, dx])
                     for dy in range(k2) for dx in range(k2)])
    bch = bias_rows(P['wtch_b'], S2)
    bcv = bias_rows(P['wtcv_b'], S2)
    bcd = bias_rows(P['wtcd_b'], S2)

    W1h, b1h = fold_1x1_bn(P['hwt_w1'], P['hwt_b1'], *P['hwt_bn1'])
    W2h, b2h = fold_1x1_bn(P['hwt_w2'], P['hwt_b2'], *P['hwt_bn2'])
    ah1c = kron_b(W1h[:, :C])
    ah1v = kron_b(W1h[:, C:2 * C])
    ah1d = kron_b(W1h[:, 2 * C:])
    bh1 = bias_rows(b1h, S2)
    ah2 = kron_b(W2h)
    bh2 = bias_rows(b2h, S2)

    V1, c1 = fold_1x1_bn(P['iwt_w1'], P['iwt_b1'], *P['iwt_bn1'])
    V2, c2 = fold_1x1_bn(P['iwt_w2'], P['iwt_b2'], *P['iwt_bn2'])
    ai1a = kron_b(V1[:, :C])      # iwt channels come first in the cat
    ai1b = kron_b(V1[:, C:])      # upsampled hwt channels second
    bi1 = bias_rows(c1, S)
    ai2 = kron_b(V2)
    bi2 = bias_rows(c2, S)

    u_up = jnp.asarray(build_bilinear_up_op(H, W))

    return [D[0], D[1], D[2], D[3],
            sch, ach, bch, scv, acv, bcv, scd, acd, bcd,
            ah1c, ah1v, ah1d, bh1, ah2, bh2,
            u_up, r0, rsum, ai1a, ai1b, bi1, ai2, bi2]


# ----------------------------------------------------------------------------
# the single fused Pallas kernel
# ----------------------------------------------------------------------------
def _wtab_kernel(x_ref, d0, d1, d2, d3,
                 sch, ach, bch, scv, acv, bcv, scd, acd, bcd,
                 ah1c, ah1v, ah1d, bh1, ah2, bh2,
                 u_up, r0, rsum, ai1a, ai1b, bi1, ai2, bi2,
                 o_ref):
    def mm(a, b):
        return jnp.dot(a, b, preferred_element_type=jnp.float32)

    x = x_ref[...]                                  # (R, H*W), lane-dense

    # --- forward DWT: per-channel constant operator, one matmul per band ---
    lwt = mm(x, d0[...])                            # (R, h2*w2)
    ch = mm(x, d1[...])
    cv = mm(x, d2[...])
    cd = mm(x, d3[...])

    # --- band convolutions: sum over taps of (channel mix) @ t @ (shift) ---
    def band_conv(t, s_ref, a_ref, b_ref):
        out = b_ref[...]
        for tap in range(s_ref.shape[0]):           # unrolled (3 / 3 / 9 taps)
            out = out + mm(a_ref[tap], mm(t, s_ref[tap]))
        return out

    chp = band_conv(ch, sch, ach, bch)              # WTCH_conv (Conv1d)
    cvp = band_conv(cv, scv, acv, bcv)              # WTCV_conv (Conv1d, permuted)
    cdp = band_conv(cd, scd, acd, bcd)              # WTCD_conv (Conv2d)

    # --- hwt_conv: 1x1+BN (folded) -> ReLU -> 1x1+BN (folded) ---
    h1 = mm(ah1c[...], chp) + mm(ah1v[...], cvp) + mm(ah1d[...], cdp) + bh1[...]
    h1 = jnp.maximum(h1, 0.0)
    hh = mm(ah2[...], h1) + bh2[...]

    # --- bilinear x2 upsample (align_corners=True) as one matmul ---
    hwt_up = mm(hh, u_up[...])                      # (R, H*W)

    # --- inverse DWT: bands 1..3 all carry chp -> pre-summed operator rsum ---
    iwt = mm(lwt, r0[...]) + mm(chp, rsum[...])     # (R, H*W)

    # --- iwt_conv: 1x1+BN -> ReLU -> 1x1+BN, then residual + x ---
    g1 = mm(ai1a[...], iwt) + mm(ai1b[...], hwt_up) + bi1[...]
    g1 = jnp.maximum(g1, 0.0)
    o_ref[...] = mm(ai2[...], g1) + bi2[...] + x


# ----------------------------------------------------------------------------
# WTAB forward (both inputs in one call)
# ----------------------------------------------------------------------------
def wtab_forward(x1, x2, operands):
    B, C, H, W = x1.shape
    R = B * C
    S = H * W
    # batch x1 and x2 -> rows (2*B*C, H*W); row = (input, batch, channel)
    x = jnp.concatenate([x1, x2], axis=0).reshape(2 * R, S)

    def const_spec(a):
        zeros = (0,) * a.ndim
        return pl.BlockSpec(a.shape, lambda i, z=zeros: z)

    in_specs = [pl.BlockSpec((R, S), lambda i: (i, 0))]
    in_specs += [const_spec(a) for a in operands]

    out = pl.pallas_call(
        _wtab_kernel,
        out_shape=jax.ShapeDtypeStruct((2 * R, S), jnp.float32),
        grid=(2,),                                   # x1 block / x2 block
        in_specs=in_specs,
        out_specs=pl.BlockSpec((R, S), lambda i: (i, 0)),
        compiler_params=pltpu.CompilerParams(
            dimension_semantics=("parallel",)),      # 2 TCs on v7x
    )(x, *operands)

    out = out.reshape(2, B, C, H, W)
    return out[0], out[1]


# ----------------------------------------------------------------------------
if __name__ == "__main__":
    C, K = 4, 3               # in_chans = out_chans = 4, kernel_size = 3
    B, H, W = 2, 16, 16       # NCHW inputs, like the PyTorch module
    key = jax.random.PRNGKey(0)
    kx1, kx2, kp = jax.random.split(key, 3)
    x1 = jax.random.normal(kx1, (B, C, H, W), jnp.float32)
    x2 = jax.random.normal(kx2, (B, C, H, W), jnp.float32)

    P = init_params(kp, C, C, K)
    operands = [jnp.asarray(a, jnp.float32) for a in build_operands(P, B, C, H, W)]

    fwd = jax.jit(functools.partial(wtab_forward, operands=operands))
    y1, y2 = fwd(x1, x2)
    jax.block_until_ready((y1, y2))

    assert y1.shape == (B, C, H, W) and y2.shape == (B, C, H, W)
    assert jnp.all(jnp.isfinite(y1)) and jnp.all(jnp.isfinite(y2))
    print("KERNEL_OK")
</pallas_src>

<mosaic_0001>
module attributes {stable_mosaic.version = 11 : i64} {
  func.func @_wtab_kernel(%arg0: i32, %arg1: memref<8x256xf32, #tpu.memory_space<vmem>>, %arg2: memref<256x64xf32, #tpu.memory_space<vmem>>, %arg3: memref<256x64xf32, #tpu.memory_space<vmem>>, %arg4: memref<256x64xf32, #tpu.memory_space<vmem>>, %arg5: memref<256x64xf32, #tpu.memory_space<vmem>>, %arg6: memref<3x64x64xf32, #tpu.memory_space<vmem>>, %arg7: memref<3x8x8xf32, #tpu.memory_space<vmem>>, %arg8: memref<8x64xf32, #tpu.memory_space<vmem>>, %arg9: memref<3x64x64xf32, #tpu.memory_space<vmem>>, %arg10: memref<3x8x8xf32, #tpu.memory_space<vmem>>, %arg11: memref<8x64xf32, #tpu.memory_space<vmem>>, %arg12: memref<9x64x64xf32, #tpu.memory_space<vmem>>, %arg13: memref<9x8x8xf32, #tpu.memory_space<vmem>>, %arg14: memref<8x64xf32, #tpu.memory_space<vmem>>, %arg15: memref<8x8xf32, #tpu.memory_space<vmem>>, %arg16: memref<8x8xf32, #tpu.memory_space<vmem>>, %arg17: memref<8x8xf32, #tpu.memory_space<vmem>>, %arg18: memref<8x64xf32, #tpu.memory_space<vmem>>, %arg19: memref<8x8xf32, #tpu.memory_space<vmem>>, %arg20: memref<8x64xf32, #tpu.memory_space<vmem>>, %arg21: memref<64x256xf32, #tpu.memory_space<vmem>>, %arg22: memref<64x256xf32, #tpu.memory_space<vmem>>, %arg23: memref<64x256xf32, #tpu.memory_space<vmem>>, %arg24: memref<8x8xf32, #tpu.memory_space<vmem>>, %arg25: memref<8x8xf32, #tpu.memory_space<vmem>>, %arg26: memref<8x256xf32, #tpu.memory_space<vmem>>, %arg27: memref<8x8xf32, #tpu.memory_space<vmem>>, %arg28: memref<8x256xf32, #tpu.memory_space<vmem>>, %arg29: memref<8x256xf32, #tpu.memory_space<vmem>>) attributes {dimension_semantics = [#tpu.dimension_semantics<parallel>], iteration_bounds = array<i64: 2>, scalar_prefetch = 0 : i64, scratch_operands = 0 : i64, tpu.core_type = #tpu.core_type<tc>, window_params = [{transform_indices = @transform_0, window_bounds = array<i64: 8, 256>}, {pipeline_mode = #tpu.pipeline_mode<synchronous>, transform_indices = @transform_1, window_bounds = array<i64: 256, 64>}, {pipeline_mode = #tpu.pipeline_mode<synchronous>, transform_indices = @transform_2, window_bounds = array<i64: 256, 64>}, {pipeline_mode = #tpu.pipeline_mode<synchronous>, transform_indices = @transform_3, window_bounds = array<i64: 256, 64>}, {pipeline_mode = #tpu.pipeline_mode<synchronous>, transform_indices = @transform_4, window_bounds = array<i64: 256, 64>}, {pipeline_mode = #tpu.pipeline_mode<synchronous>, transform_indices = @transform_5, window_bounds = array<i64: 3, 64, 64>}, {pipeline_mode = #tpu.pipeline_mode<synchronous>, transform_indices = @transform_6, window_bounds = array<i64: 3, 8, 8>}, {pipeline_mode = #tpu.pipeline_mode<synchronous>, transform_indices = @transform_7, window_bounds = array<i64: 8, 64>}, {pipeline_mode = #tpu.pipeline_mode<synchronous>, transform_indices = @transform_8, window_bounds = array<i64: 3, 64, 64>}, {pipeline_mode = #tpu.pipeline_mode<synchronous>, transform_indices = @transform_9, window_bounds = array<i64: 3, 8, 8>}, {pipeline_mode = #tpu.pipeline_mode<synchronous>, transform_indices = @transform_10, window_bounds = array<i64: 8, 64>}, {pipeline_mode = #tpu.pipeline_mode<synchronous>, transform_indices = @transform_11, window_bounds = array<i64: 9, 64, 64>}, {pipeline_mode = #tpu.pipeline_mode<synchronous>, transform_indices = @transform_12, window_bounds = array<i64: 9, 8, 8>}, {pipeline_mode = #tpu.pipeline_mode<synchronous>, transform_indices = @transform_13, window_bounds = array<i64: 8, 64>}, {pipeline_mode = #tpu.pipeline_mode<synchronous>, transform_indices = @transform_14, window_bounds = array<i64: 8, 8>}, {pipeline_mode = #tpu.pipeline_mode<synchronous>, transform_indices = @transform_15, window_bounds = array<i64: 8, 8>}, {pipeline_mode = #tpu.pipeline_mode<synchronous>, transform_indices = @transform_16, window_bounds = array<i64: 8, 8>}, {pipeline_mode = #tpu.pipeline_mode<synchronous>, transform_indices = @transform_17, window_bounds = array<i64: 8, 64>}, {pipeline_mode = #tpu.pipeline_mode<synchronous>, transform_indices = @transform_18, window_bounds = array<i64: 8, 8>}, {pipeline_mode = #tpu.pipeline_mode<synchronous>, transform_indices = @transform_19, window_bounds = array<i64: 8, 64>}, {pipeline_mode = #tpu.pipeline_mode<synchronous>, transform_indices = @transform_20, window_bounds = array<i64: 64, 256>}, {pipeline_mode = #tpu.pipeline_mode<synchronous>, transform_indices = @transform_21, window_bounds = array<i64: 64, 256>}, {pipeline_mode = #tpu.pipeline_mode<synchronous>, transform_indices = @transform_22, window_bounds = array<i64: 64, 256>}, {pipeline_mode = #tpu.pipeline_mode<synchronous>, transform_indices = @transform_23, window_bounds = array<i64: 8, 8>}, {pipeline_mode = #tpu.pipeline_mode<synchronous>, transform_indices = @transform_24, window_bounds = array<i64: 8, 8>}, {pipeline_mode = #tpu.pipeline_mode<synchronous>, transform_indices = @transform_25, window_bounds = array<i64: 8, 256>}, {pipeline_mode = #tpu.pipeline_mode<synchronous>, transform_indices = @transform_26, window_bounds = array<i64: 8, 8>}, {pipeline_mode = #tpu.pipeline_mode<synchronous>, transform_indices = @transform_27, window_bounds = array<i64: 8, 256>}, {transform_indices = @transform_28, window_bounds = array<i64: 8, 256>}]} {
    %c0 = arith.constant 0 : index
    %c0_0 = arith.constant 0 : index
    %0 = vector.load %arg1[%c0, %c0_0] : memref<8x256xf32, #tpu.memory_space<vmem>>, vector<8x256xf32>
    %c0_1 = arith.constant 0 : index
    %c0_2 = arith.constant 0 : index
    %1 = vector.load %arg2[%c0_1, %c0_2] : memref<256x64xf32, #tpu.memory_space<vmem>>, vector<256x64xf32>
    %cst = arith.constant dense<0.000000e+00> : vector<8x64xf32>
    %2 = tpu.matmul %0, %1, %cst {dimension_numbers = #tpu.dot_dimension_numbers<[1], [0], [0], [1], [0, 0, 1, 1], [], []>} : vector<8x256xf32>, vector<256x64xf32>, vector<8x64xf32> -> vector<8x64xf32>
    %c0_3 = arith.constant 0 : index
    %c0_4 = arith.constant 0 : index
    %3 = vector.load %arg3[%c0_3, %c0_4] : memref<256x64xf32, #tpu.memory_space<vmem>>, vector<256x64xf32>
    %cst_5 = arith.constant dense<0.000000e+00> : vector<8x64xf32>
    %4 = tpu.matmul %0, %3, %cst_5 {dimension_numbers = #tpu.dot_dimension_numbers<[1], [0], [0], [1], [0, 0, 1, 1], [], []>} : vector<8x256xf32>, vector<256x64xf32>, vector<8x64xf32> -> vector<8x64xf32>
    %c0_6 = arith.constant 0 : index
    %c0_7 = arith.constant 0 : index
    %5 = vector.load %arg4[%c0_6, %c0_7] : memref<256x64xf32, #tpu.memory_space<vmem>>, vector<256x64xf32>
    %cst_8 = arith.constant dense<0.000000e+00> : vector<8x64xf32>
    %6 = tpu.matmul %0, %5, %cst_8 {dimension_numbers = #tpu.dot_dimension_numbers<[1], [0], [0], [1], [0, 0, 1, 1], [], []>} : vector<8x256xf32>, vector<256x64xf32>, vector<8x64xf32> -> vector<8x64xf32>
    %c0_9 = arith.constant 0 : index
    %c0_10 = arith.constant 0 : index
    %7 = vector.load %arg5[%c0_9, %c0_10] : memref<256x64xf32, #tpu.memory_space<vmem>>, vector<256x64xf32>
    %cst_11 = arith.constant dense<0.000000e+00> : vector<8x64xf32>
    %8 = tpu.matmul %0, %7, %cst_11 {dimension_numbers = #tpu.dot_dimension_numbers<[1], [0], [0], [1], [0, 0, 1, 1], [], []>} : vector<8x256xf32>, vector<256x64xf32>, vector<8x64xf32> -> vector<8x64xf32>
    %c0_12 = arith.constant 0 : index
    %c0_13 = arith.constant 0 : index
    %9 = vector.load %arg8[%c0_12, %c0_13] : memref<8x64xf32, #tpu.memory_space<vmem>>, vector<8x64xf32>
    %c0_14 = arith.constant 0 : index
    %c0_15 = arith.constant 0 : index
    %c0_16 = arith.constant 0 : index
    %10 = vector.load %arg7[%c0_14, %c0_15, %c0_16] : memref<3x8x8xf32, #tpu.memory_space<vmem>>, vector<1x8x8xf32>
    %11 = vector.shape_cast %10 : vector<1x8x8xf32> to vector<8x8xf32>
    %c0_17 = arith.constant 0 : index
    %c0_18 = arith.constant 0 : index
    %c0_19 = arith.constant 0 : index
    %12 = vector.load %arg6[%c0_17, %c0_18, %c0_19] : memref<3x64x64xf32, #tpu.memory_space<vmem>>, vector<1x64x64xf32>
    %13 = vector.shape_cast %12 : vector<1x64x64xf32> to vector<64x64xf32>
    %cst_20 = arith.constant dense<0.000000e+00> : vector<8x64xf32>
    %14 = tpu.matmul %4, %13, %cst_20 {dimension_numbers = #tpu.dot_dimension_numbers<[1], [0], [0], [1], [0, 0, 1, 1], [], []>} : vector<8x64xf32>, vector<64x64xf32>, vector<8x64xf32> -> vector<8x64xf32>
    %cst_21 = arith.constant dense<0.000000e+00> : vector<8x64xf32>
    %15 = tpu.matmul %11, %14, %cst_21 {dimension_numbers = #tpu.dot_dimension_numbers<[1], [0], [0], [1], [0, 0, 1, 1], [], []>} : vector<8x8xf32>, vector<8x64xf32>, vector<8x64xf32> -> vector<8x64xf32>
    %16 = arith.addf %9, %15 : vector<8x64xf32>
    %c1 = arith.constant 1 : index
    %c0_22 = arith.constant 0 : index
    %c0_23 = arith.constant 0 : index
    %17 = vector.load %arg7[%c1, %c0_22, %c0_23] : memref<3x8x8xf32, #tpu.memory_space<vmem>>, vector<1x8x8xf32>
    %18 = vector.shape_cast %17 : vector<1x8x8xf32> to vector<8x8xf32>
    %c1_24 = arith.constant 1 : index
    %c0_25 = arith.constant 0 : index
    %c0_26 = arith.constant 0 : index
    %19 = vector.load %arg6[%c1_24, %c0_25, %c0_26] : memref<3x64x64xf32, #tpu.memory_space<vmem>>, vector<1x64x64xf32>
    %20 = vector.shape_cast %19 : vector<1x64x64xf32> to vector<64x64xf32>
    %cst_27 = arith.constant dense<0.000000e+00> : vector<8x64xf32>
    %21 = tpu.matmul %4, %20, %cst_27 {dimension_numbers = #tpu.dot_dimension_numbers<[1], [0], [0], [1], [0, 0, 1, 1], [], []>} : vector<8x64xf32>, vector<64x64xf32>, vector<8x64xf32> -> vector<8x64xf32>
    %cst_28 = arith.constant dense<0.000000e+00> : vector<8x64xf32>
    %22 = tpu.matmul %18, %21, %cst_28 {dimension_numbers = #tpu.dot_dimension_numbers<[1], [0], [0], [1], [0, 0, 1, 1], [], []>} : vector<8x8xf32>, vector<8x64xf32>, vector<8x64xf32> -> vector<8x64xf32>
    %23 = arith.addf %16, %22 : vector<8x64xf32>
    %c2 = arith.constant 2 : index
    %c0_29 = arith.constant 0 : index
    %c0_30 = arith.constant 0 : index
    %24 = vector.load %arg7[%c2, %c0_29, %c0_30] : memref<3x8x8xf32, #tpu.memory_space<vmem>>, vector<1x8x8xf32>
    %25 = vector.shape_cast %24 : vector<1x8x8xf32> to vector<8x8xf32>
    %c2_31 = arith.constant 2 : index
    %c0_32 = arith.constant 0 : index
    %c0_33 = arith.constant 0 : index
    %26 = vector.load %arg6[%c2_31, %c0_32, %c0_33] : memref<3x64x64xf32, #tpu.memory_space<vmem>>, vector<1x64x64xf32>
    %27 = vector.shape_cast %26 : vector<1x64x64xf32> to vector<64x64xf32>
    %cst_34 = arith.constant dense<0.000000e+00> : vector<8x64xf32>
    %28 = tpu.matmul %4, %27, %cst_34 {dimension_numbers = #tpu.dot_dimension_numbers<[1], [0], [0], [1], [0, 0, 1, 1], [], []>} : vector<8x64xf32>, vector<64x64xf32>, vector<8x64xf32> -> vector<8x64xf32>
    %cst_35 = arith.constant dense<0.000000e+00> : vector<8x64xf32>
    %29 = tpu.matmul %25, %28, %cst_35 {dimension_numbers = #tpu.dot_dimension_numbers<[1], [0], [0], [1], [0, 0, 1, 1], [], []>} : vector<8x8xf32>, vector<8x64xf32>, vector<8x64xf32> -> vector<8x64xf32>
    %30 = arith.addf %23, %29 : vector<8x64xf32>
    %c0_36 = arith.constant 0 : index
    %c0_37 = arith.constant 0 : index
    %31 = vector.load %arg11[%c0_36, %c0_37] : memref<8x64xf32, #tpu.memory_space<vmem>>, vector<8x64xf32>
    %c0_38 = arith.constant 0 : index
    %c0_39 = arith.constant 0 : index
    %c0_40 = arith.constant 0 : index
    %32 = vector.load %arg10[%c0_38, %c0_39, %c0_40] : memref<3x8x8xf32, #tpu.memory_space<vmem>>, vector<1x8x8xf32>
    %33 = vector.shape_cast %32 : vector<1x8x8xf32> to vector<8x8xf32>
    %c0_41 = arith.constant 0 : index
    %c0_42 = arith.constant 0 : index
    %c0_43 = arith.constant 0 : index
    %34 = vector.load %arg9[%c0_41, %c0_42, %c0_43] : memref<3x64x64xf32, #tpu.memory_space<vmem>>, vector<1x64x64xf32>
    %35 = vector.shape_cast %34 : vector<1x64x64xf32> to vector<64x64xf32>
    %cst_44 = arith.constant dense<0.000000e+00> : vector<8x64xf32>
    %36 = tpu.matmul %6, %35, %cst_44 {dimension_numbers = #tpu.dot_dimension_numbers<[1], [0], [0], [1], [0, 0, 1, 1], [], []>} : vector<8x64xf32>, vector<64x64xf32>, vector<8x64xf32> -> vector<8x64xf32>
    %cst_45 = arith.constant dense<0.000000e+00> : vector<8x64xf32>
    %37 = tpu.matmul %33, %36, %cst_45 {dimension_numbers = #tpu.dot_dimension_numbers<[1], [0], [0], [1], [0, 0, 1, 1], [], []>} : vector<8x8xf32>, vector<8x64xf32>, vector<8x64xf32> -> vector<8x64xf32>
    %38 = arith.addf %31, %37 : vector<8x64xf32>
    %c1_46 = arith.constant 1 : index
    %c0_47 = arith.constant 0 : index
    %c0_48 = arith.constant 0 : index
    %39 = vector.load %arg10[%c1_46, %c0_47, %c0_48] : memref<3x8x8xf32, #tpu.memory_space<vmem>>, vector<1x8x8xf32>
    %40 = vector.shape_cast %39 : vector<1x8x8xf32> to vector<8x8xf32>
    %c1_49 = arith.constant 1 : index
    %c0_50 = arith.constant 0 : index
    %c0_51 = arith.constant 0 : index
    %41 = vector.load %arg9[%c1_49, %c0_50, %c0_51] : memref<3x64x64xf32, #tpu.memory_space<vmem>>, vector<1x64x64xf32>
    %42 = vector.shape_cast %41 : vector<1x64x64xf32> to vector<64x64xf32>
    %cst_52 = arith.constant dense<0.000000e+00> : vector<8x64xf32>
    %43 = tpu.matmul %6, %42, %cst_52 {dimension_numbers = #tpu.dot_dimension_numbers<[1], [0], [0], [1], [0, 0, 1, 1], [], []>} : vector<8x64xf32>, vector<64x64xf32>, vector<8x64xf32> -> vector<8x64xf32>
    %cst_53 = arith.constant dense<0.000000e+00> : vector<8x64xf32>
    %44 = tpu.matmul %40, %43, %cst_53 {dimension_numbers = #tpu.dot_dimension_numbers<[1], [0], [0], [1], [0, 0, 1, 1], [], []>} : vector<8x8xf32>, vector<8x64xf32>, vector<8x64xf32> -> vector<8x64xf32>
    %45 = arith.addf %38, %44 : vector<8x64xf32>
    %c2_54 = arith.constant 2 : index
    %c0_55 = arith.constant 0 : index
    %c0_56 = arith.constant 0 : index
    %46 = vector.load %arg10[%c2_54, %c0_55, %c0_56] : memref<3x8x8xf32, #tpu.memory_space<vmem>>, vector<1x8x8xf32>
    %47 = vector.shape_cast %46 : vector<1x8x8xf32> to vector<8x8xf32>
    %c2_57 = arith.constant 2 : index
    %c0_58 = arith.constant 0 : index
    %c0_59 = arith.constant 0 : index
    %48 = vector.load %arg9[%c2_57, %c0_58, %c0_59] : memref<3x64x64xf32, #tpu.memory_space<vmem>>, vector<1x64x64xf32>
    %49 = vector.shape_cast %48 : vector<1x64x64xf32> to vector<64x64xf32>
    %cst_60 = arith.constant dense<0.000000e+00> : vector<8x64xf32>
    %50 = tpu.matmul %6, %49, %cst_60 {dimension_numbers = #tpu.dot_dimension_numbers<[1], [0], [0], [1], [0, 0, 1, 1], [], []>} : vector<8x64xf32>, vector<64x64xf32>, vector<8x64xf32> -> vector<8x64xf32>
    %cst_61 = arith.constant dense<0.000000e+00> : vector<8x64xf32>
    %51 = tpu.matmul %47, %50, %cst_61 {dimension_numbers = #tpu.dot_dimension_numbers<[1], [0], [0], [1], [0, 0, 1, 1], [], []>} : vector<8x8xf32>, vector<8x64xf32>, vector<8x64xf32> -> vector<8x64xf32>
    %52 = arith.addf %45, %51 : vector<8x64xf32>
    %c0_62 = arith.constant 0 : index
    %c0_63 = arith.constant 0 : index
    %53 = vector.load %arg14[%c0_62, %c0_63] : memref<8x64xf32, #tpu.memory_space<vmem>>, vector<8x64xf32>
    %c0_64 = arith.constant 0 : index
    %c0_65 = arith.constant 0 : index
    %c0_66 = arith.constant 0 : index
    %54 = vector.load %arg13[%c0_64, %c0_65, %c0_66] : memref<9x8x8xf32, #tpu.memory_space<vmem>>, vector<1x8x8xf32>
    %55 = vector.shape_cast %54 : vector<1x8x8xf32> to vector<8x8xf32>
    %c0_67 = arith.constant 0 : index
    %c0_68 = arith.constant 0 : index
    %c0_69 = arith.constant 0 : index
    %56 = vector.load %arg12[%c0_67, %c0_68, %c0_69] : memref<9x64x64xf32, #tpu.memory_space<vmem>>, vector<1x64x64xf32>
    %57 = vector.shape_cast %56 : vector<1x64x64xf32> to vector<64x64xf32>
    %cst_70 = arith.constant dense<0.000000e+00> : vector<8x64xf32>
    %58 = tpu.matmul %8, %57, %cst_70 {dimension_numbers = #tpu.dot_dimension_numbers<[1], [0], [0], [1], [0, 0, 1, 1], [], []>} : vector<8x64xf32>, vector<64x64xf32>, vector<8x64xf32> -> vector<8x64xf32>
    %cst_71 = arith.constant dense<0.000000e+00> : vector<8x64xf32>
    %59 = tpu.matmul %55, %58, %cst_71 {dimension_numbers = #tpu.dot_dimension_numbers<[1], [0], [0], [1], [0, 0, 1, 1], [], []>} : vector<8x8xf32>, vector<8x64xf32>, vector<8x64xf32> -> vector<8x64xf32>
    %60 = arith.addf %53, %59 : vector<8x64xf32>
    %c1_72 = arith.constant 1 : index
    %c0_73 = arith.constant 0 : index
    %c0_74 = arith.constant 0 : index
    %61 = vector.load %arg13[%c1_72, %c0_73, %c0_74] : memref<9x8x8xf32, #tpu.memory_space<vmem>>, vector<1x8x8xf32>
    %62 = vector.shape_cast %61 : vector<1x8x8xf32> to vector<8x8xf32>
    %c1_75 = arith.constant 1 : index
    %c0_76 = arith.constant 0 : index
    %c0_77 = arith.constant 0 : index
    %63 = vector.load %arg12[%c1_75, %c0_76, %c0_77] : memref<9x64x64xf32, #tpu.memory_space<vmem>>, vector<1x64x64xf32>
    %64 = vector.shape_cast %63 : vector<1x64x64xf32> to vector<64x64xf32>
    %cst_78 = arith.constant dense<0.000000e+00> : vector<8x64xf32>
    %65 = tpu.matmul %8, %64, %cst_78 {dimension_numbers = #tpu.dot_dimension_numbers<[1], [0], [0], [1], [0, 0, 1, 1], [], []>} : vector<8x64xf32>, vector<64x64xf32>, vector<8x64xf32> -> vector<8x64xf32>
    %cst_79 = arith.constant dense<0.000000e+00> : vector<8x64xf32>
    %66 = tpu.matmul %62, %65, %cst_79 {dimension_numbers = #tpu.dot_dimension_numbers<[1], [0], [0], [1], [0, 0, 1, 1], [], []>} : vector<8x8xf32>, vector<8x64xf32>, vector<8x64xf32> -> vector<8x64xf32>
    %67 = arith.addf %60, %66 : vector<8x64xf32>
    %c2_80 = arith.constant 2 : index
    %c0_81 = arith.constant 0 : index
    %c0_82 = arith.constant 0 : index
    %68 = vector.load %arg13[%c2_80, %c0_81, %c0_82] : memref<9x8x8xf32, #tpu.memory_space<vmem>>, vector<1x8x8xf32>
    %69 = vector.shape_cast %68 : vector<1x8x8xf32> to vector<8x8xf32>
    %c2_83 = arith.constant 2 : index
    %c0_84 = arith.constant 0 : index
    %c0_85 = arith.constant 0 : index
    %70 = vector.load %arg12[%c2_83, %c0_84, %c0_85] : memref<9x64x64xf32, #tpu.memory_space<vmem>>, vector<1x64x64xf32>
    %71 = vector.shape_cast %70 : vector<1x64x64xf32> to vector<64x64xf32>
    %cst_86 = arith.constant dense<0.000000e+00> : vector<8x64xf32>
    %72 = tpu.matmul %8, %71, %cst_86 {dimension_numbers = #tpu.dot_dimension_numbers<[1], [0], [0], [1], [0, 0, 1, 1], [], []>} : vector<8x64xf32>, vector<64x64xf32>, vector<8x64xf32> -> vector<8x64xf32>
    %cst_87 = arith.constant dense<0.000000e+00> : vector<8x64xf32>
    %73 = tpu.matmul %69, %72, %cst_87 {dimension_numbers = #tpu.dot_dimension_numbers<[1], [0], [0], [1], [0, 0, 1, 1], [], []>} : vector<8x8xf32>, vector<8x64xf32>, vector<8x64xf32> -> vector<8x64xf32>
    %74 = arith.addf %67, %73 : vector<8x64xf32>
    %c3 = arith.constant 3 : index
    %c0_88 = arith.constant 0 : index
    %c0_89 = arith.constant 0 : index
    %75 = vector.load %arg13[%c3, %c0_88, %c0_89] : memref<9x8x8xf32, #tpu.memory_space<vmem>>, vector<1x8x8xf32>
    %76 = vector.shape_cast %75 : vector<1x8x8xf32> to vector<8x8xf32>
    %c3_90 = arith.constant 3 : index
    %c0_91 = arith.constant 0 : index
    %c0_92 = arith.constant 0 : index
    %77 = vector.load %arg12[%c3_90, %c0_91, %c0_92] : memref<9x64x64xf32, #tpu.memory_space<vmem>>, vector<1x64x64xf32>
    %78 = vector.shape_cast %77 : vector<1x64x64xf32> to vector<64x64xf32>
    %cst_93 = arith.constant dense<0.000000e+00> : vector<8x64xf32>
    %79 = tpu.matmul %8, %78, %cst_93 {dimension_numbers = #tpu.dot_dimension_numbers<[1], [0], [0], [1], [0, 0, 1, 1], [], []>} : vector<8x64xf32>, vector<64x64xf32>, vector<8x64xf32> -> vector<8x64xf32>
    %cst_94 = arith.constant dense<0.000000e+00> : vector<8x64xf32>
    %80 = tpu.matmul %76, %79, %cst_94 {dimension_numbers = #tpu.dot_dimension_numbers<[1], [0], [0], [1], [0, 0, 1, 1], [], []>} : vector<8x8xf32>, vector<8x64xf32>, vector<8x64xf32> -> vector<8x64xf32>
    %81 = arith.addf %74, %80 : vector<8x64xf32>
    %c4 = arith.constant 4 : index
    %c0_95 = arith.constant 0 : index
    %c0_96 = arith.constant 0 : index
    %82 = vector.load %arg13[%c4, %c0_95, %c0_96] : memref<9x8x8xf32, #tpu.memory_space<vmem>>, vector<1x8x8xf32>
    %83 = vector.shape_cast %82 : vector<1x8x8xf32> to vector<8x8xf32>
    %c4_97 = arith.constant 4 : index
    %c0_98 = arith.constant 0 : index
    %c0_99 = arith.constant 0 : index
    %84 = vector.load %arg12[%c4_97, %c0_98, %c0_99] : memref<9x64x64xf32, #tpu.memory_space<vmem>>, vector<1x64x64xf32>
    %85 = vector.shape_cast %84 : vector<1x64x64xf32> to vector<64x64xf32>
    %cst_100 = arith.constant dense<0.000000e+00> : vector<8x64xf32>
    %86 = tpu.matmul %8, %85, %cst_100 {dimension_numbers = #tpu.dot_dimension_numbers<[1], [0], [0], [1], [0, 0, 1, 1], [], []>} : vector<8x64xf32>, vector<64x64xf32>, vector<8x64xf32> -> vector<8x64xf32>
    %cst_101 = arith.constant dense<0.000000e+00> : vector<8x64xf32>
    %87 = tpu.matmul %83, %86, %cst_101 {dimension_numbers = #tpu.dot_dimension_numbers<[1], [0], [0], [1], [0, 0, 1, 1], [], []>} : vector<8x8xf32>, vector<8x64xf32>, vector<8x64xf32> -> vector<8x64xf32>
    %88 = arith.addf %81, %87 : vector<8x64xf32>
    %c5 = arith.constant 5 : index
    %c0_102 = arith.constant 0 : index
    %c0_103 = arith.constant 0 : index
    %89 = vector.load %arg13[%c5, %c0_102, %c0_103] : memref<9x8x8xf32, #tpu.memory_space<vmem>>, vector<1x8x8xf32>
    %90 = vector.shape_cast %89 : vector<1x8x8xf32> to vector<8x8xf32>
    %c5_104 = arith.constant 5 : index
    %c0_105 = arith.constant 0 : index
    %c0_106 = arith.constant 0 : index
    %91 = vector.load %arg12[%c5_104, %c0_105, %c0_106] : memref<9x64x64xf32, #tpu.memory_space<vmem>>, vector<1x64x64xf32>
    %92 = vector.shape_cast %91 : vector<1x64x64xf32> to vector<64x64xf32>
    %cst_107 = arith.constant dense<0.000000e+00> : vector<8x64xf32>
    %93 = tpu.matmul %8, %92, %cst_107 {dimension_numbers = #tpu.dot_dimension_numbers<[1], [0], [0], [1], [0, 0, 1, 1], [], []>} : vector<8x64xf32>, vector<64x64xf32>, vector<8x64xf32> -> vector<8x64xf32>
    %cst_108 = arith.constant dense<0.000000e+00> : vector<8x64xf32>
    %94 = tpu.matmul %90, %93, %cst_108 {dimension_numbers = #tpu.dot_dimension_numbers<[1], [0], [0], [1], [0, 0, 1, 1], [], []>} : vector<8x8xf32>, vector<8x64xf32>, vector<8x64xf32> -> vector<8x64xf32>
    %95 = arith.addf %88, %94 : vector<8x64xf32>
    %c6 = arith.constant 6 : index
    %c0_109 = arith.constant 0 : index
    %c0_110 = arith.constant 0 : index
    %96 = vector.load %arg13[%c6, %c0_109, %c0_110] : memref<9x8x8xf32, #tpu.memory_space<vmem>>, vector<1x8x8xf32>
    %97 = vector.shape_cast %96 : vector<1x8x8xf32> to vector<8x8xf32>
    %c6_111 = arith.constant 6 : index
    %c0_112 = arith.constant 0 : index
    %c0_113 = arith.constant 0 : index
    %98 = vector.load %arg12[%c6_111, %c0_112, %c0_113] : memref<9x64x64xf32, #tpu.memory_space<vmem>>, vector<1x64x64xf32>
    %99 = vector.shape_cast %98 : vector<1x64x64xf32> to vector<64x64xf32>
    %cst_114 = arith.constant dense<0.000000e+00> : vector<8x64xf32>
    %100 = tpu.matmul %8, %99, %cst_114 {dimension_numbers = #tpu.dot_dimension_numbers<[1], [0], [0], [1], [0, 0, 1, 1], [], []>} : vector<8x64xf32>, vector<64x64xf32>, vector<8x64xf32> -> vector<8x64xf32>
    %cst_115 = arith.constant dense<0.000000e+00> : vector<8x64xf32>
    %101 = tpu.matmul %97, %100, %cst_115 {dimension_numbers = #tpu.dot_dimension_numbers<[1], [0], [0], [1], [0, 0, 1, 1], [], []>} : vector<8x8xf32>, vector<8x64xf32>, vector<8x64xf32> -> vector<8x64xf32>
    %102 = arith.addf %95, %101 : vector<8x64xf32>
    %c7 = arith.constant 7 : index
    %c0_116 = arith.constant 0 : index
    %c0_117 = arith.constant 0 : index
    %103 = vector.load %arg13[%c7, %c0_116, %c0_117] : memref<9x8x8xf32, #tpu.memory_space<vmem>>, vector<1x8x8xf32>
    %104 = vector.shape_cast %103 : vector<1x8x8xf32> to vector<8x8xf32>
    %c7_118 = arith.constant 7 : index
    %c0_119 = arith.constant 0 : index
    %c0_120 = arith.constant 0 : index
    %105 = vector.load %arg12[%c7_118, %c0_119, %c0_120] : memref<9x64x64xf32, #tpu.memory_space<vmem>>, vector<1x64x64xf32>
    %106 = vector.shape_cast %105 : vector<1x64x64xf32> to vector<64x64xf32>
    %cst_121 = arith.constant dense<0.000000e+00> : vector<8x64xf32>
    %107 = tpu.matmul %8, %106, %cst_121 {dimension_numbers = #tpu.dot_dimension_numbers<[1], [0], [0], [1], [0, 0, 1, 1], [], []>} : vector<8x64xf32>, vector<64x64xf32>, vector<8x64xf32> -> vector<8x64xf32>
    %cst_122 = arith.constant dense<0.000000e+00> : vector<8x64xf32>
    %108 = tpu.matmul %104, %107, %cst_122 {dimension_numbers = #tpu.dot_dimension_numbers<[1], [0], [0], [1], [0, 0, 1, 1], [], []>} : vector<8x8xf32>, vector<8x64xf32>, vector<8x64xf32> -> vector<8x64xf32>
    %109 = arith.addf %102, %108 : vector<8x64xf32>
    %c8 = arith.constant 8 : index
    %c0_123 = arith.constant 0 : index
    %c0_124 = arith.constant 0 : index
    %110 = vector.load %arg13[%c8, %c0_123, %c0_124] : memref<9x8x8xf32, #tpu.memory_space<vmem>>, vector<1x8x8xf32>
    %111 = vector.shape_cast %110 : vector<1x8x8xf32> to vector<8x8xf32>
    %c8_125 = arith.constant 8 : index
    %c0_126 = arith.constant 0 : index
    %c0_127 = arith.constant 0 : index
    %112 = vector.load %arg12[%c8_125, %c0_126, %c0_127] : memref<9x64x64xf32, #tpu.memory_space<vmem>>, vector<1x64x64xf32>
    %113 = vector.shape_cast %112 : vector<1x64x64xf32> to vector<64x64xf32>
    %cst_128 = arith.constant dense<0.000000e+00> : vector<8x64xf32>
    %114 = tpu.matmul %8, %113, %cst_128 {dimension_numbers = #tpu.dot_dimension_numbers<[1], [0], [0], [1], [0, 0, 1, 1], [], []>} : vector<8x64xf32>, vector<64x64xf32>, vector<8x64xf32> -> vector<8x64xf32>
    %cst_129 = arith.constant dense<0.000000e+00> : vector<8x64xf32>
    %115 = tpu.matmul %111, %114, %cst_129 {dimension_numbers = #tpu.dot_dimension_numbers<[1], [0], [0], [1], [0, 0, 1, 1], [], []>} : vector<8x8xf32>, vector<8x64xf32>, vector<8x64xf32> -> vector<8x64xf32>
    %116 = arith.addf %109, %115 : vector<8x64xf32>
    %c0_130 = arith.constant 0 : index
    %c0_131 = arith.constant 0 : index
    %117 = vector.load %arg15[%c0_130, %c0_131] : memref<8x8xf32, #tpu.memory_space<vmem>>, vector<8x8xf32>
    %cst_132 = arith.constant dense<0.000000e+00> : vector<8x64xf32>
    %118 = tpu.matmul %117, %30, %cst_132 {dimension_numbers = #tpu.dot_dimension_numbers<[1], [0], [0], [1], [0, 0, 1, 1], [], []>} : vector<8x8xf32>, vector<8x64xf32>, vector<8x64xf32> -> vector<8x64xf32>
    %c0_133 = arith.constant 0 : index
    %c0_134 = arith.constant 0 : index
    %119 = vector.load %arg16[%c0_133, %c0_134] : memref<8x8xf32, #tpu.memory_space<vmem>>, vector<8x8xf32>
    %cst_135 = arith.constant dense<0.000000e+00> : vector<8x64xf32>
    %120 = tpu.matmul %119, %52, %cst_135 {dimension_numbers = #tpu.dot_dimension_numbers<[1], [0], [0], [1], [0, 0, 1, 1], [], []>} : vector<8x8xf32>, vector<8x64xf32>, vector<8x64xf32> -> vector<8x64xf32>
    %121 = arith.addf %118, %120 : vector<8x64xf32>
    %c0_136 = arith.constant 0 : index
    %c0_137 = arith.constant 0 : index
    %122 = vector.load %arg17[%c0_136, %c0_137] : memref<8x8xf32, #tpu.memory_space<vmem>>, vector<8x8xf32>
    %cst_138 = arith.constant dense<0.000000e+00> : vector<8x64xf32>
    %123 = tpu.matmul %122, %116, %cst_138 {dimension_numbers = #tpu.dot_dimension_numbers<[1], [0], [0], [1], [0, 0, 1, 1], [], []>} : vector<8x8xf32>, vector<8x64xf32>, vector<8x64xf32> -> vector<8x64xf32>
    %124 = arith.addf %121, %123 : vector<8x64xf32>
    %c0_139 = arith.constant 0 : index
    %c0_140 = arith.constant 0 : index
    %125 = vector.load %arg18[%c0_139, %c0_140] : memref<8x64xf32, #tpu.memory_space<vmem>>, vector<8x64xf32>
    %126 = arith.addf %124, %125 : vector<8x64xf32>
    %cst_141 = arith.constant 0.000000e+00 : f32
    %127 = vector.broadcast %cst_141 : f32 to vector<8x64xf32>
    %128 = arith.maximumf %126, %127 : vector<8x64xf32>
    %c0_142 = arith.constant 0 : index
    %c0_143 = arith.constant 0 : index
    %129 = vector.load %arg19[%c0_142, %c0_143] : memref<8x8xf32, #tpu.memory_space<vmem>>, vector<8x8xf32>
    %cst_144 = arith.constant dense<0.000000e+00> : vector<8x64xf32>
    %130 = tpu.matmul %129, %128, %cst_144 {dimension_numbers = #tpu.dot_dimension_numbers<[1], [0], [0], [1], [0, 0, 1, 1], [], []>} : vector<8x8xf32>, vector<8x64xf32>, vector<8x64xf32> -> vector<8x64xf32>
    %c0_145 = arith.constant 0 : index
    %c0_146 = arith.constant 0 : index
    %131 = vector.load %arg20[%c0_145, %c0_146] : memref<8x64xf32, #tpu.memory_space<vmem>>, vector<8x64xf32>
    %132 = arith.addf %130, %131 : vector<8x64xf32>
    %c0_147 = arith.constant 0 : index
    %c0_148 = arith.constant 0 : index
    %133 = vector.load %arg21[%c0_147, %c0_148] : memref<64x256xf32, #tpu.memory_space<vmem>>, vector<64x256xf32>
    %cst_149 = arith.constant dense<0.000000e+00> : vector<8x256xf32>
    %134 = tpu.matmul %132, %133, %cst_149 {dimension_numbers = #tpu.dot_dimension_numbers<[1], [0], [0], [1], [0, 0, 1, 1], [], []>} : vector<8x64xf32>, vector<64x256xf32>, vector<8x256xf32> -> vector<8x256xf32>
    %c0_150 = arith.constant 0 : index
    %c0_151 = arith.constant 0 : index
    %135 = vector.load %arg22[%c0_150, %c0_151] : memref<64x256xf32, #tpu.memory_space<vmem>>, vector<64x256xf32>
    %cst_152 = arith.constant dense<0.000000e+00> : vector<8x256xf32>
    %136 = tpu.matmul %2, %135, %cst_152 {dimension_numbers = #tpu.dot_dimension_numbers<[1], [0], [0], [1], [0, 0, 1, 1], [], []>} : vector<8x64xf32>, vector<64x256xf32>, vector<8x256xf32> -> vector<8x256xf32>
    %c0_153 = arith.constant 0 : index
    %c0_154 = arith.constant 0 : index
    %137 = vector.load %arg23[%c0_153, %c0_154] : memref<64x256xf32, #tpu.memory_space<vmem>>, vector<64x256xf32>
    %cst_155 = arith.constant dense<0.000000e+00> : vector<8x256xf32>
    %138 = tpu.matmul %30, %137, %cst_155 {dimension_numbers = #tpu.dot_dimension_numbers<[1], [0], [0], [1], [0, 0, 1, 1], [], []>} : vector<8x64xf32>, vector<64x256xf32>, vector<8x256xf32> -> vector<8x256xf32>
    %139 = arith.addf %136, %138 : vector<8x256xf32>
    %c0_156 = arith.constant 0 : index
    %c0_157 = arith.constant 0 : index
    %140 = vector.load %arg24[%c0_156, %c0_157] : memref<8x8xf32, #tpu.memory_space<vmem>>, vector<8x8xf32>
    %cst_158 = arith.constant dense<0.000000e+00> : vector<8x256xf32>
    %141 = tpu.matmul %140, %139, %cst_158 {dimension_numbers = #tpu.dot_dimension_numbers<[1], [0], [0], [1], [0, 0, 1, 1], [], []>} : vector<8x8xf32>, vector<8x256xf32>, vector<8x256xf32> -> vector<8x256xf32>
    %c0_159 = arith.constant 0 : index
    %c0_160 = arith.constant 0 : index
    %142 = vector.load %arg25[%c0_159, %c0_160] : memref<8x8xf32, #tpu.memory_space<vmem>>, vector<8x8xf32>
    %cst_161 = arith.constant dense<0.000000e+00> : vector<8x256xf32>
    %143 = tpu.matmul %142, %134, %cst_161 {dimension_numbers = #tpu.dot_dimension_numbers<[1], [0], [0], [1], [0, 0, 1, 1], [], []>} : vector<8x8xf32>, vector<8x256xf32>, vector<8x256xf32> -> vector<8x256xf32>
    %144 = arith.addf %141, %143 : vector<8x256xf32>
    %c0_162 = arith.constant 0 : index
    %c0_163 = arith.constant 0 : index
    %145 = vector.load %arg26[%c0_162, %c0_163] : memref<8x256xf32, #tpu.memory_space<vmem>>, vector<8x256xf32>
    %146 = arith.addf %144, %145 : vector<8x256xf32>
    %cst_164 = arith.constant 0.000000e+00 : f32
    %147 = vector.broadcast %cst_164 : f32 to vector<8x256xf32>
    %148 = arith.maximumf %146, %147 : vector<8x256xf32>
    %c0_165 = arith.constant 0 : index
    %c0_166 = arith.constant 0 : index
    %149 = vector.load %arg27[%c0_165, %c0_166] : memref<8x8xf32, #tpu.memory_space<vmem>>, vector<8x8xf32>
    %cst_167 = arith.constant dense<0.000000e+00> : vector<8x256xf32>
    %150 = tpu.matmul %149, %148, %cst_167 {dimension_numbers = #tpu.dot_dimension_numbers<[1], [0], [0], [1], [0, 0, 1, 1], [], []>} : vector<8x8xf32>, vector<8x256xf32>, vector<8x256xf32> -> vector<8x256xf32>
    %c0_168 = arith.constant 0 : index
    %c0_169 = arith.constant 0 : index
    %151 = vector.load %arg28[%c0_168, %c0_169] : memref<8x256xf32, #tpu.memory_space<vmem>>, vector<8x256xf32>
    %152 = arith.addf %150, %151 : vector<8x256xf32>
    %153 = arith.addf %152, %0 : vector<8x256xf32>
    %c0_170 = arith.constant 0 : index
    %c0_171 = arith.constant 0 : index
    %154 = vector.load %arg29[%c0_170, %c0_171] : memref<8x256xf32, #tpu.memory_space<vmem>>, vector<8x256xf32>
    tpu.vector_store %arg29[%c0_170, %c0_171], %153 {strides = array<i32>} : memref<8x256xf32, #tpu.memory_space<vmem>>, vector<8x256xf32>,
    return
  }
  func.func @transform_0(%arg0: i32) -> (i32, i32) {
    %c0_i32 = arith.constant 0 : i32
    %c0_i32_0 = arith.constant 0 : i32
    return %arg0, %c0_i32 : i32, i32
  }
  func.func @transform_1(%arg0: i32) -> (i32, i32) {
    %c0_i32 = arith.constant 0 : i32
    %c0_i32_0 = arith.constant 0 : i32
    %c0_i32_1 = arith.constant 0 : i32
    return %c0_i32, %c0_i32_0 : i32, i32
  }
  func.func @transform_2(%arg0: i32) -> (i32, i32) {
    %c0_i32 = arith.constant 0 : i32
    %c0_i32_0 = arith.constant 0 : i32
    %c0_i32_1 = arith.constant 0 : i32
    return %c0_i32, %c0_i32_0 : i32, i32
  }
  func.func @transform_3(%arg0: i32) -> (i32, i32) {
    %c0_i32 = arith.constant 0 : i32
    %c0_i32_0 = arith.constant 0 : i32
    %c0_i32_1 = arith.constant 0 : i32
    return %c0_i32, %c0_i32_0 : i32, i32
  }
  func.func @transform_4(%arg0: i32) -> (i32, i32) {
    %c0_i32 = arith.constant 0 : i32
    %c0_i32_0 = arith.constant 0 : i32
    %c0_i32_1 = arith.constant 0 : i32
    return %c0_i32, %c0_i32_0 : i32, i32
  }
  func.func @transform_5(%arg0: i32) -> (i32, i32, i32) {
    %c0_i32 = arith.constant 0 : i32
    %c0_i32_0 = arith.constant 0 : i32
    %c0_i32_1 = arith.constant 0 : i32
    %c0_i32_2 = arith.constant 0 : i32
    return %c0_i32, %c0_i32_0, %c0_i32_1 : i32, i32, i32
  }
  func.func @transform_6(%arg0: i32) -> (i32, i32, i32) {
    %c0_i32 = arith.constant 0 : i32
    %c0_i32_0 = arith.constant 0 : i32
    %c0_i32_1 = arith.constant 0 : i32
    %c0_i32_2 = arith.constant 0 : i32
    return %c0_i32, %c0_i32_0, %c0_i32_1 : i32, i32, i32
  }
  func.func @transform_7(%arg0: i32) -> (i32, i32) {
    %c0_i32 = arith.constant 0 : i32
    %c0_i32_0 = arith.constant 0 : i32
    %c0_i32_1 = arith.constant 0 : i32
    return %c0_i32, %c0_i32_0 : i32, i32
  }
  func.func @transform_8(%arg0: i32) -> (i32, i32, i32) {
    %c0_i32 = arith.constant 0 : i32
    %c0_i32_0 = arith.constant 0 : i32
    %c0_i32_1 = arith.constant 0 : i32
    %c0_i32_2 = arith.constant 0 : i32
    return %c0_i32, %c0_i32_0, %c0_i32_1 : i32, i32, i32
  }
  func.func @transform_9(%arg0: i32) -> (i32, i32, i32) {
    %c0_i32 = arith.constant 0 : i32
    %c0_i32_0 = arith.constant 0 : i32
    %c0_i32_1 = arith.constant 0 : i32
    %c0_i32_2 = arith.constant 0 : i32
    return %c0_i32, %c0_i32_0, %c0_i32_1 : i32, i32, i32
  }
  func.func @transform_10(%arg0: i32) -> (i32, i32) {
    %c0_i32 = arith.constant 0 : i32
    %c0_i32_0 = arith.constant 0 : i32
    %c0_i32_1 = arith.constant 0 : i32
    return %c0_i32, %c0_i32_0 : i32, i32
  }
  func.func @transform_11(%arg0: i32) -> (i32, i32, i32) {
    %c0_i32 = arith.constant 0 : i32
    %c0_i32_0 = arith.constant 0 : i32
    %c0_i32_1 = arith.constant 0 : i32
    %c0_i32_2 = arith.constant 0 : i32
    return %c0_i32, %c0_i32_0, %c0_i32_1 : i32, i32, i32
  }
  func.func @transform_12(%arg0: i32) -> (i32, i32, i32) {
    %c0_i32 = arith.constant 0 : i32
    %c0_i32_0 = arith.constant 0 : i32
    %c0_i32_1 = arith.constant 0 : i32
    %c0_i32_2 = arith.constant 0 : i32
    return %c0_i32, %c0_i32_0, %c0_i32_1 : i32, i32, i32
  }
  func.func @transform_13(%arg0: i32) -> (i32, i32) {
    %c0_i32 = arith.constant 0 : i32
    %c0_i32_0 = arith.constant 0 : i32
    %c0_i32_1 = arith.constant 0 : i32
    return %c0_i32, %c0_i32_0 : i32, i32
  }
  func.func @transform_14(%arg0: i32) -> (i32, i32) {
    %c0_i32 = arith.constant 0 : i32
    %c0_i32_0 = arith.constant 0 : i32
    %c0_i32_1 = arith.constant 0 : i32
    return %c0_i32, %c0_i32_0 : i32, i32
  }
  func.func @transform_15(%arg0: i32) -> (i32, i32) {
    %c0_i32 = arith.constant 0 : i32
    %c0_i32_0 = arith.constant 0 : i32
    %c0_i32_1 = arith.constant 0 : i32
    return %c0_i32, %c0_i32_0 : i32, i32
  }
  func.func @transform_16(%arg0: i32) -> (i32, i32) {
    %c0_i32 = arith.constant 0 : i32
    %c0_i32_0 = arith.constant 0 : i32
    %c0_i32_1 = arith.constant 0 : i32
    return %c0_i32, %c0_i32_0 : i32, i32
  }
  func.func @transform_17(%arg0: i32) -> (i32, i32) {
    %c0_i32 = arith.constant 0 : i32
    %c0_i32_0 = arith.constant 0 : i32
    %c0_i32_1 = arith.constant 0 : i32
    return %c0_i32, %c0_i32_0 : i32, i32
  }
  func.func @transform_18(%arg0: i32) -> (i32, i32) {
    %c0_i32 = arith.constant 0 : i32
    %c0_i32_0 = arith.constant 0 : i32
    %c0_i32_1 = arith.constant 0 : i32
    return %c0_i32, %c0_i32_0 : i32, i32
  }
  func.func @transform_19(%arg0: i32) -> (i32, i32) {
    %c0_i32 = arith.constant 0 : i32
    %c0_i32_0 = arith.constant 0 : i32
    %c0_i32_1 = arith.constant 0 : i32
    return %c0_i32, %c0_i32_0 : i32, i32
  }
  func.func @transform_20(%arg0: i32) -> (i32, i32) {
    %c0_i32 = arith.constant 0 : i32
    %c0_i32_0 = arith.constant 0 : i32
    %c0_i32_1 = arith.constant 0 : i32
    return %c0_i32, %c0_i32_0 : i32, i32
  }
  func.func @transform_21(%arg0: i32) -> (i32, i32) {
    %c0_i32 = arith.constant 0 : i32
    %c0_i32_0 = arith.constant 0 : i32
    %c0_i32_1 = arith.constant 0 : i32
    return %c0_i32, %c0_i32_0 : i32, i32
  }
  func.func @transform_22(%arg0: i32) -> (i32, i32) {
    %c0_i32 = arith.constant 0 : i32
    %c0_i32_0 = arith.constant 0 : i32
    %c0_i32_1 = arith.constant 0 : i32
    return %c0_i32, %c0_i32_0 : i32, i32
  }
  func.func @transform_23(%arg0: i32) -> (i32, i32) {
    %c0_i32 = arith.constant 0 : i32
    %c0_i32_0 = arith.constant 0 : i32
    %c0_i32_1 = arith.constant 0 : i32
    return %c0_i32, %c0_i32_0 : i32, i32
  }
  func.func @transform_24(%arg0: i32) -> (i32, i32) {
    %c0_i32 = arith.constant 0 : i32
    %c0_i32_0 = arith.constant 0 : i32
    %c0_i32_1 = arith.constant 0 : i32
    return %c0_i32, %c0_i32_0 : i32, i32
  }
  func.func @transform_25(%arg0: i32) -> (i32, i32) {
    %c0_i32 = arith.constant 0 : i32
    %c0_i32_0 = arith.constant 0 : i32
    %c0_i32_1 = arith.constant 0 : i32
    return %c0_i32, %c0_i32_0 : i32, i32
  }
  func.func @transform_26(%arg0: i32) -> (i32, i32) {
    %c0_i32 = arith.constant 0 : i32
    %c0_i32_0 = arith.constant 0 : i32
    %c0_i32_1 = arith.constant 0 : i32
    return %c0_i32, %c0_i32_0 : i32, i32
  }
  func.func @transform_27(%arg0: i32) -> (i32, i32) {
    %c0_i32 = arith.constant 0 : i32
    %c0_i32_0 = arith.constant 0 : i32
    %c0_i32_1 = arith.constant 0 : i32
    return %c0_i32, %c0_i32_0 : i32, i32
  }
  func.func @transform_28(%arg0: i32) -> (i32, i32) {
    %c0_i32 = arith.constant 0 : i32
    %c0_i32_0 = arith.constant 0 : i32
    return %arg0, %c0_i32 : i32, i32
  }
}

</mosaic_0001>

<llo_original>
// kernel: squeeze.2
$region0: #{squeeze.2}
  %s0 = inlined_call_operand.vmem [shape: f32[8,256], index: 0, kind: input, shape index: {}]
  %s1 = inlined_call_operand.hbm [shape: f32[2,4,16,16], index: 1, kind: output, shape index: {}]
  $region1: #{squeeze.2} parent=0
    #allocation0 [shape = 'u8[65536]{0}', space=vmem, size = 0x10000, scoped, tag = 'operand span for operand 1']
    #allocation1 [shape = 's32[1]{0}', space=sflag, size = 0x4, scoped, tag = 'scoped memory for squeeze.2']
    %2 = vsyncpa [#allocation1], 0
    %v3 = vld [vmem:[%s0] sm:$0xff]
    %vm4 = vcmask 130048
    %5 = vst.msk [vmem:[#allocation0] ss:$16 sm:$0x3] %vm4, %v3
    %6 = vst.msk [vmem:[#allocation0] ss:$16 sm:$0xc] %vm4, %v3
    %7 = vst.msk [vmem:[#allocation0] ss:$16 sm:$0x30] %vm4, %v3
    %8 = vst.msk [vmem:[#allocation0] ss:$16 sm:$0xc0] %vm4, %v3
    %s9 = scalar_lea.vmem %s0, 8
    %v10 = vld [vmem:[%s9] sm:$0xff]
    %vm11 = vcmask 130048
    %s12 = scalar_lea.vmem [#allocation0], 8
    %13 = vst.msk [vmem:[%s12] ss:$16 sm:$0x3] %vm11, %v10
    %s14 = scalar_lea.vmem [#allocation0], 8
    %15 = vst.msk [vmem:[%s14] ss:$16 sm:$0xc] %vm11, %v10
    %s16 = scalar_lea.vmem [#allocation0], 8
    %17 = vst.msk [vmem:[%s16] ss:$16 sm:$0x30] %vm11, %v10
    %s18 = scalar_lea.vmem [#allocation0], 8
    %19 = vst.msk [vmem:[%s18] ss:$16 sm:$0xc0] %vm11, %v10
    %v20 = vld.sshfl [vmem:[%s0] sm:$0xff pattern:$0xb3a29180]
    %21 = vrot.lane.b32.xlu0 %v20, 112
    %v22 = vpop.permute.xlu0 %21
    %vm23 = vcmask 130048
    %s24 = scalar_lea.vmem [#allocation0], 1
    %25 = vst.msk [vmem:[%s24] ss:$8 sm:$0xf] %vm23, %v22
    %s26 = scalar_lea.vmem [#allocation0], 1
    %27 = vst.msk [vmem:[%s26] ss:$8 sm:$0xf0] %vm23, %v22
    %s28 = scalar_lea.vmem %s0, 4
    %v29 = vld.sshfl [vmem:[%s28] sm:$0xff pattern:$0xb3a29180]
    %30 = vrot.lane.b32.xlu0 %v29, 112
    %v31 = vpop.permute.xlu0 %30
    %vm32 = vcmask 130048
    %s33 = scalar_lea.vmem [#allocation0], 65
    %34 = vst.msk [vmem:[%s33] ss:$8 sm:$0xf] %vm32, %v31
    %s35 = scalar_lea.vmem [#allocation0], 65
    %36 = vst.msk [vmem:[%s35] ss:$8 sm:$0xf0] %vm32, %v31
    %v37 = vld.sshfl [vmem:[%s0] sm:$0xff pattern:$0xb3a29180]
    %38 = vrot.lane.b32.xlu0 %v37, 96
    %v39 = vpop.permute.xlu0 %38
    %vm40 = vcmask 130048
    %s41 = scalar_lea.vmem [#allocation0], 2
    %42 = vst.msk [vmem:[%s41] ss:$8 sm:$0xf] %vm40, %v39
    %s43 = scalar_lea.vmem [#allocation0], 2
    %44 = vst.msk [vmem:[%s43] ss:$8 sm:$0xf0] %vm40, %v39
    %s45 = scalar_lea.vmem %s0, 4
    %v46 = vld.sshfl [vmem:[%s45] sm:$0xff pattern:$0xb3a29180]
    %47 = vrot.lane.b32.xlu0 %v46, 96
    %v48 = vpop.permute.xlu0 %47
    %vm49 = vcmask 130048
    %s50 = scalar_lea.vmem [#allocation0], 66
    %51 = vst.msk [vmem:[%s50] ss:$8 sm:$0xf] %vm49, %v48
    %s52 = scalar_lea.vmem [#allocation0], 66
    %53 = vst.msk [vmem:[%s52] ss:$8 sm:$0xf0] %vm49, %v48
    %v54 = vld.sshfl [vmem:[%s0] sm:$0xff pattern:$0xb3a29180]
    %55 = vrot.lane.b32.xlu0 %v54, 80
    %v56 = vpop.permute.xlu0 %55
    %vm57 = vcmask 130048
    %s58 = scalar_lea.vmem [#allocation0], 3
    %59 = vst.msk [vmem:[%s58] ss:$8 sm:$0xf] %vm57, %v56
    %s60 = scalar_lea.vmem [#allocation0], 3
    %61 = vst.msk [vmem:[%s60] ss:$8 sm:$0xf0] %vm57, %v56
    %s62 = scalar_lea.vmem %s0, 4
    %v63 = vld.sshfl [vmem:[%s62] sm:$0xff pattern:$0xb3a29180]
    %64 = vrot.lane.b32.xlu0 %v63, 80
    %v65 = vpop.permute.xlu0 %64
    %vm66 = vcmask 130048
    %s67 = scalar_lea.vmem [#allocation0], 67
    %68 = vst.msk [vmem:[%s67] ss:$8 sm:$0xf] %vm66, %v65
    %s69 = scalar_lea.vmem [#allocation0], 67
    %70 = vst.msk [vmem:[%s69] ss:$8 sm:$0xf0] %vm66, %v65
    %v71 = vld.sshfl [vmem:[%s0] sm:$0xff pattern:$0xb3a29180]
    %72 = vrot.lane.b32.xlu0 %v71, 64
    %v73 = vpop.permute.xlu0 %72
    %vm74 = vcmask 130048
    %s75 = scalar_lea.vmem [#allocation0], 4
    %76 = vst.msk [vmem:[%s75] ss:$8 sm:$0xf] %vm74, %v73
    %s77 = scalar_lea.vmem [#allocation0], 4
    %78 = vst.msk [vmem:[%s77] ss:$8 sm:$0xf0] %vm74, %v73
    %s79 = scalar_lea.vmem %s0, 4
    %v80 = vld.sshfl [vmem:[%s79] sm:$0xff pattern:$0xb3a29180]
    %81 = vrot.lane.b32.xlu0 %v80, 64
    %v82 = vpop.permute.xlu0 %81
    %vm83 = vcmask 130048
    %s84 = scalar_lea.vmem [#allocation0], 68
    %85 = vst.msk [vmem:[%s84] ss:$8 sm:$0xf] %vm83, %v82
    %s86 = scalar_lea.vmem [#allocation0], 68
    %87 = vst.msk [vmem:[%s86] ss:$8 sm:$0xf0] %vm83, %v82
    %v88 = vld.sshfl [vmem:[%s0] sm:$0xff pattern:$0xb3a29180]
    %89 = vrot.lane.b32.xlu0 %v88, 48
    %v90 = vpop.permute.xlu0 %89
    %vm91 = vcmask 130048
    %s92 = scalar_lea.vmem [#allocation0], 5
    %93 = vst.msk [vmem:[%s92] ss:$8 sm:$0xf] %vm91, %v90
    %s94 = scalar_lea.vmem [#allocation0], 5
    %95 = vst.msk [vmem:[%s94] ss:$8 sm:$0xf0] %vm91, %v90
    %s96 = scalar_lea.vmem %s0, 4
    %v97 = vld.sshfl [vmem:[%s96] sm:$0xff pattern:$0xb3a29180]
    %98 = vrot.lane.b32.xlu0 %v97, 48
    %v99 = vpop.permute.xlu0 %98
    %vm100 = vcmask 130048
    %s101 = scalar_lea.vmem [#allocation0], 69
    %102 = vst.msk [vmem:[%s101] ss:$8 sm:$0xf] %vm100, %v99
    %s103 = scalar_lea.vmem [#allocation0], 69
    %104 = vst.msk [vmem:[%s103] ss:$8 sm:$0xf0] %vm100, %v99
    %v105 = vld.sshfl [vmem:[%s0] sm:$0xff pattern:$0xb3a29180]
    %106 = vrot.lane.b32.xlu0 %v105, 32
    %v107 = vpop.permute.xlu0 %106
    %vm108 = vcmask 130048
    %s109 = scalar_lea.vmem [#allocation0], 6
    %110 = vst.msk [vmem:[%s109] ss:$8 sm:$0xf] %vm108, %v107
    %s111 = scalar_lea.vmem [#allocation0], 6
    %112 = vst.msk [vmem:[%s111] ss:$8 sm:$0xf0] %vm108, %v107
    %s113 = scalar_lea.vmem %s0, 4
    %v114 = vld.sshfl [vmem:[%s113] sm:$0xff pattern:$0xb3a29180]
    %115 = vrot.lane.b32.xlu0 %v114, 32
    %v116 = vpop.permute.xlu0 %115
    %vm117 = vcmask 130048
    %s118 = scalar_lea.vmem [#allocation0], 70
    %119 = vst.msk [vmem:[%s118] ss:$8 sm:$0xf] %vm117, %v116
    %s120 = scalar_lea.vmem [#allocation0], 70
    %121 = vst.msk [vmem:[%s120] ss:$8 sm:$0xf0] %vm117, %v116
    %v122 = vld.sshfl [vmem:[%s0] sm:$0xff pattern:$0xb3a29180]
    %123 = vrot.lane.b32.xlu0 %v122, 16
    %v124 = vpop.permute.xlu0 %123
    %vm125 = vcmask 130048
    %s126 = scalar_lea.vmem [#allocation0], 7
    %127 = vst.msk [vmem:[%s126] ss:$8 sm:$0xf] %vm125, %v124
    %s128 = scalar_lea.vmem [#allocation0], 7
    %129 = vst.msk [vmem:[%s128] ss:$8 sm:$0xf0] %vm125, %v124
    %s130 = scalar_lea.vmem %s0, 4
    %v131 = vld.sshfl [vmem:[%s130] sm:$0xff pattern:$0xb3a29180]
    %132 = vrot.lane.b32.xlu0 %v131, 16
    %v133 = vpop.permute.xlu0 %132
    %vm134 = vcmask 130048
    %s135 = scalar_lea.vmem [#allocation0], 71
    %136 = vst.msk [vmem:[%s135] ss:$8 sm:$0xf] %vm134, %v133
    %s137 = scalar_lea.vmem [#allocation0], 71
    %138 = vst.msk [vmem:[%s137] ss:$8 sm:$0xf0] %vm134, %v133
    %s140 = ssub.s32 2048, 2048
    %141 = vsyncadd [#allocation1], %s140
    %s143 = sshll.u32 [#allocation0], 4
    %s144 = int_to_ptr.vmem [resolvable:$true] %s143
    %146 = dma.vmem_to_hbm [thread:$0]  %s144, 2048, %s1, [#allocation1]
    %147 = dma.done [#allocation1], 2048
    %148 = vsyncpa [#allocation1], 1

// kernel: wtab_forward.1
$region0: #{wtab_forward.1}
  #allocation0 [shape = 'u32[]', space=smem, size = 0x4, offset = 0x4, fixed_abs, tag = 'smem constant byte address 0x4 - core index']
  #allocation1 [shape = 'u32[144,128]{1,0:T(1,128)}', space=vmem, size = 0x12000, scoped, tag = 'internal scratch']
  %s0 = inlined_call_operand.vmem [shape: f32[16,256], index: 0, kind: input, shape index: {}]
  %s1 = inlined_call_operand.vmem [shape: f32[256,64], index: 1, kind: input, shape index: {}]
  %s2 = inlined_call_operand.hbm [shape: f32[256,64], index: 2, kind: input, shape index: {}]
  %s3 = inlined_call_operand.hbm [shape: f32[256,64], index: 3, kind: input, shape index: {}]
  %s4 = inlined_call_operand.hbm [shape: f32[256,64], index: 4, kind: input, shape index: {}]
  %s5 = inlined_call_operand.hbm [shape: f32[3,64,64], index: 5, kind: input, shape index: {}]
  %s6 = inlined_call_operand.hbm [shape: f32[3,8,8], index: 6, kind: input, shape index: {}]
  %s7 = inlined_call_operand.hbm [shape: f32[8,64], index: 7, kind: input, shape index: {}]
  %s8 = inlined_call_operand.hbm [shape: f32[3,64,64], index: 8, kind: input, shape index: {}]
  %s9 = inlined_call_operand.hbm [shape: f32[3,8,8], index: 9, kind: input, shape index: {}]
  %s10 = inlined_call_operand.hbm [shape: f32[8,64], index: 10, kind: input, shape index: {}]
  %s11 = inlined_call_operand.vmem [shape: f32[9,64,64], index: 11, kind: input, shape index: {}]
  %s12 = inlined_call_operand.hbm [shape: f32[9,8,8], index: 12, kind: input, shape index: {}]
  %s13 = inlined_call_operand.hbm [shape: f32[8,64], index: 13, kind: input, shape index: {}]
  %s14 = inlined_call_operand.hbm [shape: f32[8,8], index: 14, kind: input, shape index: {}]
  %s15 = inlined_call_operand.hbm [shape: f32[8,8], index: 15, kind: input, shape index: {}]
  %s16 = inlined_call_operand.hbm [shape: f32[8,8], index: 16, kind: input, shape index: {}]
  %s17 = inlined_call_operand.hbm [shape: f32[8,64], index: 17, kind: input, shape index: {}]
  %s18 = inlined_call_operand.hbm [shape: f32[8,8], index: 18, kind: input, shape index: {}]
  %s19 = inlined_call_operand.hbm [shape: f32[8,64], index: 19, kind: input, shape index: {}]
  %s20 = inlined_call_operand.hbm [shape: f32[64,256], index: 20, kind: input, shape index: {}]
  %s21 = inlined_call_operand.hbm [shape: f32[64,256], index: 21, kind: input, shape index: {}]
  %s22 = inlined_call_operand.hbm [shape: f32[64,256], index: 22, kind: input, shape index: {}]
  %s23 = inlined_call_operand.hbm [shape: f32[8,8], index: 23, kind: input, shape index: {}]
  %s24 = inlined_call_operand.hbm [shape: f32[8,8], index: 24, kind: input, shape index: {}]
  %s25 = inlined_call_operand.hbm [shape: f32[8,256], index: 25, kind: input, shape index: {}]
  %s26 = inlined_call_operand.hbm [shape: f32[8,8], index: 26, kind: input, shape index: {}]
  %s27 = inlined_call_operand.hbm [shape: f32[8,256], index: 27, kind: input, shape index: {}]
  %s28 = inlined_call_operand.vmem [shape: f32[16,256], index: 28, kind: output, shape index: {}]
  %s29 = sld [smem:[#allocation0]]
  $region245: #{wtab_forward.1} parent=0
    _
  %s31 = ssub.s32 1, %s29
  %s32 = scalar_select 0, %s31, %s29
  $region1: #{wtab_forward.1} parent=0
    #allocation2 [shape = 'u8[131072]{0}', space=vmem, size = 0x20000, scoped, tag = 'input window, operand 2, single buffered']
    #allocation3 [shape = 's32[2]{0}', space=sflag, size = 0x8, scoped, tag = 'scoped memory for wtab_forward.1']
    #allocation4 [shape = 'u8[131072]{0}', space=vmem, size = 0x20000, scoped, tag = 'input window, operand 3, single buffered']
    #allocation5 [shape = 's32[1]{0}', space=sflag, size = 0x4, scoped, tag = 'scoped memory for wtab_forward.1']
    #allocation6 [shape = 'u8[131072]{0}', space=vmem, size = 0x20000, scoped, tag = 'input window, operand 4, single buffered']
    #allocation7 [shape = 'u8[98304]{0}', space=vmem, size = 0x18000, scoped, tag = 'input window, operand 5, single buffered']
    #allocation8 [shape = 's32[1]{0}', space=sflag, size = 0x4, scoped, tag = 'scoped memory for wtab_forward.1']
    #allocation9 [shape = 'u8[12288]{0}', space=vmem, size = 0x3000, scoped, tag = 'input window, operand 6, single buffered']
    #allocation10 [shape = 'u8[4096]{0}', space=vmem, size = 0x1000, scoped, tag = 'input window, operand 7, single buffered']
    #allocation11 [shape = 's32[1]{0}', space=sflag, size = 0x4, scoped, tag = 'scoped memory for wtab_forward.1']
    #allocation12 [shape = 'u8[98304]{0}', space=vmem, size = 0x18000, scoped, tag = 'input window, operand 8, single buffered']
    #allocation13 [shape = 'u8[12288]{0}', space=vmem, size = 0x3000, scoped, tag = 'input window, operand 9, single buffered']
    #allocation14 [shape = 's32[1]{0}', space=sflag, size = 0x4, scoped, tag = 'scoped memory for wtab_forward.1']
    #allocation15 [shape = 'u8[4096]{0}', space=vmem, size = 0x1000, scoped, tag = 'input window, operand 10, single buffered']
    #allocation16 [shape = 'u8[36864]{0}', space=vmem, size = 0x9000, scoped, tag = 'input window, operand 12, single buffered']
    #allocation17 [shape = 's32[1]{0}', space=sflag, size = 0x4, scoped, tag = 'scoped memory for wtab_forward.1']
    #allocation18 [shape = 'u8[4096]{0}', space=vmem, size = 0x1000, scoped, tag = 'input window, operand 13, single buffered']
    #allocation19 [shape = 'u8[4096]{0}', space=vmem, size = 0x1000, scoped, tag = 'input window, operand 14, single buffered']
    #allocation20 [shape = 's32[1]{0}', space=sflag, size = 0x4, scoped, tag = 'scoped memory for wtab_forward.1']
    #allocation21 [shape = 'u8[4096]{0}', space=vmem, size = 0x1000, scoped, tag = 'input window, operand 15, single buffered']
    #allocation22 [shape = 'u8[4096]{0}', space=vmem, size = 0x1000, scoped, tag = 'input window, operand 16, single buffered']
    #allocation23 [shape = 's32[1]{0}', space=sflag, size = 0x4, scoped, tag = 'scoped memory for wtab_forward.1']
    #allocation24 [shape = 'u8[4096]{0}', space=vmem, size = 0x1000, scoped, tag = 'input window, operand 17, single buffered']
    #allocation25 [shape = 'u8[4096]{0}', space=vmem, size = 0x1000, scoped, tag = 'input window, operand 18, single buffered']
    #allocation26 [shape = 's32[1]{0}', space=sflag, size = 0x4, scoped, tag = 'scoped memory for wtab_forward.1']
    #allocation27 [shape = 'u8[4096]{0}', space=vmem, size = 0x1000, scoped, tag = 'input window, operand 19, single buffered']
    #allocation28 [shape = 'u8[65536]{0}', space=vmem, size = 0x10000, scoped, tag = 'input window, operand 20, single buffered']
    #allocation29 [shape = 's32[1]{0}', space=sflag, size = 0x4, scoped, tag = 'scoped memory for wtab_forward.1']
    #allocation30 [shape = 'u8[65536]{0}', space=vmem, size = 0x10000, scoped, tag = 'input window, operand 21, single buffered']
    #allocation31 [shape = 'u8[65536]{0}', space=vmem, size = 0x10000, scoped, tag = 'input window, operand 22, single buffered']
    #allocation32 [shape = 's32[1]{0}', space=sflag, size = 0x4, scoped, tag = 'scoped memory for wtab_forward.1']
    #allocation33 [shape = 'u8[4096]{0}', space=vmem, size = 0x1000, scoped, tag = 'input window, operand 23, single buffered']
    #allocation34 [shape = 'u8[4096]{0}', space=vmem, size = 0x1000, scoped, tag = 'input window, operand 24, single buffered']
    #allocation35 [shape = 's32[1]{0}', space=sflag, size = 0x4, scoped, tag = 'scoped memory for wtab_forward.1']
    #allocation36 [shape = 'u8[8192]{0}', space=vmem, size = 0x2000, scoped, tag = 'input window, operand 25, single buffered']
    #allocation37 [shape = 'u8[4096]{0}', space=vmem, size = 0x1000, scoped, tag = 'input window, operand 26, single buffered']
    #allocation38 [shape = 's32[1]{0}', space=sflag, size = 0x4, scoped, tag = 'scoped memory for wtab_forward.1']
    #allocation39 [shape = 'u8[8192]{0}', space=vmem, size = 0x2000, scoped, tag = 'input window, operand 27, single buffered']
    %33 = vsyncpa [#allocation3], 0
    %34 = vsyncpa [#allocation5], 0
    %35 = vsyncpa [#allocation8], 0
    %36 = vsyncpa [#allocation11], 0
    %37 = vsyncpa [#allocation14], 0
    %38 = vsyncpa [#allocation17], 0
    %39 = vsyncpa [#allocation20], 0
    %40 = vsyncpa [#allocation23], 0
    %41 = vsyncpa [#allocation26], 0
    %42 = vsyncpa [#allocation29], 0
    %43 = vsyncpa [#allocation32], 0
    %44 = vsyncpa [#allocation35], 0
    %45 = vsyncpa [#allocation38], 0
    loop: start=0, step=1, limit=4
    $region2: #{wtab_forward.1} parent=1 // loop_pre_header
      _
    $region3: #{wtab_forward.1} parent=1 // loop_header
      %s47 = sphi 0, %s51
      %p48 = scmp.ge.s32.totalorder %s47, 4
      %s57 = sphi 0, %s59
      %s60 = sphi 0, %s57
      %s61 = sphi 0, %s60
      %s77 = sphi 0, %s61
      %s81 = sphi 0, %s81
      %s83 = sphi 0, %s81
      %s84 = sphi 0, %s83
      %s98 = sphi 0, %s84
      %s102 = sphi 0, %s102
      %s104 = sphi 0, %s102
      %s105 = sphi 0, %s104
      %s119 = sphi 0, %s105
      %s123 = sphi 0, %s123
      %s125 = sphi 0, %s123
      %s126 = sphi 0, %s125
      %s140 = sphi 0, %s126
      %s144 = sphi 0, %s144
      %s146 = sphi 0, %s144
      %s147 = sphi 0, %s146
      %s161 = sphi 0, %s147
      %s165 = sphi 0, %s165
      %s167 = sphi 0, %s165
      %s168 = sphi 0, %s167
      %s182 = sphi 0, %s168
      %s186 = sphi 0, %s186
      %s188 = sphi 0, %s186
      %s189 = sphi 0, %s188
      %s203 = sphi 0, %s189
      %s207 = sphi 0, %s207
      %s209 = sphi 0, %s207
      %s210 = sphi 0, %s209
      %s224 = sphi 0, %s210
      %s228 = sphi 0, %s228
      %s230 = sphi 0, %s228
      %s231 = sphi 0, %s230
      %s245 = sphi 0, %s231
      %s249 = sphi 0, %s249
      %s251 = sphi 0, %s249
      %s252 = sphi 0, %s251
      %s266 = sphi 0, %s252
      %s270 = sphi 0, %s270
      %s272 = sphi 0, %s270
      %s273 = sphi 0, %s272
      %s287 = sphi 0, %s273
      %s291 = sphi 0, %s291
      %s293 = sphi 0, %s291
      %s294 = sphi 0, %s293
      %s308 = sphi 0, %s294
      %s312 = sphi 0, %s312
      %s314 = sphi 0, %s312
      %s315 = sphi 0, %s314
      %s329 = sphi 0, %s315
      %s333 = sphi 0, %s333
      %s335 = sphi 0, %s333
      %s336 = sphi 0, %s335
      %s350 = sphi 0, %s336
      %s354 = sphi 0, %s354
      %s356 = sphi 0, %s354
      %s357 = sphi 0, %s356
      %s371 = sphi 0, %s357
      %s375 = sphi 0, %s375
      %s377 = sphi 0, %s375
      %s378 = sphi 0, %s377
      %s392 = sphi 0, %s378
      %s396 = sphi 0, %s396
      %s398 = sphi 0, %s396
      %s399 = sphi 0, %s398
      %s413 = sphi 0, %s399
      %s417 = sphi 0, %s417
      %s419 = sphi 0, %s417
      %s420 = sphi 0, %s419
      %s434 = sphi 0, %s420
      %s438 = sphi 0, %s438
      %s440 = sphi 0, %s438
      %s441 = sphi 0, %s440
      %s455 = sphi 0, %s441
      %s459 = sphi 0, %s459
      %s461 = sphi 0, %s459
      %s462 = sphi 0, %s461
      %s476 = sphi 0, %s462
      %s480 = sphi 0, %s480
      %s482 = sphi 0, %s480
      %s483 = sphi 0, %s482
      %s497 = sphi 0, %s483
      %s501 = sphi 0, %s501
      %s503 = sphi 0, %s501
      %s504 = sphi 0, %s503
      %s518 = sphi 0, %s504
      %s522 = sphi 0, %s522
      %s524 = sphi 0, %s522
      %s525 = sphi 0, %s524
      %s539 = sphi 0, %s525
      %s543 = sphi 0, %s543
      %s545 = sphi 0, %s543
      %s546 = sphi 0, %s545
      %s560 = sphi 0, %s546
      %s564 = sphi 0, %s564
      %s566 = sphi 0, %s564
      %s567 = sphi 0, %s566
      %s581 = sphi 0, %s567
      %s585 = sphi 0, %s585
      %s587 = sphi 0, %s585
      %s588 = sphi 0, %s587
      %s602 = sphi 0, %s588
      %s606 = sphi 0, %s606
      %s608 = sphi 0, %s606
      %s609 = sphi 0, %s608
      %s623 = sphi 0, %s609
      %s627 = sphi 0, %s627
      %s629 = sphi 0, %s627
      %s630 = sphi 0, %s629
      %s644 = sphi 0, %s630
      %s650 = sphi 0, %s652
      %s653 = sphi 0, %s650
      %s654 = sphi 0, %s653
      %s670 = sphi 0, %s654
    $region4: #{wtab_forward.1} parent=1 // loop_header_branch
      %50 = sbr.rel (%p48) target = $region8
    $region5: #{wtab_forward.1} parent=1 // loop_body
      %s52 = ssub.s32 %s47, 1
      %s53 = ssub.s32 %s47, 2
      %s54 = sadd.s32 %s47, 1
      %s55 = ssub.s32 %s47, %s54
      %p56 = scmp.eq.s32.totalorder %s55, 0
      %s58 = sadd.s32 %s57, 1
      %s59 = scalar_select %p56, %s57, %s58
      %p62 = pneg %p56
      %p63 = scmp.eq.s32.totalorder %s47, 1
      %p64 = por %p62, %p63
      %p65 = scmp.ne.s32.totalorder %s57, %s60
      %p66 = scmp.eq.s32.totalorder %s47, 0
      %p67 = por %p65, %p66
      %p68 = scmp.ne.s32.totalorder %s57, %s60
      %p69 = scmp.eq.s32.totalorder %s52, 1
      %p70 = por %p68, %p69
      %p71 = scmp.ne.s32.totalorder %s60, %s61
      %p72 = scmp.eq.s32.totalorder %s52, 0
      %p73 = por %p71, %p72
      %p74 = scmp.ne.s32.totalorder %s60, %s61
      %p75 = scmp.eq.s32.totalorder %s53, 1
      %p76 = por %p74, %p75
      %p78 = scmp.ne.s32.totalorder %s61, %s77
      %p79 = scmp.eq.s32.totalorder %s53, 0
      %p80 = por %p78, %p79
      %s82 = sadd.s32 %s81, 1
      %p85 = scmp.eq.s32.totalorder %s47, 1
      %p86 = scmp.ne.s32.totalorder %s81, %s83
      %p87 = scmp.eq.s32.totalorder %s47, 0
      %p88 = por %p86, %p87
      %p89 = scmp.ne.s32.totalorder %s81, %s83
      %p90 = scmp.eq.s32.totalorder %s52, 1
      %p91 = por %p89, %p90
      %p92 = scmp.ne.s32.totalorder %s83, %s84
      %p93 = scmp.eq.s32.totalorder %s52, 0
      %p94 = por %p92, %p93
      %p95 = scmp.ne.s32.totalorder %s83, %s84
      %p96 = scmp.eq.s32.totalorder %s53, 1
      %p97 = por %p95, %p96
      %p99 = scmp.ne.s32.totalorder %s84, %s98
      %p100 = scmp.eq.s32.totalorder %s53, 0
      %p101 = por %p99, %p100
      %s103 = sadd.s32 %s102, 1
      %p106 = scmp.eq.s32.totalorder %s47, 1
      %p107 = scmp.ne.s32.totalorder %s102, %s104
      %p108 = scmp.eq.s32.totalorder %s47, 0
      %p109 = por %p107, %p108
      %p110 = scmp.ne.s32.totalorder %s102, %s104
      %p111 = scmp.eq.s32.totalorder %s52, 1
      %p112 = por %p110, %p111
      %p113 = scmp.ne.s32.totalorder %s104, %s105
      %p114 = scmp.eq.s32.totalorder %s52, 0
      %p115 = por %p113, %p114
      %p116 = scmp.ne.s32.totalorder %s104, %s105
      %p117 = scmp.eq.s32.totalorder %s53, 1
      %p118 = por %p116, %p117
      %p120 = scmp.ne.s32.totalorder %s105, %s119
      %p121 = scmp.eq.s32.totalorder %s53, 0
      %p122 = por %p120, %p121
      %s124 = sadd.s32 %s123, 1
      %p127 = scmp.eq.s32.totalorder %s47, 1
      %p128 = scmp.ne.s32.totalorder %s123, %s125
      %p129 = scmp.eq.s32.totalorder %s47, 0
      %p130 = por %p128, %p129
      %p131 = scmp.ne.s32.totalorder %s123, %s125
      %p132 = scmp.eq.s32.totalorder %s52, 1
      %p133 = por %p131, %p132
      %p134 = scmp.ne.s32.totalorder %s125, %s126
      %p135 = scmp.eq.s32.totalorder %s52, 0
      %p136 = por %p134, %p135
      %p137 = scmp.ne.s32.totalorder %s125, %s126
      %p138 = scmp.eq.s32.totalorder %s53, 1
      %p139 = por %p137, %p138
      %p141 = scmp.ne.s32.totalorder %s126, %s140
      %p142 = scmp.eq.s32.totalorder %s53, 0
      %p143 = por %p141, %p142
      %s145 = sadd.s32 %s144, 1
      %p148 = scmp.eq.s32.totalorder %s47, 1
      %p149 = scmp.ne.s32.totalorder %s144, %s146
      %p150 = scmp.eq.s32.totalorder %s47, 0
      %p151 = por %p149, %p150
      %p152 = scmp.ne.s32.totalorder %s144, %s146
      %p153 = scmp.eq.s32.totalorder %s52, 1
      %p154 = por %p152, %p153
      %p155 = scmp.ne.s32.totalorder %s146, %s147
      %p156 = scmp.eq.s32.totalorder %s52, 0
      %p157 = por %p155, %p156
      %p158 = scmp.ne.s32.totalorder %s146, %s147
      %p159 = scmp.eq.s32.totalorder %s53, 1
      %p160 = por %p158, %p159
      %p162 = scmp.ne.s32.totalorder %s147, %s161
      %p163 = scmp.eq.s32.totalorder %s53, 0
      %p164 = por %p162, %p163
      %s166 = sadd.s32 %s165, 1
      %p169 = scmp.eq.s32.totalorder %s47, 1
      %p170 = scmp.ne.s32.totalorder %s165, %s167
      %p171 = scmp.eq.s32.totalorder %s47, 0
      %p172 = por %p170, %p171
      %p173 = scmp.ne.s32.totalorder %s165, %s167
      %p174 = scmp.eq.s32.totalorder %s52, 1
      %p175 = por %p173, %p174
      %p176 = scmp.ne.s32.totalorder %s167, %s168
      %p177 = scmp.eq.s32.totalorder %s52, 0
      %p178 = por %p176, %p177
      %p179 = scmp.ne.s32.totalorder %s167, %s168
      %p180 = scmp.eq.s32.totalorder %s53, 1
      %p181 = por %p179, %p180
      %p183 = scmp.ne.s32.totalorder %s168, %s182
      %p184 = scmp.eq.s32.totalorder %s53, 0
      %p185 = por %p183, %p184
      %s187 = sadd.s32 %s186, 1
      %p190 = scmp.eq.s32.totalorder %s47, 1
      %p191 = scmp.ne.s32.totalorder %s186, %s188
      %p192 = scmp.eq.s32.totalorder %s47, 0
      %p193 = por %p191, %p192
      %p194 = scmp.ne.s32.totalorder %s186, %s188
      %p195 = scmp.eq.s32.totalorder %s52, 1
      %p196 = por %p194, %p195
      %p197 = scmp.ne.s32.totalorder %s188, %s189
      %p198 = scmp.eq.s32.totalorder %s52, 0
      %p199 = por %p197, %p198
      %p200 = scmp.ne.s32.totalorder %s188, %s189
      %p201 = scmp.eq.s32.totalorder %s53, 1
      %p202 = por %p200, %p201
      %p204 = scmp.ne.s32.totalorder %s189, %s203
      %p205 = scmp.eq.s32.totalorder %s53, 0
      %p206 = por %p204, %p205
      %s208 = sadd.s32 %s207, 1
      %p211 = scmp.eq.s32.totalorder %s47, 1
      %p212 = scmp.ne.s32.totalorder %s207, %s209
      %p213 = scmp.eq.s32.totalorder %s47, 0
      %p214 = por %p212, %p213
      %p215 = scmp.ne.s32.totalorder %s207, %s209
      %p216 = scmp.eq.s32.totalorder %s52, 1
      %p217 = por %p215, %p216
      %p218 = scmp.ne.s32.totalorder %s209, %s210
      %p219 = scmp.eq.s32.totalorder %s52, 0
      %p220 = por %p218, %p219
      %p221 = scmp.ne.s32.totalorder %s209, %s210
      %p222 = scmp.eq.s32.totalorder %s53, 1
      %p223 = por %p221, %p222
      %p225 = scmp.ne.s32.totalorder %s210, %s224
      %p226 = scmp.eq.s32.totalorder %s53, 0
      %p227 = por %p225, %p226
      %s229 = sadd.s32 %s228, 1
      %p232 = scmp.eq.s32.totalorder %s47, 1
      %p233 = scmp.ne.s32.totalorder %s228, %s230
      %p234 = scmp.eq.s32.totalorder %s47, 0
      %p235 = por %p233, %p234
      %p236 = scmp.ne.s32.totalorder %s228, %s230
      %p237 = scmp.eq.s32.totalorder %s52, 1
      %p238 = por %p236, %p237
      %p239 = scmp.ne.s32.totalorder %s230, %s231
      %p240 = scmp.eq.s32.totalorder %s52, 0
      %p241 = por %p239, %p240
      %p242 = scmp.ne.s32.totalorder %s230, %s231
      %p243 = scmp.eq.s32.totalorder %s53, 1
      %p244 = por %p242, %p243
      %p246 = scmp.ne.s32.totalorder %s231, %s245
      %p247 = scmp.eq.s32.totalorder %s53, 0
      %p248 = por %p246, %p247
      %s250 = sadd.s32 %s249, 1
      %p253 = scmp.eq.s32.totalorder %s47, 1
      %p254 = scmp.ne.s32.totalorder %s249, %s251
      %p255 = scmp.eq.s32.totalorder %s47, 0
      %p256 = por %p254, %p255
      %p257 = scmp.ne.s32.totalorder %s249, %s251
      %p258 = scmp.eq.s32.totalorder %s52, 1
      %p259 = por %p257, %p258
      %p260 = scmp.ne.s32.totalorder %s251, %s252
      %p261 = scmp.eq.s32.totalorder %s52, 0
      %p262 = por %p260, %p261
      %p263 = scmp.ne.s32.totalorder %s251, %s252
      %p264 = scmp.eq.s32.totalorder %s53, 1
      %p265 = por %p263, %p264
      %p267 = scmp.ne.s32.totalorder %s252, %s266
      %p268 = scmp.eq.s32.totalorder %s53, 0
      %p269 = por %p267, %p268
      %s271 = sadd.s32 %s270, 1
      %p274 = scmp.eq.s32.totalorder %s47, 1
      %p275 = scmp.ne.s32.totalorder %s270, %s272
      %p276 = scmp.eq.s32.totalorder %s47, 0
      %p277 = por %p275, %p276
      %p278 = scmp.ne.s32.totalorder %s270, %s272
      %p279 = scmp.eq.s32.totalorder %s52, 1
      %p280 = por %p278, %p279
      %p281 = scmp.ne.s32.totalorder %s272, %s273
      %p282 = scmp.eq.s32.totalorder %s52, 0
      %p283 = por %p281, %p282
      %p284 = scmp.ne.s32.totalorder %s272, %s273
      %p285 = scmp.eq.s32.totalorder %s53, 1
      %p286 = por %p284, %p285
      %p288 = scmp.ne.s32.totalorder %s273, %s287
      %p289 = scmp.eq.s32.totalorder %s53, 0
      %p290 = por %p288, %p289
      %s292 = sadd.s32 %s291, 1
      %p295 = scmp.eq.s32.totalorder %s47, 1
      %p296 = scmp.ne.s32.totalorder %s291, %s293
      %p297 = scmp.eq.s32.totalorder %s47, 0
      %p298 = por %p296, %p297
      %p299 = scmp.ne.s32.totalorder %s291, %s293
      %p300 = scmp.eq.s32.totalorder %s52, 1
      %p301 = por %p299, %p300
      %p302 = scmp.ne.s32.totalorder %s293, %s294
      %p303 = scmp.eq.s32.totalorder %s52, 0
      %p304 = por %p302, %p303
      %p305 = scmp.ne.s32.totalorder %s293, %s294
      %p306 = scmp.eq.s32.totalorder %s53, 1
      %p307 = por %p305, %p306
      %p309 = scmp.ne.s32.totalorder %s294, %s308
      %p310 = scmp.eq.s32.totalorder %s53, 0
      %p311 = por %p309, %p310
      %s313 = sadd.s32 %s312, 1
      %p316 = scmp.eq.s32.totalorder %s47, 1
      %p317 = scmp.ne.s32.totalorder %s312, %s314
      %p318 = scmp.eq.s32.totalorder %s47, 0
      %p319 = por %p317, %p318
      %p320 = scmp.ne.s32.totalorder %s312, %s314
      %p321 = scmp.eq.s32.totalorder %s52, 1
      %p322 = por %p320, %p321
      %p323 = scmp.ne.s32.totalorder %s314, %s315
      %p324 = scmp.eq.s32.totalorder %s52, 0
      %p325 = por %p323, %p324
      %p326 = scmp.ne.s32.totalorder %s314, %s315
      %p327 = scmp.eq.s32.totalorder %s53, 1
      %p328 = por %p326, %p327
      %p330 = scmp.ne.s32.totalorder %s315, %s329
      %p331 = scmp.eq.s32.totalorder %s53, 0
      %p332 = por %p330, %p331
      %s334 = sadd.s32 %s333, 1
      %p337 = scmp.eq.s32.totalorder %s47, 1
      %p338 = scmp.ne.s32.totalorder %s333, %s335
      %p339 = scmp.eq.s32.totalorder %s47, 0
      %p340 = por %p338, %p339
      %p341 = scmp.ne.s32.totalorder %s333, %s335
      %p342 = scmp.eq.s32.totalorder %s52, 1
      %p343 = por %p341, %p342
      %p344 = scmp.ne.s32.totalorder %s335, %s336
      %p345 = scmp.eq.s32.totalorder %s52, 0
      %p346 = por %p344, %p345
      %p347 = scmp.ne.s32.totalorder %s335, %s336
      %p348 = scmp.eq.s32.totalorder %s53, 1
      %p349 = por %p347, %p348
      %p351 = scmp.ne.s32.totalorder %s336, %s350
      %p352 = scmp.eq.s32.totalorder %s53, 0
      %p353 = por %p351, %p352
      %s355 = sadd.s32 %s354, 1
      %p358 = scmp.eq.s32.totalorder %s47, 1
      %p359 = scmp.ne.s32.totalorder %s354, %s356
      %p360 = scmp.eq.s32.totalorder %s47, 0
      %p361 = por %p359, %p360
      %p362 = scmp.ne.s32.totalorder %s354, %s356
      %p363 = scmp.eq.s32.totalorder %s52, 1
      %p364 = por %p362, %p363
      %p365 = scmp.ne.s32.totalorder %s356, %s357
      %p366 = scmp.eq.s32.totalorder %s52, 0
      %p367 = por %p365, %p366
      %p368 = scmp.ne.s32.totalorder %s356, %s357
      %p369 = scmp.eq.s32.totalorder %s53, 1
      %p370 = por %p368, %p369
      %p372 = scmp.ne.s32.totalorder %s357, %s371
      %p373 = scmp.eq.s32.totalorder %s53, 0
      %p374 = por %p372, %p373
      %s376 = sadd.s32 %s375, 1
      %p379 = scmp.eq.s32.totalorder %s47, 1
      %p380 = scmp.ne.s32.totalorder %s375, %s377
      %p381 = scmp.eq.s32.totalorder %s47, 0
      %p382 = por %p380, %p381
      %p383 = scmp.ne.s32.totalorder %s375, %s377
      %p384 = scmp.eq.s32.totalorder %s52, 1
      %p385 = por %p383, %p384
      %p386 = scmp.ne.s32.totalorder %s377, %s378
      %p387 = scmp.eq.s32.totalorder %s52, 0
      %p388 = por %p386, %p387
      %p389 = scmp.ne.s32.totalorder %s377, %s378
      %p390 = scmp.eq.s32.totalorder %s53, 1
      %p391 = por %p389, %p390
      %p393 = scmp.ne.s32.totalorder %s378, %s392
      %p394 = scmp.eq.s32.totalorder %s53, 0
      %p395 = por %p393, %p394
      %s397 = sadd.s32 %s396, 1
      %p400 = scmp.eq.s32.totalorder %s47, 1
      %p401 = scmp.ne.s32.totalorder %s396, %s398
      %p402 = scmp.eq.s32.totalorder %s47, 0
      %p403 = por %p401, %p402
      %p404 = scmp.ne.s32.totalorder %s396, %s398
      %p405 = scmp.eq.s32.totalorder %s52, 1
      %p406 = por %p404, %p405
      %p407 = scmp.ne.s32.totalorder %s398, %s399
      %p408 = scmp.eq.s32.totalorder %s52, 0
      %p409 = por %p407, %p408
      %p410 = scmp.ne.s32.totalorder %s398, %s399
      %p411 = scmp.eq.s32.totalorder %s53, 1
      %p412 = por %p410, %p411
      %p414 = scmp.ne.s32.totalorder %s399, %s413
      %p415 = scmp.eq.s32.totalorder %s53, 0
      %p416 = por %p414, %p415
      %s418 = sadd.s32 %s417, 1
      %p421 = scmp.eq.s32.totalorder %s47, 1
      %p422 = scmp.ne.s32.totalorder %s417, %s419
      %p423 = scmp.eq.s32.totalorder %s47, 0
      %p424 = por %p422, %p423
      %p425 = scmp.ne.s32.totalorder %s417, %s419
      %p426 = scmp.eq.s32.totalorder %s52, 1
      %p427 = por %p425, %p426
      %p428 = scmp.ne.s32.totalorder %s419, %s420
      %p429 = scmp.eq.s32.totalorder %s52, 0
      %p430 = por %p428, %p429
      %p431 = scmp.ne.s32.totalorder %s419, %s420
      %p432 = scmp.eq.s32.totalorder %s53, 1
      %p433 = por %p431, %p432
      %p435 = scmp.ne.s32.totalorder %s420, %s434
      %p436 = scmp.eq.s32.totalorder %s53, 0
      %p437 = por %p435, %p436
      %s439 = sadd.s32 %s438, 1
      %p442 = scmp.eq.s32.totalorder %s47, 1
      %p443 = scmp.ne.s32.totalorder %s438, %s440
      %p444 = scmp.eq.s32.totalorder %s47, 0
      %p445 = por %p443, %p444
      %p446 = scmp.ne.s32.totalorder %s438, %s440
      %p447 = scmp.eq.s32.totalorder %s52, 1
      %p448 = por %p446, %p447
      %p449 = scmp.ne.s32.totalorder %s440, %s441
      %p450 = scmp.eq.s32.totalorder %s52, 0
      %p451 = por %p449, %p450
      %p452 = scmp.ne.s32.totalorder %s440, %s441
      %p453 = scmp.eq.s32.totalorder %s53, 1
      %p454 = por %p452, %p453
      %p456 = scmp.ne.s32.totalorder %s441, %s455
      %p457 = scmp.eq.s32.totalorder %s53, 0
      %p458 = por %p456, %p457
      %s460 = sadd.s32 %s459, 1
      %p463 = scmp.eq.s32.totalorder %s47, 1
      %p464 = scmp.ne.s32.totalorder %s459, %s461
      %p465 = scmp.eq.s32.totalorder %s47, 0
      %p466 = por %p464, %p465
      %p467 = scmp.ne.s32.totalorder %s459, %s461
      %p468 = scmp.eq.s32.totalorder %s52, 1
      %p469 = por %p467, %p468
      %p470 = scmp.ne.s32.totalorder %s461, %s462
      %p471 = scmp.eq.s32.totalorder %s52, 0
      %p472 = por %p470, %p471
      %p473 = scmp.ne.s32.totalorder %s461, %s462
      %p474 = scmp.eq.s32.totalorder %s53, 1
      %p475 = por %p473, %p474
      %p477 = scmp.ne.s32.totalorder %s462, %s476
      %p478 = scmp.eq.s32.totalorder %s53, 0
      %p479 = por %p477, %p478
      %s481 = sadd.s32 %s480, 1
      %p484 = scmp.eq.s32.totalorder %s47, 1
      %p485 = scmp.ne.s32.totalorder %s480, %s482
      %p486 = scmp.eq.s32.totalorder %s47, 0
      %p487 = por %p485, %p486
      %p488 = scmp.ne.s32.totalorder %s480, %s482
      %p489 = scmp.eq.s32.totalorder %s52, 1
      %p490 = por %p488, %p489
      %p491 = scmp.ne.s32.totalorder %s482, %s483
      %p492 = scmp.eq.s32.totalorder %s52, 0
      %p493 = por %p491, %p492
      %p494 = scmp.ne.s32.totalorder %s482, %s483
      %p495 = scmp.eq.s32.totalorder %s53, 1
      %p496 = por %p494, %p495
      %p498 = scmp.ne.s32.totalorder %s483, %s497
      %p499 = scmp.eq.s32.totalorder %s53, 0
      %p500 = por %p498, %p499
      %s502 = sadd.s32 %s501, 1
      %p505 = scmp.eq.s32.totalorder %s47, 1
      %p506 = scmp.ne.s32.totalorder %s501, %s503
      %p507 = scmp.eq.s32.totalorder %s47, 0
      %p508 = por %p506, %p507
      %p509 = scmp.ne.s32.totalorder %s501, %s503
      %p510 = scmp.eq.s32.totalorder %s52, 1
      %p511 = por %p509, %p510
      %p512 = scmp.ne.s32.totalorder %s503, %s504
      %p513 = scmp.eq.s32.totalorder %s52, 0
      %p514 = por %p512, %p513
      %p515 = scmp.ne.s32.totalorder %s503, %s504
      %p516 = scmp.eq.s32.totalorder %s53, 1
      %p517 = por %p515, %p516
      %p519 = scmp.ne.s32.totalorder %s504, %s518
      %p520 = scmp.eq.s32.totalorder %s53, 0
      %p521 = por %p519, %p520
      %s523 = sadd.s32 %s522, 1
      %p526 = scmp.eq.s32.totalorder %s47, 1
      %p527 = scmp.ne.s32.totalorder %s522, %s524
      %p528 = scmp.eq.s32.totalorder %s47, 0
      %p529 = por %p527, %p528
      %p530 = scmp.ne.s32.totalorder %s522, %s524
      %p531 = scmp.eq.s32.totalorder %s52, 1
      %p532 = por %p530, %p531
      %p533 = scmp.ne.s32.totalorder %s524, %s525
      %p534 = scmp.eq.s32.totalorder %s52, 0
      %p535 = por %p533, %p534
      %p536 = scmp.ne.s32.totalorder %s524, %s525
      %p537 = scmp.eq.s32.totalorder %s53, 1
      %p538 = por %p536, %p537
      %p540 = scmp.ne.s32.totalorder %s525, %s539
      %p541 = scmp.eq.s32.totalorder %s53, 0
      %p542 = por %p540, %p541
      %s544 = sadd.s32 %s543, 1
      %p547 = scmp.eq.s32.totalorder %s47, 1
      %p548 = scmp.ne.s32.totalorder %s543, %s545
      %p549 = scmp.eq.s32.totalorder %s47, 0
      %p550 = por %p548, %p549
      %p551 = scmp.ne.s32.totalorder %s543, %s545
      %p552 = scmp.eq.s32.totalorder %s52, 1
      %p553 = por %p551, %p552
      %p554 = scmp.ne.s32.totalorder %s545, %s546
      %p555 = scmp.eq.s32.totalorder %s52, 0
      %p556 = por %p554, %p555
      %p557 = scmp.ne.s32.totalorder %s545, %s546
      %p558 = scmp.eq.s32.totalorder %s53, 1
      %p559 = por %p557, %p558
      %p561 = scmp.ne.s32.totalorder %s546, %s560
      %p562 = scmp.eq.s32.totalorder %s53, 0
      %p563 = por %p561, %p562
      %s565 = sadd.s32 %s564, 1
      %p568 = scmp.eq.s32.totalorder %s47, 1
      %p569 = scmp.ne.s32.totalorder %s564, %s566
      %p570 = scmp.eq.s32.totalorder %s47, 0
      %p571 = por %p569, %p570
      %p572 = scmp.ne.s32.totalorder %s564, %s566
      %p573 = scmp.eq.s32.totalorder %s52, 1
      %p574 = por %p572, %p573
      %p575 = scmp.ne.s32.totalorder %s566, %s567
      %p576 = scmp.eq.s32.totalorder %s52, 0
      %p577 = por %p575, %p576
      %p578 = scmp.ne.s32.totalorder %s566, %s567
      %p579 = scmp.eq.s32.totalorder %s53, 1
      %p580 = por %p578, %p579
      %p582 = scmp.ne.s32.totalorder %s567, %s581
      %p583 = scmp.eq.s32.totalorder %s53, 0
      %p584 = por %p582, %p583
      %s586 = sadd.s32 %s585, 1
      %p589 = scmp.eq.s32.totalorder %s47, 1
      %p590 = scmp.ne.s32.totalorder %s585, %s587
      %p591 = scmp.eq.s32.totalorder %s47, 0
      %p592 = por %p590, %p591
      %p593 = scmp.ne.s32.totalorder %s585, %s587
      %p594 = scmp.eq.s32.totalorder %s52, 1
      %p595 = por %p593, %p594
      %p596 = scmp.ne.s32.totalorder %s587, %s588
      %p597 = scmp.eq.s32.totalorder %s52, 0
      %p598 = por %p596, %p597
      %p599 = scmp.ne.s32.totalorder %s587, %s588
      %p600 = scmp.eq.s32.totalorder %s53, 1
      %p601 = por %p599, %p600
      %p603 = scmp.ne.s32.totalorder %s588, %s602
      %p604 = scmp.eq.s32.totalorder %s53, 0
      %p605 = por %p603, %p604
      %s607 = sadd.s32 %s606, 1
      %p610 = scmp.eq.s32.totalorder %s47, 1
      %p611 = scmp.ne.s32.totalorder %s606, %s608
      %p612 = scmp.eq.s32.totalorder %s47, 0
      %p613 = por %p611, %p612
      %p614 = scmp.ne.s32.totalorder %s606, %s608
      %p615 = scmp.eq.s32.totalorder %s52, 1
      %p616 = por %p614, %p615
      %p617 = scmp.ne.s32.totalorder %s608, %s609
      %p618 = scmp.eq.s32.totalorder %s52, 0
      %p619 = por %p617, %p618
      %p620 = scmp.ne.s32.totalorder %s608, %s609
      %p621 = scmp.eq.s32.totalorder %s53, 1
      %p622 = por %p620, %p621
      %p624 = scmp.ne.s32.totalorder %s609, %s623
      %p625 = scmp.eq.s32.totalorder %s53, 0
      %p626 = por %p624, %p625
      %s628 = sadd.s32 %s627, 1
      %p631 = scmp.eq.s32.totalorder %s47, 1
      %p632 = scmp.ne.s32.totalorder %s627, %s629
      %p633 = scmp.eq.s32.totalorder %s47, 0
      %p634 = por %p632, %p633
      %p635 = scmp.ne.s32.totalorder %s627, %s629
      %p636 = scmp.eq.s32.totalorder %s52, 1
      %p637 = por %p635, %p636
      %p638 = scmp.ne.s32.totalorder %s629, %s630
      %p639 = scmp.eq.s32.totalorder %s52, 0
      %p640 = por %p638, %p639
      %p641 = scmp.ne.s32.totalorder %s629, %s630
      %p642 = scmp.eq.s32.totalorder %s53, 1
      %p643 = por %p641, %p642
      %p645 = scmp.ne.s32.totalorder %s630, %s644
      %p646 = scmp.eq.s32.totalorder %s53, 0
      %p647 = por %p645, %p646
      %s648 = ssub.s32 %s47, %s54
      %p649 = scmp.eq.s32.totalorder %s648, 0
      %s651 = sadd.s32 %s650, 1
      %s652 = scalar_select %p649, %s650, %s651
      %p655 = pneg %p649
      %p656 = scmp.eq.s32.totalorder %s47, 1
      %p657 = por %p655, %p656
      %p658 = scmp.ne.s32.totalorder %s650, %s653
      %p659 = scmp.eq.s32.totalorder %s47, 0
      %p660 = por %p658, %p659
      %p661 = scmp.ne.s32.totalorder %s650, %s653
      %p662 = scmp.eq.s32.totalorder %s52, 1
      %p663 = por %p661, %p662
      %p664 = scmp.ne.s32.totalorder %s653, %s654
      %p665 = scmp.eq.s32.totalorder %s52, 0
      %p666 = por %p664, %p665
      %p667 = scmp.ne.s32.totalorder %s653, %s654
      %p668 = scmp.eq.s32.totalorder %s53, 1
      %p669 = por %p667, %p668
      %p671 = scmp.ne.s32.totalorder %s654, %s670
      %p672 = scmp.eq.s32.totalorder %s53, 0
      %p673 = por %p671, %p672
      %p674 = scmp.le.s32.totalorder 1, %s47
      %p675 = scmp.lt.s32.totalorder %s47, 3
      %p676 = pnand %p674, %p675
      %p677 = pneg %p676
      // Predicated region
      $region9: #{wtab_forward.1} parent=5 // pred_check
        _
      $region10: #{wtab_forward.1} parent=5 // pred_check_branch
        %679 = sbr.rel (%p676) target = $region12
      $region11: #{wtab_forward.1} parent=5 // pred_region
        %s680 = ssub.s32 %s47, 1
        // Predicated region
        $region13: #{wtab_forward.1} parent=11 // pred_check
          %p681 = pneg %p94
        $region14: #{wtab_forward.1} parent=11 // pred_check_branch
          %683 = sbr.rel (%p681) target = $region16
        $region15: #{wtab_forward.1} parent=11 // pred_region
          _
        $region16: #{wtab_forward.1} parent=11 // pred_fallthru
          _
        // Predicated region
        $region17: #{wtab_forward.1} parent=11 // pred_check
          %p684 = pneg %p115
        $region18: #{wtab_forward.1} parent=11 // pred_check_branch
          %686 = sbr.rel (%p684) target = $region20
        $region19: #{wtab_forward.1} parent=11 // pred_region
          %s688 = ssub.s32 4096, 4096
          %689 = vsyncadd [#allocation3], %s688
          %s690 = sshll.u32 [#allocation2], 4
          %s691 = int_to_ptr.vmem [resolvable:$true] %s690
          %696 = dma.hbm_to_vmem [thread:$0]  %s2, 4096, %s691, [#allocation3], 128, 128, 8
        $region20: #{wtab_forward.1} parent=11 // pred_fallthru
          _
        // Predicated region
        $region21: #{wtab_forward.1} parent=11 // pred_check
          %p697 = pneg %p136
        $region22: #{wtab_forward.1} parent=11 // pred_check_branch
          %699 = sbr.rel (%p697) target = $region24
        $region23: #{wtab_forward.1} parent=11 // pred_region
          %s701 = ssub.s32 4096, 4096
          %702 = vsyncadd [#allocation5], %s701
          %s703 = sshll.u32 [#allocation4], 4
          %s704 = int_to_ptr.vmem [resolvable:$true] %s703
          %709 = dma.hbm_to_vmem [thread:$0]  %s3, 4096, %s704, [#allocation5], 128, 128, 8
        $region24: #{wtab_forward.1} parent=11 // pred_fallthru
          _
        // Predicated region
        $region25: #{wtab_forward.1} parent=11 // pred_check
          %p710 = pneg %p157
        $region26: #{wtab_forward.1} parent=11 // pred_check_branch
          %712 = sbr.rel (%p710) target = $region28
        $region27: #{wtab_forward.1} parent=11 // pred_region
          %s714 = ssub.s32 4096, 4096
          %715 = vsyncadd [#allocation5], %s714
          %s716 = sshll.u32 [#allocation6], 4
          %s717 = int_to_ptr.vmem [resolvable:$true] %s716
          %722 = dma.hbm_to_vmem [thread:$0]  %s4, 4096, %s717, [#allocation5], 128, 128, 8
        $region28: #{wtab_forward.1} parent=11 // pred_fallthru
          _
        // Predicated region
        $region29: #{wtab_forward.1} parent=11 // pred_check
          %p723 = pneg %p178
        $region30: #{wtab_forward.1} parent=11 // pred_check_branch
          %725 = sbr.rel (%p723) target = $region32
        $region31: #{wtab_forward.1} parent=11 // pred_region
          %s727 = ssub.s32 3072, 3072
          %728 = vsyncadd [#allocation8], %s727
          %s729 = sshll.u32 [#allocation7], 4
          %s730 = int_to_ptr.vmem [resolvable:$true] %s729
          %735 = dma.hbm_to_vmem [thread:$0]  %s5, 3072, %s730, [#allocation8], 128, 128, 8
        $region32: #{wtab_forward.1} parent=11 // pred_fallthru
          _
        // Predicated region
        $region33: #{wtab_forward.1} parent=11 // pred_check
          %p736 = pneg %p199
        $region34: #{wtab_forward.1} parent=11 // pred_check_branch
          %738 = sbr.rel (%p736) target = $region36
        $region35: #{wtab_forward.1} parent=11 // pred_region
          %s740 = ssub.s32 384, 384
          %741 = vsyncadd [#allocation8], %s740
          %s742 = sshll.u32 [#allocation9], 4
          %s743 = int_to_ptr.vmem [resolvable:$true] %s742
          %748 = dma.hbm_to_vmem [thread:$0]  %s6, 384, %s743, [#allocation8], 128, 128, 8
        $region36: #{wtab_forward.1} parent=11 // pred_fallthru
          _
        // Predicated region
        $region37: #{wtab_forward.1} parent=11 // pred_check
          %p749 = pneg %p220
        $region38: #{wtab_forward.1} parent=11 // pred_check_branch
          %751 = sbr.rel (%p749) target = $region40
        $region39: #{wtab_forward.1} parent=11 // pred_region
          %s753 = ssub.s32 128, 128
          %754 = vsyncadd [#allocation11], %s753
          %s756 = sshll.u32 [#allocation10], 4
          %s757 = int_to_ptr.vmem [resolvable:$true] %s756
          %759 = dma.hbm_to_vmem [thread:$0]  %s7, 128, %s757, [#allocation11]
        $region40: #{wtab_forward.1} parent=11 // pred_fallthru
          _
        // Predicated region
        $region41: #{wtab_forward.1} parent=11 // pred_check
          %p760 = pneg %p241
        $region42: #{wtab_forward.1} parent=11 // pred_check_branch
          %762 = sbr.rel (%p760) target = $region44
        $region43: #{wtab_forward.1} parent=11 // pred_region
          %s764 = ssub.s32 3072, 3072
          %765 = vsyncadd [#allocation11], %s764
          %s766 = sshll.u32 [#allocation12], 4
          %s767 = int_to_ptr.vmem [resolvable:$true] %s766
          %772 = dma.hbm_to_vmem [thread:$0]  %s8, 3072, %s767, [#allocation11], 128, 128, 8
        $region44: #{wtab_forward.1} parent=11 // pred_fallthru
          _
        // Predicated region
        $region45: #{wtab_forward.1} parent=11 // pred_check
          %p773 = pneg %p262
        $region46: #{wtab_forward.1} parent=11 // pred_check_branch
          %775 = sbr.rel (%p773) target = $region48
        $region47: #{wtab_forward.1} parent=11 // pred_region
          %s777 = ssub.s32 384, 384
          %778 = vsyncadd [#allocation14], %s777
          %s779 = sshll.u32 [#allocation13], 4
          %s780 = int_to_ptr.vmem [resolvable:$true] %s779
          %785 = dma.hbm_to_vmem [thread:$0]  %s9, 384, %s780, [#allocation14], 128, 128, 8
        $region48: #{wtab_forward.1} parent=11 // pred_fallthru
          _
        // Predicated region
        $region49: #{wtab_forward.1} parent=11 // pred_check
          %p786 = pneg %p283
        $region50: #{wtab_forward.1} parent=11 // pred_check_branch
          %788 = sbr.rel (%p786) target = $region52
        $region51: #{wtab_forward.1} parent=11 // pred_region
          %s790 = ssub.s32 128, 128
          %791 = vsyncadd [#allocation14], %s790
          %s793 = sshll.u32 [#allocation15], 4
          %s794 = int_to_ptr.vmem [resolvable:$true] %s793
          %796 = dma.hbm_to_vmem [thread:$0]  %s10, 128, %s794, [#allocation14]
        $region52: #{wtab_forward.1} parent=11 // pred_fallthru
          _
        // Predicated region
        $region53: #{wtab_forward.1} parent=11 // pred_check
          %p797 = pneg %p304
        $region54: #{wtab_forward.1} parent=11 // pred_check_branch
          %799 = sbr.rel (%p797) target = $region56
        $region55: #{wtab_forward.1} parent=11 // pred_region
          _
        $region56: #{wtab_forward.1} parent=11 // pred_fallthru
          _
        // Predicated region
        $region57: #{wtab_forward.1} parent=11 // pred_check
          %p800 = pneg %p325
        $region58: #{wtab_forward.1} parent=11 // pred_check_branch
          %802 = sbr.rel (%p800) target = $region60
        $region59: #{wtab_forward.1} parent=11 // pred_region
          %s804 = ssub.s32 1152, 1152
          %805 = vsyncadd [#allocation17], %s804
          %s806 = sshll.u32 [#allocation16], 4
          %s807 = int_to_ptr.vmem [resolvable:$true] %s806
          %812 = dma.hbm_to_vmem [thread:$0]  %s12, 1152, %s807, [#allocation17], 128, 128, 8
        $region60: #{wtab_forward.1} parent=11 // pred_fallthru
          _
        // Predicated region
        $region61: #{wtab_forward.1} parent=11 // pred_check
          %p813 = pneg %p346
        $region62: #{wtab_forward.1} parent=11 // pred_check_branch
          %815 = sbr.rel (%p813) target = $region64
        $region63: #{wtab_forward.1} parent=11 // pred_region
          %s817 = ssub.s32 128, 128
          %818 = vsyncadd [#allocation17], %s817
          %s820 = sshll.u32 [#allocation18], 4
          %s821 = int_to_ptr.vmem [resolvable:$true] %s820
          %823 = dma.hbm_to_vmem [thread:$0]  %s13, 128, %s821, [#allocation17]
        $region64: #{wtab_forward.1} parent=11 // pred_fallthru
          _
        // Predicated region
        $region65: #{wtab_forward.1} parent=11 // pred_check
          %p824 = pneg %p367
        $region66: #{wtab_forward.1} parent=11 // pred_check_branch
          %826 = sbr.rel (%p824) target = $region68
        $region67: #{wtab_forward.1} parent=11 // pred_region
          %s828 = ssub.s32 128, 128
          %829 = vsyncadd [#allocation20], %s828
          %s831 = sshll.u32 [#allocation19], 4
          %s832 = int_to_ptr.vmem [resolvable:$true] %s831
          %834 = dma.hbm_to_vmem [thread:$0]  %s14, 128, %s832, [#allocation20]
        $region68: #{wtab_forward.1} parent=11 // pred_fallthru
          _
        // Predicated region
        $region69: #{wtab_forward.1} parent=11 // pred_check
          %p835 = pneg %p388
        $region70: #{wtab_forward.1} parent=11 // pred_check_branch
          %837 = sbr.rel (%p835) target = $region72
        $region71: #{wtab_forward.1} parent=11 // pred_region
          %s839 = ssub.s32 128, 128
          %840 = vsyncadd [#allocation20], %s839
          %s842 = sshll.u32 [#allocation21], 4
          %s843 = int_to_ptr.vmem [resolvable:$true] %s842
          %845 = dma.hbm_to_vmem [thread:$0]  %s15, 128, %s843, [#allocation20]
        $region72: #{wtab_forward.1} parent=11 // pred_fallthru
          _
        // Predicated region
        $region73: #{wtab_forward.1} parent=11 // pred_check
          %p846 = pneg %p409
        $region74: #{wtab_forward.1} parent=11 // pred_check_branch
          %848 = sbr.rel (%p846) target = $region76
        $region75: #{wtab_forward.1} parent=11 // pred_region
          %s850 = ssub.s32 128, 128
          %851 = vsyncadd [#allocation23], %s850
          %s853 = sshll.u32 [#allocation22], 4
          %s854 = int_to_ptr.vmem [resolvable:$true] %s853
          %856 = dma.hbm_to_vmem [thread:$0]  %s16, 128, %s854, [#allocation23]
        $region76: #{wtab_forward.1} parent=11 // pred_fallthru
          _
        // Predicated region
        $region77: #{wtab_forward.1} parent=11 // pred_check
          %p857 = pneg %p430
        $region78: #{wtab_forward.1} parent=11 // pred_check_branch
          %859 = sbr.rel (%p857) target = $region80
        $region79: #{wtab_forward.1} parent=11 // pred_region
          %s861 = ssub.s32 128, 128
          %862 = vsyncadd [#allocation23], %s861
          %s864 = sshll.u32 [#allocation24], 4
          %s865 = int_to_ptr.vmem [resolvable:$true] %s864
          %867 = dma.hbm_to_vmem [thread:$0]  %s17, 128, %s865, [#allocation23]
        $region80: #{wtab_forward.1} parent=11 // pred_fallthru
          _
        // Predicated region
        $region81: #{wtab_forward.1} parent=11 // pred_check
          %p868 = pneg %p451
        $region82: #{wtab_forward.1} parent=11 // pred_check_branch
          %870 = sbr.rel (%p868) target = $region84
        $region83: #{wtab_forward.1} parent=11 // pred_region
          %s872 = ssub.s32 128, 128
          %873 = vsyncadd [#allocation26], %s872
          %s875 = sshll.u32 [#allocation25], 4
          %s876 = int_to_ptr.vmem [resolvable:$true] %s875
          %878 = dma.hbm_to_vmem [thread:$0]  %s18, 128, %s876, [#allocation26]
        $region84: #{wtab_forward.1} parent=11 // pred_fallthru
          _
        // Predicated region
        $region85: #{wtab_forward.1} parent=11 // pred_check
          %p879 = pneg %p472
        $region86: #{wtab_forward.1} parent=11 // pred_check_branch
          %881 = sbr.rel (%p879) target = $region88
        $region87: #{wtab_forward.1} parent=11 // pred_region
          %s883 = ssub.s32 128, 128
          %884 = vsyncadd [#allocation26], %s883
          %s886 = sshll.u32 [#allocation27], 4
          %s887 = int_to_ptr.vmem [resolvable:$true] %s886
          %889 = dma.hbm_to_vmem [thread:$0]  %s19, 128, %s887, [#allocation26]
        $region88: #{wtab_forward.1} parent=11 // pred_fallthru
          _
        // Predicated region
        $region89: #{wtab_forward.1} parent=11 // pred_check
          %p890 = pneg %p493
        $region90: #{wtab_forward.1} parent=11 // pred_check_branch
          %892 = sbr.rel (%p890) target = $region92
        $region91: #{wtab_forward.1} parent=11 // pred_region
          %s894 = ssub.s32 2048, 2048
          %895 = vsyncadd [#allocation29], %s894
          %s896 = sshll.u32 [#allocation28], 4
          %s897 = int_to_ptr.vmem [resolvable:$true] %s896
          %902 = dma.hbm_to_vmem [thread:$0]  %s20, 2048, %s897, [#allocation29], 256, 256, 16
        $region92: #{wtab_forward.1} parent=11 // pred_fallthru
          _
        // Predicated region
        $region93: #{wtab_forward.1} parent=11 // pred_check
          %p903 = pneg %p514
        $region94: #{wtab_forward.1} parent=11 // pred_check_branch
          %905 = sbr.rel (%p903) target = $region96
        $region95: #{wtab_forward.1} parent=11 // pred_region
          %s907 = ssub.s32 2048, 2048
          %908 = vsyncadd [#allocation29], %s907
          %s909 = sshll.u32 [#allocation30], 4
          %s910 = int_to_ptr.vmem [resolvable:$true] %s909
          %915 = dma.hbm_to_vmem [thread:$0]  %s21, 2048, %s910, [#allocation29], 256, 256, 16
        $region96: #{wtab_forward.1} parent=11 // pred_fallthru
          _
        // Predicated region
        $region97: #{wtab_forward.1} parent=11 // pred_check
          %p916 = pneg %p535
        $region98: #{wtab_forward.1} parent=11 // pred_check_branch
          %918 = sbr.rel (%p916) target = $region100
        $region99: #{wtab_forward.1} parent=11 // pred_region
          %s920 = ssub.s32 2048, 2048
          %921 = vsyncadd [#allocation32], %s920
          %s922 = sshll.u32 [#allocation31], 4
          %s923 = int_to_ptr.vmem [resolvable:$true] %s922
          %928 = dma.hbm_to_vmem [thread:$0]  %s22, 2048, %s923, [#allocation32], 256, 256, 16
        $region100: #{wtab_forward.1} parent=11 // pred_fallthru
          _
        // Predicated region
        $region101: #{wtab_forward.1} parent=11 // pred_check
          %p929 = pneg %p556
        $region102: #{wtab_forward.1} parent=11 // pred_check_branch
          %931 = sbr.rel (%p929) target = $region104
        $region103: #{wtab_forward.1} parent=11 // pred_region
          %s933 = ssub.s32 128, 128
          %934 = vsyncadd [#allocation32], %s933
          %s936 = sshll.u32 [#allocation33], 4
          %s937 = int_to_ptr.vmem [resolvable:$true] %s936
          %939 = dma.hbm_to_vmem [thread:$0]  %s23, 128, %s937, [#allocation32]
        $region104: #{wtab_forward.1} parent=11 // pred_fallthru
          _
        // Predicated region
        $region105: #{wtab_forward.1} parent=11 // pred_check
          %p940 = pneg %p577
        $region106: #{wtab_forward.1} parent=11 // pred_check_branch
          %942 = sbr.rel (%p940) target = $region108
        $region107: #{wtab_forward.1} parent=11 // pred_region
          %s944 = ssub.s32 128, 128
          %945 = vsyncadd [#allocation35], %s944
          %s947 = sshll.u32 [#allocation34], 4
          %s948 = int_to_ptr.vmem [resolvable:$true] %s947
          %950 = dma.hbm_to_vmem [thread:$0]  %s24, 128, %s948, [#allocation35]
        $region108: #{wtab_forward.1} parent=11 // pred_fallthru
          _
        // Predicated region
        $region109: #{wtab_forward.1} parent=11 // pred_check
          %p951 = pneg %p598
        $region110: #{wtab_forward.1} parent=11 // pred_check_branch
          %953 = sbr.rel (%p951) target = $region112
        $region111: #{wtab_forward.1} parent=11 // pred_region
          %s955 = ssub.s32 256, 256
          %956 = vsyncadd [#allocation35], %s955
          %s958 = sshll.u32 [#allocation36], 4
          %s959 = int_to_ptr.vmem [resolvable:$true] %s958
          %961 = dma.hbm_to_vmem [thread:$0]  %s25, 256, %s959, [#allocation35]
        $region112: #{wtab_forward.1} parent=11 // pred_fallthru
          _
        // Predicated region
        $region113: #{wtab_forward.1} parent=11 // pred_check
          %p962 = pneg %p619
        $region114: #{wtab_forward.1} parent=11 // pred_check_branch
          %964 = sbr.rel (%p962) target = $region116
        $region115: #{wtab_forward.1} parent=11 // pred_region
          %s966 = ssub.s32 128, 128
          %967 = vsyncadd [#allocation38], %s966
          %s969 = sshll.u32 [#allocation37], 4
          %s970 = int_to_ptr.vmem [resolvable:$true] %s969
          %972 = dma.hbm_to_vmem [thread:$0]  %s26, 128, %s970, [#allocation38]
        $region116: #{wtab_forward.1} parent=11 // pred_fallthru
          _
        // Predicated region
        $region117: #{wtab_forward.1} parent=11 // pred_check
          %p973 = pneg %p640
        $region118: #{wtab_forward.1} parent=11 // pred_check_branch
          %975 = sbr.rel (%p973) target = $region120
        $region119: #{wtab_forward.1} parent=11 // pred_region
          %s977 = ssub.s32 256, 256
          %978 = vsyncadd [#allocation38], %s977
          %s980 = sshll.u32 [#allocation39], 4
          %s981 = int_to_ptr.vmem [resolvable:$true] %s980
          %983 = dma.hbm_to_vmem [thread:$0]  %s27, 256, %s981, [#allocation38]
        $region120: #{wtab_forward.1} parent=11 // pred_fallthru
          _
      $region12: #{wtab_forward.1} parent=5 // pred_fallthru
        _
      %p984 = scmp.lt.s32.totalorder %s47, 2
      // Predicated region
      $region121: #{wtab_forward.1} parent=5 // pred_check
        %p985 = pneg %p984
      $region122: #{wtab_forward.1} parent=5 // pred_check_branch
        %987 = sbr.rel (%p985) target = $region124
      $region123: #{wtab_forward.1} parent=5 // pred_region
        // Predicated region
        $region125: #{wtab_forward.1} parent=123 // pred_check
          %p988 = pneg %p67
        $region126: #{wtab_forward.1} parent=123 // pred_check_branch
          %990 = sbr.rel (%p988) target = $region128
        $region127: #{wtab_forward.1} parent=123 // pred_region
          %p991 = scmp.lt.s32.totalorder %s47, 1
          %s992 = scalar_select %p991, %s47, 1
          %s993 = smul.addr %s992, 2
          %s994 = smul.addr %s993, 8
          %s995 = scalar_lea.vmem %s0, %s994
        $region128: #{wtab_forward.1} parent=123 // pred_fallthru
          _
      $region124: #{wtab_forward.1} parent=5 // pred_fallthru
        _
      %p996 = scmp.le.s32.totalorder 1, %s47
      %p997 = scmp.lt.s32.totalorder %s47, 3
      %p998 = pnand %p996, %p997
      %p999 = pneg %p998
      // Predicated region
      $region129: #{wtab_forward.1} parent=5 // pred_check
        _
      $region130: #{wtab_forward.1} parent=5 // pred_check_branch
        %1001 = sbr.rel (%p998) target = $region132
      $region131: #{wtab_forward.1} parent=5 // pred_region
        %s1002 = ssub.s32 %s47, 1
        // Predicated region
        $region133: #{wtab_forward.1} parent=131 // pred_check
          %p1003 = pneg %p115
        $region134: #{wtab_forward.1} parent=131 // pred_check_branch
          %1005 = sbr.rel (%p1003) target = $region136
        $region135: #{wtab_forward.1} parent=131 // pred_region
          %1006 = dma.done [#allocation3], 4096
        $region136: #{wtab_forward.1} parent=131 // pred_fallthru
          _
        // Predicated region
        $region137: #{wtab_forward.1} parent=131 // pred_check
          %p1007 = pneg %p136
        $region138: #{wtab_forward.1} parent=131 // pred_check_branch
          %1009 = sbr.rel (%p1007) target = $region140
        $region139: #{wtab_forward.1} parent=131 // pred_region
          %1010 = dma.done [#allocation5], 4096
        $region140: #{wtab_forward.1} parent=131 // pred_fallthru
          _
        // Predicated region
        $region141: #{wtab_forward.1} parent=131 // pred_check
          %p1011 = pneg %p157
        $region142: #{wtab_forward.1} parent=131 // pred_check_branch
          %1013 = sbr.rel (%p1011) target = $region144
        $region143: #{wtab_forward.1} parent=131 // pred_region
          %1014 = dma.done [#allocation5], 4096
        $region144: #{wtab_forward.1} parent=131 // pred_fallthru
          _
        // Predicated region
        $region145: #{wtab_forward.1} parent=131 // pred_check
          %p1015 = pneg %p178
        $region146: #{wtab_forward.1} parent=131 // pred_check_branch
          %1017 = sbr.rel (%p1015) target = $region148
        $region147: #{wtab_forward.1} parent=131 // pred_region
          %1018 = dma.done [#allocation8], 3072
        $region148: #{wtab_forward.1} parent=131 // pred_fallthru
          _
        // Predicated region
        $region149: #{wtab_forward.1} parent=131 // pred_check
          %p1019 = pneg %p199
        $region150: #{wtab_forward.1} parent=131 // pred_check_branch
          %1021 = sbr.rel (%p1019) target = $region152
        $region151: #{wtab_forward.1} parent=131 // pred_region
          %1022 = dma.done [#allocation8], 384
        $region152: #{wtab_forward.1} parent=131 // pred_fallthru
          _
        // Predicated region
        $region153: #{wtab_forward.1} parent=131 // pred_check
          %p1023 = pneg %p220
        $region154: #{wtab_forward.1} parent=131 // pred_check_branch
          %1025 = sbr.rel (%p1023) target = $region156
        $region155: #{wtab_forward.1} parent=131 // pred_region
          %1026 = dma.done [#allocation11], 128
        $region156: #{wtab_forward.1} parent=131 // pred_fallthru
          _
        // Predicated region
        $region157: #{wtab_forward.1} parent=131 // pred_check
          %p1027 = pneg %p241
        $region158: #{wtab_forward.1} parent=131 // pred_check_branch
          %1029 = sbr.rel (%p1027) target = $region160
        $region159: #{wtab_forward.1} parent=131 // pred_region
          %1030 = dma.done [#allocation11], 3072
        $region160: #{wtab_forward.1} parent=131 // pred_fallthru
          _
        // Predicated region
        $region161: #{wtab_forward.1} parent=131 // pred_check
          %p1031 = pneg %p262
        $region162: #{wtab_forward.1} parent=131 // pred_check_branch
          %1033 = sbr.rel (%p1031) target = $region164
        $region163: #{wtab_forward.1} parent=131 // pred_region
          %1034 = dma.done [#allocation14], 384
        $region164: #{wtab_forward.1} parent=131 // pred_fallthru
          _
        // Predicated region
        $region165: #{wtab_forward.1} parent=131 // pred_check
          %p1035 = pneg %p283
        $region166: #{wtab_forward.1} parent=131 // pred_check_branch
          %1037 = sbr.rel (%p1035) target = $region168
        $region167: #{wtab_forward.1} parent=131 // pred_region
          %1038 = dma.done [#allocation14], 128
        $region168: #{wtab_forward.1} parent=131 // pred_fallthru
          _
        // Predicated region
        $region169: #{wtab_forward.1} parent=131 // pred_check
          %p1039 = pneg %p325
        $region170: #{wtab_forward.1} parent=131 // pred_check_branch
          %1041 = sbr.rel (%p1039) target = $region172
        $region171: #{wtab_forward.1} parent=131 // pred_region
          %1042 = dma.done [#allocation17], 1152
        $region172: #{wtab_forward.1} parent=131 // pred_fallthru
          _
        // Predicated region
        $region173: #{wtab_forward.1} parent=131 // pred_check
          %p1043 = pneg %p346
        $region174: #{wtab_forward.1} parent=131 // pred_check_branch
          %1045 = sbr.rel (%p1043) target = $region176
        $region175: #{wtab_forward.1} parent=131 // pred_region
          %1046 = dma.done [#allocation17], 128
        $region176: #{wtab_forward.1} parent=131 // pred_fallthru
          _
        // Predicated region
        $region177: #{wtab_forward.1} parent=131 // pred_check
          %p1047 = pneg %p367
        $region178: #{wtab_forward.1} parent=131 // pred_check_branch
          %1049 = sbr.rel (%p1047) target = $region180
        $region179: #{wtab_forward.1} parent=131 // pred_region
          %1050 = dma.done [#allocation20], 128
        $region180: #{wtab_forward.1} parent=131 // pred_fallthru
          _
        // Predicated region
        $region181: #{wtab_forward.1} parent=131 // pred_check
          %p1051 = pneg %p388
        $region182: #{wtab_forward.1} parent=131 // pred_check_branch
          %1053 = sbr.rel (%p1051) target = $region184
        $region183: #{wtab_forward.1} parent=131 // pred_region
          %1054 = dma.done [#allocation20], 128
        $region184: #{wtab_forward.1} parent=131 // pred_fallthru
          _
        // Predicated region
        $region185: #{wtab_forward.1} parent=131 // pred_check
          %p1055 = pneg %p409
        $region186: #{wtab_forward.1} parent=131 // pred_check_branch
          %1057 = sbr.rel (%p1055) target = $region188
        $region187: #{wtab_forward.1} parent=131 // pred_region
          %1058 = dma.done [#allocation23], 128
        $region188: #{wtab_forward.1} parent=131 // pred_fallthru
          _
        // Predicated region
        $region189: #{wtab_forward.1} parent=131 // pred_check
          %p1059 = pneg %p430
        $region190: #{wtab_forward.1} parent=131 // pred_check_branch
          %1061 = sbr.rel (%p1059) target = $region192
        $region191: #{wtab_forward.1} parent=131 // pred_region
          %1062 = dma.done [#allocation23], 128
        $region192: #{wtab_forward.1} parent=131 // pred_fallthru
          _
        // Predicated region
        $region193: #{wtab_forward.1} parent=131 // pred_check
          %p1063 = pneg %p451
        $region194: #{wtab_forward.1} parent=131 // pred_check_branch
          %1065 = sbr.rel (%p1063) target = $region196
        $region195: #{wtab_forward.1} parent=131 // pred_region
          %1066 = dma.done [#allocation26], 128
        $region196: #{wtab_forward.1} parent=131 // pred_fallthru
          _
        // Predicated region
        $region197: #{wtab_forward.1} parent=131 // pred_check
          %p1067 = pneg %p472
        $region198: #{wtab_forward.1} parent=131 // pred_check_branch
          %1069 = sbr.rel (%p1067) target = $region200
        $region199: #{wtab_forward.1} parent=131 // pred_region
          %1070 = dma.done [#allocation26], 128
        $region200: #{wtab_forward.1} parent=131 // pred_fallthru
          _
        // Predicated region
        $region201: #{wtab_forward.1} parent=131 // pred_check
          %p1071 = pneg %p493
        $region202: #{wtab_forward.1} parent=131 // pred_check_branch
          %1073 = sbr.rel (%p1071) target = $region204
        $region203: #{wtab_forward.1} parent=131 // pred_region
          %1074 = dma.done [#allocation29], 2048
        $region204: #{wtab_forward.1} parent=131 // pred_fallthru
          _
        // Predicated region
        $region205: #{wtab_forward.1} parent=131 // pred_check
          %p1075 = pneg %p514
        $region206: #{wtab_forward.1} parent=131 // pred_check_branch
          %1077 = sbr.rel (%p1075) target = $region208
        $region207: #{wtab_forward.1} parent=131 // pred_region
          %1078 = dma.done [#allocation29], 2048
        $region208: #{wtab_forward.1} parent=131 // pred_fallthru
          _
        // Predicated region
        $region209: #{wtab_forward.1} parent=131 // pred_check
          %p1079 = pneg %p535
        $region210: #{wtab_forward.1} parent=131 // pred_check_branch
          %1081 = sbr.rel (%p1079) target = $region212
        $region211: #{wtab_forward.1} parent=131 // pred_region
          %1082 = dma.done [#allocation32], 2048
        $region212: #{wtab_forward.1} parent=131 // pred_fallthru
          _
        // Predicated region
        $region213: #{wtab_forward.1} parent=131 // pred_check
          %p1083 = pneg %p556
        $region214: #{wtab_forward.1} parent=131 // pred_check_branch
          %1085 = sbr.rel (%p1083) target = $region216
        $region215: #{wtab_forward.1} parent=131 // pred_region
          %1086 = dma.done [#allocation32], 128
        $region216: #{wtab_forward.1} parent=131 // pred_fallthru
          _
        // Predicated region
        $region217: #{wtab_forward.1} parent=131 // pred_check
          %p1087 = pneg %p577
        $region218: #{wtab_forward.1} parent=131 // pred_check_branch
          %1089 = sbr.rel (%p1087) target = $region220
        $region219: #{wtab_forward.1} parent=131 // pred_region
          %1090 = dma.done [#allocation35], 128
        $region220: #{wtab_forward.1} parent=131 // pred_fallthru
          _
        // Predicated region
        $region221: #{wtab_forward.1} parent=131 // pred_check
          %p1091 = pneg %p598
        $region222: #{wtab_forward.1} parent=131 // pred_check_branch
          %1093 = sbr.rel (%p1091) target = $region224
        $region223: #{wtab_forward.1} parent=131 // pred_region
          %1094 = dma.done [#allocation35], 256
        $region224: #{wtab_forward.1} parent=131 // pred_fallthru
          _
        // Predicated region
        $region225: #{wtab_forward.1} parent=131 // pred_check
          %p1095 = pneg %p619
        $region226: #{wtab_forward.1} parent=131 // pred_check_branch
          %1097 = sbr.rel (%p1095) target = $region228
        $region227: #{wtab_forward.1} parent=131 // pred_region
          %1098 = dma.done [#allocation38], 128
        $region228: #{wtab_forward.1} parent=131 // pred_fallthru
          _
        // Predicated region
        $region229: #{wtab_forward.1} parent=131 // pred_check
          %p1099 = pneg %p640
        $region230: #{wtab_forward.1} parent=131 // pred_check_branch
          %1101 = sbr.rel (%p1099) target = $region232
        $region231: #{wtab_forward.1} parent=131 // pred_region
          %1102 = dma.done [#allocation38], 256
        $region232: #{wtab_forward.1} parent=131 // pred_fallthru
          _
        %p1103 = scmp.lt.s32.totalorder %s52, 1
        %s1104 = scalar_select %p1103, %s52, 1
        %s1105 = smul.addr %s1104, 2
        %s1106 = smul.addr %s1105, 8
        %s1107 = scalar_lea.vmem %s0, %s1106
        %p1108 = pneg %p73
        %p1109 = pneg %p70
        %p1110 = pneg %p94
        %p1111 = pneg %p91
        %p1112 = pneg %p115
        %p1113 = pneg %p112
        %p1114 = pneg %p136
        %p1115 = pneg %p133
        %p1116 = pneg %p157
        %p1117 = pneg %p154
        %p1118 = pneg %p178
        %p1119 = pneg %p175
        %p1120 = pneg %p199
        %p1121 = pneg %p196
        %p1122 = pneg %p220
        %p1123 = pneg %p217
        %p1124 = pneg %p241
        %p1125 = pneg %p238
        %p1126 = pneg %p262
        %p1127 = pneg %p259
        %p1128 = pneg %p283
        %p1129 = pneg %p280
        %p1130 = pneg %p304
        %p1131 = pneg %p301
        %p1132 = pneg %p325
        %p1133 = pneg %p322
        %p1134 = pneg %p346
        %p1135 = pneg %p343
        %p1136 = pneg %p367
        %p1137 = pneg %p364
        %p1138 = pneg %p388
        %p1139 = pneg %p385
        %p1140 = pneg %p409
        %p1141 = pneg %p406
        %p1142 = pneg %p430
        %p1143 = pneg %p427
        %p1144 = pneg %p451
        %p1145 = pneg %p448
        %p1146 = pneg %p472
        %p1147 = pneg %p469
        %p1148 = pneg %p493
        %p1149 = pneg %p490
        %p1150 = pneg %p514
        %p1151 = pneg %p511
        %p1152 = pneg %p535
        %p1153 = pneg %p532
        %p1154 = pneg %p556
        %p1155 = pneg %p553
        %p1156 = pneg %p577
        %p1157 = pneg %p574
        %p1158 = pneg %p598
        %p1159 = pneg %p595
        %p1160 = pneg %p619
        %p1161 = pneg %p616
        %p1162 = pneg %p640
        %p1163 = pneg %p637
        %p1164 = pneg %p666
        %p1165 = pneg %p663
        %p1166 = scmp.lt.s32.totalorder %s52, 1
        %s1167 = scalar_select %p1166, %s52, 1
        %s1168 = smul.addr %s1167, 2
        %s1169 = smul.addr %s1168, 8
        %s1170 = scalar_lea.vmem %s28, %s1169
        %p1171 = scmp.lt.s32.totalorder %s52, 1
        %s1172 = scalar_select %p1171, %s52, 1
        %s1173 = smul.addr %s1172, 2
        %s1174 = smul.addr %s1173, 8
        %s1175 = scalar_lea.vmem %s0, %s1174
        %p1176 = scmp.lt.s32.totalorder %s52, 1
        %s1177 = scalar_select %p1176, %s52, 1
        %s1178 = smul.addr %s1177, 2
        %s1179 = smul.addr %s1178, 8
        %s1180 = scalar_lea.vmem %s28, %s1179
        %v1181 = vld [vmem:[%s1175] sm:$0xff]
        %v1182 = vld [vmem:[%s1175 + $0x8] sm:$0xff]
        %v1183 = vld [vmem:[%s1] sm:$0xff]
        %v1184 = vld [vmem:[%s1 + $0x8] sm:$0xff]
        %v1185 = vld [vmem:[%s1 + $0x10] sm:$0xff]
        %v1186 = vld [vmem:[%s1 + $0x18] sm:$0xff]
        %v1187 = vld [vmem:[%s1 + $0x20] sm:$0xff]
        %v1188 = vld [vmem:[%s1 + $0x28] sm:$0xff]
        %v1189 = vld [vmem:[%s1 + $0x30] sm:$0xff]
        %v1190 = vld [vmem:[%s1 + $0x38] sm:$0xff]
        %v1191 = vld [vmem:[%s1 + $0x40] sm:$0xff]
        %v1192 = vld [vmem:[%s1 + $0x48] sm:$0xff]
        %v1193 = vld [vmem:[%s1 + $0x50] sm:$0xff]
        %v1194 = vld [vmem:[%s1 + $0x58] sm:$0xff]
        %v1195 = vld [vmem:[%s1 + $0x60] sm:$0xff]
        %v1196 = vld [vmem:[%s1 + $0x68] sm:$0xff]
        %v1197 = vld [vmem:[%s1 + $0x70] sm:$0xff]
        %v1198 = vld [vmem:[%s1 + $0x78] sm:$0xff]
        %v1199 = vld [vmem:[%s1 + $0x80] sm:$0xff]
        %v1200 = vld [vmem:[%s1 + $0x88] sm:$0xff]
        %v1201 = vld [vmem:[%s1 + $0x90] sm:$0xff]
        %v1202 = vld [vmem:[%s1 + $0x98] sm:$0xff]
        %v1203 = vld [vmem:[%s1 + $0xa0] sm:$0xff]
        %v1204 = vld [vmem:[%s1 + $0xa8] sm:$0xff]
        %v1205 = vld [vmem:[%s1 + $0xb0] sm:$0xff]
        %v1206 = vld [vmem:[%s1 + $0xb8] sm:$0xff]
        %v1207 = vld [vmem:[%s1 + $0xc0] sm:$0xff]
        %v1208 = vld [vmem:[%s1 + $0xc8] sm:$0xff]
        %v1209 = vld [vmem:[%s1 + $0xd0] sm:$0xff]
        %v1210 = vld [vmem:[%s1 + $0xd8] sm:$0xff]
        %v1211 = vld [vmem:[%s1 + $0xe0] sm:$0xff]
        %v1212 = vld [vmem:[%s1 + $0xe8] sm:$0xff]
        %v1213 = vld [vmem:[%s1 + $0xf0] sm:$0xff]
        %v1214 = vld [vmem:[%s1 + $0xf8] sm:$0xff]
        %1215 = vmatprep.subr.mxu0 0.0
        %1216 = vmatpush1.msra.mxu0 %v1198
        %1217 = vmatprep.subr.mxu0 0.0
        %1218 = vmatpush1.msra.mxu0 %v1197
        %1219 = vmatprep.subr.mxu0 0.0
        %1220 = vmatpush1.msra.mxu0 %v1196
        %1221 = vmatprep.subr.mxu0 0.0
        %1222 = vmatpush1.msra.mxu0 %v1195
        %1223 = vmatprep.subr.mxu0 0.0
        %1224 = vmatpush1.msra.mxu0 %v1194
        %1225 = vmatprep.subr.mxu0 0.0
        %1226 = vmatpush1.msra.mxu0 %v1193
        %1227 = vmatprep.subr.mxu0 0.0
        %1228 = vmatpush1.msra.mxu0 %v1192
        %1229 = vmatprep.subr.mxu0 0.0
        %1230 = vmatpush1.msra.mxu0 %v1191
        %1231 = vmatprep.subr.mxu0 0.0
        %1232 = vmatpush1.msra.mxu0 %v1190
        %1233 = vmatprep.subr.mxu0 0.0
        %1234 = vmatpush1.msra.mxu0 %v1189
        %1235 = vmatprep.subr.mxu0 0.0
        %1236 = vmatpush1.msra.mxu0 %v1188
        %1237 = vmatprep.subr.mxu0 0.0
        %1238 = vmatpush1.msra.mxu0 %v1187
        %1239 = vmatprep.subr.mxu0 0.0
        %1240 = vmatpush1.msra.mxu0 %v1186
        %1241 = vmatprep.subr.mxu0 0.0
        %1242 = vmatpush1.msra.mxu0 %v1185
        %1243 = vmatprep.subr.mxu0 0.0
        %1244 = vmatpush1.msra.mxu0 %v1184
        %1245 = vmatprep.subr.mxu0 0.0
        %1246 = vmatpush1.msra.mxu0 %v1183
        %1247 = vmatprep.subr.mxu0 0.0
        %1248 = vmatpush2.msra.mxu0 %v1214
        %1249 = vmatprep.subr.mxu0 0.0
        %1250 = vmatpush2.msra.mxu0 %v1213
        %1251 = vmatprep.subr.mxu0 0.0
        %1252 = vmatpush2.msra.mxu0 %v1212
        %1253 = vmatprep.subr.mxu0 0.0
        %1254 = vmatpush2.msra.mxu0 %v1211
        %1255 = vmatprep.subr.mxu0 0.0
        %1256 = vmatpush2.msra.mxu0 %v1210
        %1257 = vmatprep.subr.mxu0 0.0
        %1258 = vmatpush2.msra.mxu0 %v1209
        %1259 = vmatprep.subr.mxu0 0.0
        %1260 = vmatpush2.msra.mxu0 %v1208
        %1261 = vmatprep.subr.mxu0 0.0
        %1262 = vmatpush2.msra.mxu0 %v1207
        %1263 = vmatprep.subr.mxu0 0.0
        %1264 = vmatpush2.msra.mxu0 %v1206
        %1265 = vmatprep.subr.mxu0 0.0
        %1266 = vmatpush2.msra.mxu0 %v1205
        %1267 = vmatprep.subr.mxu0 0.0
        %1268 = vmatpush2.msra.mxu0 %v1204
        %1269 = vmatprep.subr.mxu0 0.0
        %1270 = vmatpush2.msra.mxu0 %v1203
        %1271 = vmatprep.subr.mxu0 0.0
        %1272 = vmatpush2.msra.mxu0 %v1202
        %1273 = vmatprep.subr.mxu0 0.0
        %1274 = vmatpush2.msra.mxu0 %v1201
        %1275 = vmatprep.subr.mxu0 0.0
        %1276 = vmatpush2.msra.mxu0 %v1200
        %1277 = vmatprep.subr.mxu0 0.0
        %1278 = vmatpush2.msra.mxu0 %v1199
        %1279 = vmatprep.mubr.f32.mxu0 %v1182
        %1280 = vmatmul.mubr.f32.gmra.mxu0 %v1181
        %v1281 = vpop.f32.mrf.mxu0
        %v1282 = vadd.f32 0.0, %v1281
        %v1283 = vpop.f32.mrf.mxu0
        %1284 = vdwg.mxu0
        %v1285 = vld [vmem:[#allocation2] sm:$0xff]
        %v1286 = vld [vmem:[#allocation2 + $0x8] sm:$0xff]
        %v1287 = vld [vmem:[#allocation2 + $0x10] sm:$0xff]
        %v1288 = vld [vmem:[#allocation2 + $0x18] sm:$0xff]
        %v1289 = vld [vmem:[#allocation2 + $0x20] sm:$0xff]
        %v1290 = vld [vmem:[#allocation2 + $0x28] sm:$0xff]
        %v1291 = vld [vmem:[#allocation2 + $0x30] sm:$0xff]
        %v1292 = vld [vmem:[#allocation2 + $0x38] sm:$0xff]
        %v1293 = vld [vmem:[#allocation2 + $0x40] sm:$0xff]
        %v1294 = vld [vmem:[#allocation2 + $0x48] sm:$0xff]
        %v1295 = vld [vmem:[#allocation2 + $0x50] sm:$0xff]
        %v1296 = vld [vmem:[#allocation2 + $0x58] sm:$0xff]
        %v1297 = vld [vmem:[#allocation2 + $0x60] sm:$0xff]
        %v1298 = vld [vmem:[#allocation2 + $0x68] sm:$0xff]
        %v1299 = vld [vmem:[#allocation2 + $0x70] sm:$0xff]
        %v1300 = vld [vmem:[#allocation2 + $0x78] sm:$0xff]
        %v1301 = vld [vmem:[#allocation2 + $0x80] sm:$0xff]
        %v1302 = vld [vmem:[#allocation2 + $0x88] sm:$0xff]
        %v1303 = vld [vmem:[#allocation2 + $0x90] sm:$0xff]
        %v1304 = vld [vmem:[#allocation2 + $0x98] sm:$0xff]
        %v1305 = vld [vmem:[#allocation2 + $0xa0] sm:$0xff]
        %v1306 = vld [vmem:[#allocation2 + $0xa8] sm:$0xff]
        %v1307 = vld [vmem:[#allocation2 + $0xb0] sm:$0xff]
        %v1308 = vld [vmem:[#allocation2 + $0xb8] sm:$0xff]
        %v1309 = vld [vmem:[#allocation2 + $0xc0] sm:$0xff]
        %v1310 = vld [vmem:[#allocation2 + $0xc8] sm:$0xff]
        %v1311 = vld [vmem:[#allocation2 + $0xd0] sm:$0xff]
        %v1312 = vld [vmem:[#allocation2 + $0xd8] sm:$0xff]
        %v1313 = vld [vmem:[#allocation2 + $0xe0] sm:$0xff]
        %v1314 = vld [vmem:[#allocation2 + $0xe8] sm:$0xff]
        %v1315 = vld [vmem:[#allocation2 + $0xf0] sm:$0xff]
        %v1316 = vld [vmem:[#allocation2 + $0xf8] sm:$0xff]
        %1317 = vmatprep.subr.mxu0 0.0
        %1318 = vmatpush1.msra.mxu0 %v1300
        %1319 = vmatprep.subr.mxu0 0.0
        %1320 = vmatpush1.msra.mxu0 %v1299
        %1321 = vmatprep.subr.mxu0 0.0
        %1322 = vmatpush1.msra.mxu0 %v1298
        %1323 = vmatprep.subr.mxu0 0.0
        %1324 = vmatpush1.msra.mxu0 %v1297
        %1325 = vmatprep.subr.mxu0 0.0
        %1326 = vmatpush1.msra.mxu0 %v1296
        %1327 = vmatprep.subr.mxu0 0.0
        %1328 = vmatpush1.msra.mxu0 %v1295
        %1329 = vmatprep.subr.mxu0 0.0
        %1330 = vmatpush1.msra.mxu0 %v1294
        %1331 = vmatprep.subr.mxu0 0.0
        %1332 = vmatpush1.msra.mxu0 %v1293
        %1333 = vmatprep.subr.mxu0 0.0
        %1334 = vmatpush1.msra.mxu0 %v1292
        %1335 = vmatprep.subr.mxu0 0.0
        %1336 = vmatpush1.msra.mxu0 %v1291
        %1337 = vmatprep.subr.mxu0 0.0
        %1338 = vmatpush1.msra.mxu0 %v1290
        %1339 = vmatprep.subr.mxu0 0.0
        %1340 = vmatpush1.msra.mxu0 %v1289
        %1341 = vmatprep.subr.mxu0 0.0
        %1342 = vmatpush1.msra.mxu0 %v1288
        %1343 = vmatprep.subr.mxu0 0.0
        %1344 = vmatpush1.msra.mxu0 %v1287
        %1345 = vmatprep.subr.mxu0 0.0
        %1346 = vmatpush1.msra.mxu0 %v1286
        %1347 = vmatprep.subr.mxu0 0.0
        %1348 = vmatpush1.msra.mxu0 %v1285
        %1349 = vmatprep.subr.mxu0 0.0
        %1350 = vmatpush2.msra.mxu0 %v1316
        %1351 = vmatprep.subr.mxu0 0.0
        %1352 = vmatpush2.msra.mxu0 %v1315
        %1353 = vmatprep.subr.mxu0 0.0
        %1354 = vmatpush2.msra.mxu0 %v1314
        %1355 = vmatprep.subr.mxu0 0.0
        %1356 = vmatpush2.msra.mxu0 %v1313
        %1357 = vmatprep.subr.mxu0 0.0
        %1358 = vmatpush2.msra.mxu0 %v1312
        %1359 = vmatprep.subr.mxu0 0.0
        %1360 = vmatpush2.msra.mxu0 %v1311
        %1361 = vmatprep.subr.mxu0 0.0
        %1362 = vmatpush2.msra.mxu0 %v1310
        %1363 = vmatprep.subr.mxu0 0.0
        %1364 = vmatpush2.msra.mxu0 %v1309
        %1365 = vmatprep.subr.mxu0 0.0
        %1366 = vmatpush2.msra.mxu0 %v1308
        %1367 = vmatprep.subr.mxu0 0.0
        %1368 = vmatpush2.msra.mxu0 %v1307
        %1369 = vmatprep.subr.mxu0 0.0
        %1370 = vmatpush2.msra.mxu0 %v1306
        %1371 = vmatprep.subr.mxu0 0.0
        %1372 = vmatpush2.msra.mxu0 %v1305
        %1373 = vmatprep.subr.mxu0 0.0
        %1374 = vmatpush2.msra.mxu0 %v1304
        %1375 = vmatprep.subr.mxu0 0.0
        %1376 = vmatpush2.msra.mxu0 %v1303
        %1377 = vmatprep.subr.mxu0 0.0
        %1378 = vmatpush2.msra.mxu0 %v1302
        %1379 = vmatprep.subr.mxu0 0.0
        %1380 = vmatpush2.msra.mxu0 %v1301
        %1381 = vmatprep.mubr.f32.mxu0 %v1182
        %1382 = vmatmul.mubr.f32.gmra.mxu0 %v1181
        %v1383 = vpop.f32.mrf.mxu0
        %v1384 = vadd.f32 0.0, %v1383
        %v1385 = vpop.f32.mrf.mxu0
        %1386 = vdwg.mxu0
        %v1387 = vld [vmem:[#allocation4] sm:$0xff]
        %v1388 = vld [vmem:[#allocation4 + $0x8] sm:$0xff]
        %v1389 = vld [vmem:[#allocation4 + $0x10] sm:$0xff]
        %v1390 = vld [vmem:[#allocation4 + $0x18] sm:$0xff]
        %v1391 = vld [vmem:[#allocation4 + $0x20] sm:$0xff]
        %v1392 = vld [vmem:[#allocation4 + $0x28] sm:$0xff]
        %v1393 = vld [vmem:[#allocation4 + $0x30] sm:$0xff]
        %v1394 = vld [vmem:[#allocation4 + $0x38] sm:$0xff]
        %v1395 = vld [vmem:[#allocation4 + $0x40] sm:$0xff]
        %v1396 = vld [vmem:[#allocation4 + $0x48] sm:$0xff]
        %v1397 = vld [vmem:[#allocation4 + $0x50] sm:$0xff]
        %v1398 = vld [vmem:[#allocation4 + $0x58] sm:$0xff]
        %v1399 = vld [vmem:[#allocation4 + $0x60] sm:$0xff]
        %v1400 = vld [vmem:[#allocation4 + $0x68] sm:$0xff]
        %v1401 = vld [vmem:[#allocation4 + $0x70] sm:$0xff]
        %v1402 = vld [vmem:[#allocation4 + $0x78] sm:$0xff]
        %v1403 = vld [vmem:[#allocation4 + $0x80] sm:$0xff]
        %v1404 = vld [vmem:[#allocation4 + $0x88] sm:$0xff]
        %v1405 = vld [vmem:[#allocation4 + $0x90] sm:$0xff]
        %v1406 = vld [vmem:[#allocation4 + $0x98] sm:$0xff]
        %v1407 = vld [vmem:[#allocation4 + $0xa0] sm:$0xff]
        %v1408 = vld [vmem:[#allocation4 + $0xa8] sm:$0xff]
        %v1409 = vld [vmem:[#allocation4 + $0xb0] sm:$0xff]
        %v1410 = vld [vmem:[#allocation4 + $0xb8] sm:$0xff]
        %v1411 = vld [vmem:[#allocation4 + $0xc0] sm:$0xff]
        %v1412 = vld [vmem:[#allocation4 + $0xc8] sm:$0xff]
        %v1413 = vld [vmem:[#allocation4 + $0xd0] sm:$0xff]
        %v1414 = vld [vmem:[#allocation4 + $0xd8] sm:$0xff]
        %v1415 = vld [vmem:[#allocation4 + $0xe0] sm:$0xff]
        %v1416 = vld [vmem:[#allocation4 + $0xe8] sm:$0xff]
        %v1417 = vld [vmem:[#allocation4 + $0xf0] sm:$0xff]
        %v1418 = vld [vmem:[#allocation4 + $0xf8] sm:$0xff]
        %1419 = vmatprep.subr.mxu0 0.0
        %1420 = vmatpush1.msra.mxu0 %v1402
        %1421 = vmatprep.subr.mxu0 0.0
        %1422 = vmatpush1.msra.mxu0 %v1401
        %1423 = vmatprep.subr.mxu0 0.0
        %1424 = vmatpush1.msra.mxu0 %v1400
        %1425 = vmatprep.subr.mxu0 0.0
        %1426 = vmatpush1.msra.mxu0 %v1399
        %1427 = vmatprep.subr.mxu0 0.0
        %1428 = vmatpush1.msra.mxu0 %v1398
        %1429 = vmatprep.subr.mxu0 0.0
        %1430 = vmatpush1.msra.mxu0 %v1397
        %1431 = vmatprep.subr.mxu0 0.0
        %1432 = vmatpush1.msra.mxu0 %v1396
        %1433 = vmatprep.subr.mxu0 0.0
        %1434 = vmatpush1.msra.mxu0 %v1395
        %1435 = vmatprep.subr.mxu0 0.0
        %1436 = vmatpush1.msra.mxu0 %v1394
        %1437 = vmatprep.subr.mxu0 0.0
        %1438 = vmatpush1.msra.mxu0 %v1393
        %1439 = vmatprep.subr.mxu0 0.0
        %1440 = vmatpush1.msra.mxu0 %v1392
        %1441 = vmatprep.subr.mxu0 0.0
        %1442 = vmatpush1.msra.mxu0 %v1391
        %1443 = vmatprep.subr.mxu0 0.0
        %1444 = vmatpush1.msra.mxu0 %v1390
        %1445 = vmatprep.subr.mxu0 0.0
        %1446 = vmatpush1.msra.mxu0 %v1389
        %1447 = vmatprep.subr.mxu0 0.0
        %1448 = vmatpush1.msra.mxu0 %v1388
        %1449 = vmatprep.subr.mxu0 0.0
        %1450 = vmatpush1.msra.mxu0 %v1387
        %1451 = vmatprep.subr.mxu0 0.0
        %1452 = vmatpush2.msra.mxu0 %v1418
        %1453 = vmatprep.subr.mxu0 0.0
        %1454 = vmatpush2.msra.mxu0 %v1417
        %1455 = vmatprep.subr.mxu0 0.0
        %1456 = vmatpush2.msra.mxu0 %v1416
        %1457 = vmatprep.subr.mxu0 0.0
        %1458 = vmatpush2.msra.mxu0 %v1415
        %1459 = vmatprep.subr.mxu0 0.0
        %1460 = vmatpush2.msra.mxu0 %v1414
        %1461 = vmatprep.subr.mxu0 0.0
        %1462 = vmatpush2.msra.mxu0 %v1413
        %1463 = vmatprep.subr.mxu0 0.0
        %1464 = vmatpush2.msra.mxu0 %v1412
        %1465 = vmatprep.subr.mxu0 0.0
        %1466 = vmatpush2.msra.mxu0 %v1411
        %1467 = vmatprep.subr.mxu0 0.0
        %1468 = vmatpush2.msra.mxu0 %v1410
        %1469 = vmatprep.subr.mxu0 0.0
        %1470 = vmatpush2.msra.mxu0 %v1409
        %1471 = vmatprep.subr.mxu0 0.0
        %1472 = vmatpush2.msra.mxu0 %v1408
        %1473 = vmatprep.subr.mxu0 0.0
        %1474 = vmatpush2.msra.mxu0 %v1407
        %1475 = vmatprep.subr.mxu0 0.0
        %1476 = vmatpush2.msra.mxu0 %v1406
        %1477 = vmatprep.subr.mxu0 0.0
        %1478 = vmatpush2.msra.mxu0 %v1405
        %1479 = vmatprep.subr.mxu0 0.0
        %1480 = vmatpush2.msra.mxu0 %v1404
        %1481 = vmatprep.subr.mxu0 0.0
        %1482 = vmatpush2.msra.mxu0 %v1403
        %1483 = vmatprep.mubr.f32.mxu0 %v1182
        %1484 = vmatmul.mubr.f32.gmra.mxu0 %v1181
        %v1485 = vpop.f32.mrf.mxu0
        %v1486 = vadd.f32 0.0, %v1485
        %v1487 = vpop.f32.mrf.mxu0
        %1488 = vdwg.mxu0
        %v1489 = vld [vmem:[#allocation6] sm:$0xff]
        %v1490 = vld [vmem:[#allocation6 + $0x8] sm:$0xff]
        %v1491 = vld [vmem:[#allocation6 + $0x10] sm:$0xff]
        %v1492 = vld [vmem:[#allocation6 + $0x18] sm:$0xff]
        %v1493 = vld [vmem:[#allocation6 + $0x20] sm:$0xff]
        %v1494 = vld [vmem:[#allocation6 + $0x28] sm:$0xff]
        %v1495 = vld [vmem:[#allocation6 + $0x30] sm:$0xff]
        %v1496 = vld [vmem:[#allocation6 + $0x38] sm:$0xff]
        %v1497 = vld [vmem:[#allocation6 + $0x40] sm:$0xff]
        %v1498 = vld [vmem:[#allocation6 + $0x48] sm:$0xff]
        %v1499 = vld [vmem:[#allocation6 + $0x50] sm:$0xff]
        %v1500 = vld [vmem:[#allocation6 + $0x58] sm:$0xff]
        %v1501 = vld [vmem:[#allocation6 + $0x60] sm:$0xff]
        %v1502 = vld [vmem:[#allocation6 + $0x68] sm:$0xff]
        %v1503 = vld [vmem:[#allocation6 + $0x70] sm:$0xff]
        %v1504 = vld [vmem:[#allocation6 + $0x78] sm:$0xff]
        %v1505 = vld [vmem:[#allocation6 + $0x80] sm:$0xff]
        %v1506 = vld [vmem:[#allocation6 + $0x88] sm:$0xff]
        %v1507 = vld [vmem:[#allocation6 + $0x90] sm:$0xff]
        %v1508 = vld [vmem:[#allocation6 + $0x98] sm:$0xff]
        %v1509 = vld [vmem:[#allocation6 + $0xa0] sm:$0xff]
        %v1510 = vld [vmem:[#allocation6 + $0xa8] sm:$0xff]
        %v1511 = vld [vmem:[#allocation6 + $0xb0] sm:$0xff]
        %v1512 = vld [vmem:[#allocation6 + $0xb8] sm:$0xff]
        %v1513 = vld [vmem:[#allocation6 + $0xc0] sm:$0xff]
        %v1514 = vld [vmem:[#allocation6 + $0xc8] sm:$0xff]
        %v1515 = vld [vmem:[#allocation6 + $0xd0] sm:$0xff]
        %v1516 = vld [vmem:[#allocation6 + $0xd8] sm:$0xff]
        %v1517 = vld [vmem:[#allocation6 + $0xe0] sm:$0xff]
        %v1518 = vld [vmem:[#allocation6 + $0xe8] sm:$0xff]
        %v1519 = vld [vmem:[#allocation6 + $0xf0] sm:$0xff]
        %v1520 = vld [vmem:[#allocation6 + $0xf8] sm:$0xff]
        %1521 = vmatprep.subr.mxu0 0.0
        %1522 = vmatpush1.msra.mxu0 %v1504
        %1523 = vmatprep.subr.mxu0 0.0
        %1524 = vmatpush1.msra.mxu0 %v1503
        %1525 = vmatprep.subr.mxu0 0.0
        %1526 = vmatpush1.msra.mxu0 %v1502
        %1527 = vmatprep.subr.mxu0 0.0
        %1528 = vmatpush1.msra.mxu0 %v1501
        %1529 = vmatprep.subr.mxu0 0.0
        %1530 = vmatpush1.msra.mxu0 %v1500
        %1531 = vmatprep.subr.mxu0 0.0
        %1532 = vmatpush1.msra.mxu0 %v1499
        %1533 = vmatprep.subr.mxu0 0.0
        %1534 = vmatpush1.msra.mxu0 %v1498
        %1535 = vmatprep.subr.mxu0 0.0
        %1536 = vmatpush1.msra.mxu0 %v1497
        %1537 = vmatprep.subr.mxu0 0.0
        %1538 = vmatpush1.msra.mxu0 %v1496
        %1539 = vmatprep.subr.mxu0 0.0
        %1540 = vmatpush1.msra.mxu0 %v1495
        %1541 = vmatprep.subr.mxu0 0.0
        %1542 = vmatpush1.msra.mxu0 %v1494
        %1543 = vmatprep.subr.mxu0 0.0
        %1544 = vmatpush1.msra.mxu0 %v1493
        %1545 = vmatprep.subr.mxu0 0.0
        %1546 = vmatpush1.msra.mxu0 %v1492
        %1547 = vmatprep.subr.mxu0 0.0
        %1548 = vmatpush1.msra.mxu0 %v1491
        %1549 = vmatprep.subr.mxu0 0.0
        %1550 = vmatpush1.msra.mxu0 %v1490
        %1551 = vmatprep.subr.mxu0 0.0
        %1552 = vmatpush1.msra.mxu0 %v1489
        %1553 = vmatprep.subr.mxu0 0.0
        %1554 = vmatpush2.msra.mxu0 %v1520
        %1555 = vmatprep.subr.mxu0 0.0
        %1556 = vmatpush2.msra.mxu0 %v1519
        %1557 = vmatprep.subr.mxu0 0.0
        %1558 = vmatpush2.msra.mxu0 %v1518
        %1559 = vmatprep.subr.mxu0 0.0
        %1560 = vmatpush2.msra.mxu0 %v1517
        %1561 = vmatprep.subr.mxu0 0.0
        %1562 = vmatpush2.msra.mxu0 %v1516
        %1563 = vmatprep.subr.mxu0 0.0
        %1564 = vmatpush2.msra.mxu0 %v1515
        %1565 = vmatprep.subr.mxu0 0.0
        %1566 = vmatpush2.msra.mxu0 %v1514
        %1567 = vmatprep.subr.mxu0 0.0
        %1568 = vmatpush2.msra.mxu0 %v1513
        %1569 = vmatprep.subr.mxu0 0.0
        %1570 = vmatpush2.msra.mxu0 %v1512
        %1571 = vmatprep.subr.mxu0 0.0
        %1572 = vmatpush2.msra.mxu0 %v1511
        %1573 = vmatprep.subr.mxu0 0.0
        %1574 = vmatpush2.msra.mxu0 %v1510
        %1575 = vmatprep.subr.mxu0 0.0
        %1576 = vmatpush2.msra.mxu0 %v1509
        %1577 = vmatprep.subr.mxu0 0.0
        %1578 = vmatpush2.msra.mxu0 %v1508
        %1579 = vmatprep.subr.mxu0 0.0
        %1580 = vmatpush2.msra.mxu0 %v1507
        %1581 = vmatprep.subr.mxu0 0.0
        %1582 = vmatpush2.msra.mxu0 %v1506
        %1583 = vmatprep.subr.mxu0 0.0
        %1584 = vmatpush2.msra.mxu0 %v1505
        %1585 = vmatprep.mubr.f32.mxu0 %v1182
        %1586 = vmatmul.mubr.f32.gmra.mxu0 %v1181
        %v1587 = vpop.f32.mrf.mxu0
        %v1588 = vadd.f32 0.0, %v1587
        %v1589 = vpop.f32.mrf.mxu0
        %1590 = vdwg.mxu0
        %v1591 = vld [vmem:[#allocation10] sm:$0xff]
        %v1592 = vld [vmem:[#allocation9] sm:$0xff]
        %v1593 = vld [vmem:[#allocation7] sm:$0xff]
        %v1594 = vld [vmem:[#allocation7 + $0x8] sm:$0xff]
        %v1595 = vld [vmem:[#allocation7 + $0x10] sm:$0xff]
        %v1596 = vld [vmem:[#allocation7 + $0x18] sm:$0xff]
        %v1597 = vld [vmem:[#allocation7 + $0x20] sm:$0xff]
        %v1598 = vld [vmem:[#allocation7 + $0x28] sm:$0xff]
        %v1599 = vld [vmem:[#allocation7 + $0x30] sm:$0xff]
        %v1600 = vld [vmem:[#allocation7 + $0x38] sm:$0xff]
        %vm1601 = vcmask 523264
        %v1603 = vsel %vm1601, %v1384, 0
        %1605 = vmatprep.subr.mxu0 0.0
        %1606 = vmatpush1.msra.mxu0 0.0
        %1607 = vmatprep.subr.mxu0 0.0
        %1608 = vmatpush1.msra.mxu0 0.0
        %1609 = vmatprep.subr.mxu0 0.0
        %1610 = vmatpush1.msra.mxu0 0.0
        %1611 = vmatprep.subr.mxu0 0.0
        %1612 = vmatpush1.msra.mxu0 0.0
        %1613 = vmatprep.subr.mxu0 0.0
        %1614 = vmatpush1.msra.mxu0 0.0
        %1615 = vmatprep.subr.mxu0 0.0
        %1616 = vmatpush1.msra.mxu0 0.0
        %1617 = vmatprep.subr.mxu0 0.0
        %1618 = vmatpush1.msra.mxu0 0.0
        %1619 = vmatprep.subr.mxu0 0.0
        %1620 = vmatpush1.msra.mxu0 0.0
        %1621 = vmatprep.subr.mxu0 0.0
        %1622 = vmatpush1.msra.mxu0 %v1600
        %1623 = vmatprep.subr.mxu0 0.0
        %1624 = vmatpush1.msra.mxu0 %v1599
        %1625 = vmatprep.subr.mxu0 0.0
        %1626 = vmatpush1.msra.mxu0 %v1598
        %1627 = vmatprep.subr.mxu0 0.0
        %1628 = vmatpush1.msra.mxu0 %v1597
        %1629 = vmatprep.subr.mxu0 0.0
        %1630 = vmatpush1.msra.mxu0 %v1596
        %1631 = vmatprep.subr.mxu0 0.0
        %1632 = vmatpush1.msra.mxu0 %v1595
        %1633 = vmatprep.subr.mxu0 0.0
        %1634 = vmatpush1.msra.mxu0 %v1594
        %1635 = vmatprep.subr.mxu0 0.0
        %1636 = vmatpush1.msra.mxu0 %v1593
        %1637 = vmatprep.subr.mxu0 0.0
        %1638 = vmatpush2.msra.mxu0 0.0
        %1639 = vmatprep.subr.mxu0 0.0
        %1640 = vmatpush2.msra.mxu0 0.0
        %1641 = vmatprep.subr.mxu0 0.0
        %1642 = vmatpush2.msra.mxu0 0.0
        %1643 = vmatprep.subr.mxu0 0.0
        %1644 = vmatpush2.msra.mxu0 0.0
        %1645 = vmatprep.subr.mxu0 0.0
        %1646 = vmatpush2.msra.mxu0 0.0
        %1647 = vmatprep.subr.mxu0 0.0
        %1648 = vmatpush2.msra.mxu0 0.0
        %1649 = vmatprep.subr.mxu0 0.0
        %1650 = vmatpush2.msra.mxu0 0.0
        %1651 = vmatprep.subr.mxu0 0.0
        %1652 = vmatpush2.msra.mxu0 0.0
        %1653 = vmatprep.subr.mxu0 0.0
        %1654 = vmatpush2.msra.mxu0 0.0
        %1655 = vmatprep.subr.mxu0 0.0
        %1656 = vmatpush2.msra.mxu0 0.0
        %1657 = vmatprep.subr.mxu0 0.0
        %1658 = vmatpush2.msra.mxu0 0.0
        %1659 = vmatprep.subr.mxu0 0.0
        %1660 = vmatpush2.msra.mxu0 0.0
        %1661 = vmatprep.subr.mxu0 0.0
        %1662 = vmatpush2.msra.mxu0 0.0
        %1663 = vmatprep.subr.mxu0 0.0
        %1664 = vmatpush2.msra.mxu0 0.0
        %1665 = vmatprep.subr.mxu0 0.0
        %1666 = vmatpush2.msra.mxu0 0.0
        %1667 = vmatprep.subr.mxu0 0.0
        %1668 = vmatpush2.msra.mxu0 0.0
        %1669 = vmatprep.mubr.f32.mxu0 0.0
        %1670 = vmatmul.mubr.f32.gmra.mxu0 %v1603
        %v1671 = vpop.f32.mrf.mxu0
        %v1672 = vadd.f32 0.0, %v1671
        %v1673 = vpop.f32.mrf.mxu0
        %1674 = vdwg.mxu0
        %vm1675 = vcmask 64512
        %v1677 = vsel %vm1675, %v1592, 0
        %1679 = vmatprep.subr.mxu0 0.0
        %1680 = vmatpush1.msra.mxu0 0.0
        %1681 = vmatprep.subr.mxu0 0.0
        %1682 = vmatpush1.msra.mxu0 0.0
        %1683 = vmatprep.subr.mxu0 0.0
        %1684 = vmatpush1.msra.mxu0 0.0
        %1685 = vmatprep.subr.mxu0 0.0
        %1686 = vmatpush1.msra.mxu0 0.0
        %1687 = vmatprep.subr.mxu0 0.0
        %1688 = vmatpush1.msra.mxu0 0.0
        %1689 = vmatprep.subr.mxu0 0.0
        %1690 = vmatpush1.msra.mxu0 0.0
        %1691 = vmatprep.subr.mxu0 0.0
        %1692 = vmatpush1.msra.mxu0 0.0
        %1693 = vmatprep.subr.mxu0 0.0
        %1694 = vmatpush1.msra.mxu0 0.0
        %1695 = vmatprep.subr.mxu0 0.0
        %1696 = vmatpush1.msra.mxu0 0.0
        %1697 = vmatprep.subr.mxu0 0.0
        %1698 = vmatpush1.msra.mxu0 0.0
        %1699 = vmatprep.subr.mxu0 0.0
        %1700 = vmatpush1.msra.mxu0 0.0
        %1701 = vmatprep.subr.mxu0 0.0
        %1702 = vmatpush1.msra.mxu0 0.0
        %1703 = vmatprep.subr.mxu0 0.0
        %1704 = vmatpush1.msra.mxu0 0.0
        %1705 = vmatprep.subr.mxu0 0.0
        %1706 = vmatpush1.msra.mxu0 0.0
        %1707 = vmatprep.subr.mxu0 0.0
        %1708 = vmatpush1.msra.mxu0 0.0
        %1709 = vmatprep.subr.mxu0 0.0
        %1710 = vmatpush1.msra.mxu0 %v1672
        %1711 = vmatprep.subr.mxu0 0.0
        %1712 = vmatpush2.msra.mxu0 0.0
        %1713 = vmatprep.subr.mxu0 0.0
        %1714 = vmatpush2.msra.mxu0 0.0
        %1715 = vmatprep.subr.mxu0 0.0
        %1716 = vmatpush2.msra.mxu0 0.0
        %1717 = vmatprep.subr.mxu0 0.0
        %1718 = vmatpush2.msra.mxu0 0.0
        %1719 = vmatprep.subr.mxu0 0.0
        %1720 = vmatpush2.msra.mxu0 0.0
        %1721 = vmatprep.subr.mxu0 0.0
        %1722 = vmatpush2.msra.mxu0 0.0
        %1723 = vmatprep.subr.mxu0 0.0
        %1724 = vmatpush2.msra.mxu0 0.0
        %1725 = vmatprep.subr.mxu0 0.0
        %1726 = vmatpush2.msra.mxu0 0.0
        %1727 = vmatprep.subr.mxu0 0.0
        %1728 = vmatpush2.msra.mxu0 0.0
        %1729 = vmatprep.subr.mxu0 0.0
        %1730 = vmatpush2.msra.mxu0 0.0
        %1731 = vmatprep.subr.mxu0 0.0
        %1732 = vmatpush2.msra.mxu0 0.0
        %1733 = vmatprep.subr.mxu0 0.0
        %1734 = vmatpush2.msra.mxu0 0.0
        %1735 = vmatprep.subr.mxu0 0.0
        %1736 = vmatpush2.msra.mxu0 0.0
        %1737 = vmatprep.subr.mxu0 0.0
        %1738 = vmatpush2.msra.mxu0 0.0
        %1739 = vmatprep.subr.mxu0 0.0
        %1740 = vmatpush2.msra.mxu0 0.0
        %1741 = vmatprep.subr.mxu0 0.0
        %1742 = vmatpush2.msra.mxu0 0.0
        %1743 = vmatprep.mubr.f32.mxu0 0.0
        %1744 = vmatmul.mubr.f32.gmra.mxu0 %v1677
        %v1745 = vpop.f32.mrf.mxu0
        %v1746 = vadd.f32 0.0, %v1745
        %v1747 = vpop.f32.mrf.mxu0
        %1748 = vdwg.mxu0
        %v1749 = vadd.f32 %v1591, %v1746
        %s1750 = scalar_lea.vmem [#allocation9], 8
        %v1751 = vld [vmem:[%s1750] sm:$0xff]
        %s1752 = scalar_lea.vmem [#allocation7], 64
        %v1753 = vld [vmem:[%s1752] sm:$0xff]
        %v1754 = vld [vmem:[%s1752 + $0x8] sm:$0xff]
        %v1755 = vld [vmem:[%s1752 + $0x10] sm:$0xff]
        %v1756 = vld [vmem:[%s1752 + $0x18] sm:$0xff]
        %v1757 = vld [vmem:[%s1752 + $0x20] sm:$0xff]
        %v1758 = vld [vmem:[%s1752 + $0x28] sm:$0xff]
        %v1759 = vld [vmem:[%s1752 + $0x30] sm:$0xff]
        %v1760 = vld [vmem:[%s1752 + $0x38] sm:$0xff]
        %1761 = vmatprep.subr.mxu0 0.0
        %1762 = vmatpush1.msra.mxu0 0.0
        %1763 = vmatprep.subr.mxu0 0.0
        %1764 = vmatpush1.msra.mxu0 0.0
        %1765 = vmatprep.subr.mxu0 0.0
        %1766 = vmatpush1.msra.mxu0 0.0
        %1767 = vmatprep.subr.mxu0 0.0
        %1768 = vmatpush1.msra.mxu0 0.0
        %1769 = vmatprep.subr.mxu0 0.0
        %1770 = vmatpush1.msra.mxu0 0.0
        %1771 = vmatprep.subr.mxu0 0.0
        %1772 = vmatpush1.msra.mxu0 0.0
        %1773 = vmatprep.subr.mxu0 0.0
        %1774 = vmatpush1.msra.mxu0 0.0
        %1775 = vmatprep.subr.mxu0 0.0
        %1776 = vmatpush1.msra.mxu0 0.0
        %1777 = vmatprep.subr.mxu0 0.0
        %1778 = vmatpush1.msra.mxu0 %v1760
        %1779 = vmatprep.subr.mxu0 0.0
        %1780 = vmatpush1.msra.mxu0 %v1759
        %1781 = vmatprep.subr.mxu0 0.0
        %1782 = vmatpush1.msra.mxu0 %v1758
        %1783 = vmatprep.subr.mxu0 0.0
        %1784 = vmatpush1.msra.mxu0 %v1757
        %1785 = vmatprep.subr.mxu0 0.0
        %1786 = vmatpush1.msra.mxu0 %v1756
        %1787 = vmatprep.subr.mxu0 0.0
        %1788 = vmatpush1.msra.mxu0 %v1755
        %1789 = vmatprep.subr.mxu0 0.0
        %1790 = vmatpush1.msra.mxu0 %v1754
        %1791 = vmatprep.subr.mxu0 0.0
        %1792 = vmatpush1.msra.mxu0 %v1753
        %1793 = vmatprep.subr.mxu0 0.0
        %1794 = vmatpush2.msra.mxu0 0.0
        %1795 = vmatprep.subr.mxu0 0.0
        %1796 = vmatpush2.msra.mxu0 0.0
        %1797 = vmatprep.subr.mxu0 0.0
        %1798 = vmatpush2.msra.mxu0 0.0
        %1799 = vmatprep.subr.mxu0 0.0
        %1800 = vmatpush2.msra.mxu0 0.0
        %1801 = vmatprep.subr.mxu0 0.0
        %1802 = vmatpush2.msra.mxu0 0.0
        %1803 = vmatprep.subr.mxu0 0.0
        %1804 = vmatpush2.msra.mxu0 0.0
        %1805 = vmatprep.subr.mxu0 0.0
        %1806 = vmatpush2.msra.mxu0 0.0
        %1807 = vmatprep.subr.mxu0 0.0
        %1808 = vmatpush2.msra.mxu0 0.0
        %1809 = vmatprep.subr.mxu0 0.0
        %1810 = vmatpush2.msra.mxu0 0.0
        %1811 = vmatprep.subr.mxu0 0.0
        %1812 = vmatpush2.msra.mxu0 0.0
        %1813 = vmatprep.subr.mxu0 0.0
        %1814 = vmatpush2.msra.mxu0 0.0
        %1815 = vmatprep.subr.mxu0 0.0
        %1816 = vmatpush2.msra.mxu0 0.0
        %1817 = vmatprep.subr.mxu0 0.0
        %1818 = vmatpush2.msra.mxu0 0.0
        %1819 = vmatprep.subr.mxu0 0.0
        %1820 = vmatpush2.msra.mxu0 0.0
        %1821 = vmatprep.subr.mxu0 0.0
        %1822 = vmatpush2.msra.mxu0 0.0
        %1823 = vmatprep.subr.mxu0 0.0
        %1824 = vmatpush2.msra.mxu0 0.0
        %1825 = vmatprep.mubr.f32.mxu0 0.0
        %1826 = vmatmul.mubr.f32.gmra.mxu0 %v1603
        %v1827 = vpop.f32.mrf.mxu0
        %v1828 = vadd.f32 0.0, %v1827
        %v1829 = vpop.f32.mrf.mxu0
        %1830 = vdwg.mxu0
        %v1832 = vsel %vm1675, %v1751, 0
        %1834 = vmatprep.subr.mxu0 0.0
        %1835 = vmatpush1.msra.mxu0 0.0
        %1836 = vmatprep.subr.mxu0 0.0
        %1837 = vmatpush1.msra.mxu0 0.0
        %1838 = vmatprep.subr.mxu0 0.0
        %1839 = vmatpush1.msra.mxu0 0.0
        %1840 = vmatprep.subr.mxu0 0.0
        %1841 = vmatpush1.msra.mxu0 0.0
        %1842 = vmatprep.subr.mxu0 0.0
        %1843 = vmatpush1.msra.mxu0 0.0
        %1844 = vmatprep.subr.mxu0 0.0
        %1845 = vmatpush1.msra.mxu0 0.0
        %1846 = vmatprep.subr.mxu0 0.0
        %1847 = vmatpush1.msra.mxu0 0.0
        %1848 = vmatprep.subr.mxu0 0.0
        %1849 = vmatpush1.msra.mxu0 0.0
        %1850 = vmatprep.subr.mxu0 0.0
        %1851 = vmatpush1.msra.mxu0 0.0
        %1852 = vmatprep.subr.mxu0 0.0
        %1853 = vmatpush1.msra.mxu0 0.0
        %1854 = vmatprep.subr.mxu0 0.0
        %1855 = vmatpush1.msra.mxu0 0.0
        %1856 = vmatprep.subr.mxu0 0.0
        %1857 = vmatpush1.msra.mxu0 0.0
        %1858 = vmatprep.subr.mxu0 0.0
        %1859 = vmatpush1.msra.mxu0 0.0
        %1860 = vmatprep.subr.mxu0 0.0
        %1861 = vmatpush1.msra.mxu0 0.0
        %1862 = vmatprep.subr.mxu0 0.0
        %1863 = vmatpush1.msra.mxu0 0.0
        %1864 = vmatprep.subr.mxu0 0.0
        %1865 = vmatpush1.msra.mxu0 %v1828
        %1866 = vmatprep.subr.mxu0 0.0
        %1867 = vmatpush2.msra.mxu0 0.0
        %1868 = vmatprep.subr.mxu0 0.0
        %1869 = vmatpush2.msra.mxu0 0.0
        %1870 = vmatprep.subr.mxu0 0.0
        %1871 = vmatpush2.msra.mxu0 0.0
        %1872 = vmatprep.subr.mxu0 0.0
        %1873 = vmatpush2.msra.mxu0 0.0
        %1874 = vmatprep.subr.mxu0 0.0
        %1875 = vmatpush2.msra.mxu0 0.0
        %1876 = vmatprep.subr.mxu0 0.0
        %1877 = vmatpush2.msra.mxu0 0.0
        %1878 = vmatprep.subr.mxu0 0.0
        %1879 = vmatpush2.msra.mxu0 0.0
        %1880 = vmatprep.subr.mxu0 0.0
        %1881 = vmatpush2.msra.mxu0 0.0
        %1882 = vmatprep.subr.mxu0 0.0
        %1883 = vmatpush2.msra.mxu0 0.0
        %1884 = vmatprep.subr.mxu0 0.0
        %1885 = vmatpush2.msra.mxu0 0.0
        %1886 = vmatprep.subr.mxu0 0.0
        %1887 = vmatpush2.msra.mxu0 0.0
        %1888 = vmatprep.subr.mxu0 0.0
        %1889 = vmatpush2.msra.mxu0 0.0
        %1890 = vmatprep.subr.mxu0 0.0
        %1891 = vmatpush2.msra.mxu0 0.0
        %1892 = vmatprep.subr.mxu0 0.0
        %1893 = vmatpush2.msra.mxu0 0.0
        %1894 = vmatprep.subr.mxu0 0.0
        %1895 = vmatpush2.msra.mxu0 0.0
        %1896 = vmatprep.subr.mxu0 0.0
        %1897 = vmatpush2.msra.mxu0 0.0
        %1898 = vmatprep.mubr.f32.mxu0 0.0
        %1899 = vmatmul.mubr.f32.gmra.mxu0 %v1832
        %v1900 = vpop.f32.mrf.mxu0
        %v1901 = vadd.f32 0.0, %v1900
        %v1902 = vpop.f32.mrf.mxu0
        %1903 = vdwg.mxu0
        %v1904 = vadd.f32 %v1749, %v1901
        %s1905 = scalar_lea.vmem [#allocation9], 16
        %v1906 = vld [vmem:[%s1905] sm:$0xff]
        %s1907 = scalar_lea.vmem [#allocation7], 128
        %v1908 = vld [vmem:[%s1907] sm:$0xff]
        %v1909 = vld [vmem:[%s1907 + $0x8] sm:$0xff]
        %v1910 = vld [vmem:[%s1907 + $0x10] sm:$0xff]
        %v1911 = vld [vmem:[%s1907 + $0x18] sm:$0xff]
        %v1912 = vld [vmem:[%s1907 + $0x20] sm:$0xff]
        %v1913 = vld [vmem:[%s1907 + $0x28] sm:$0xff]
        %v1914 = vld [vmem:[%s1907 + $0x30] sm:$0xff]
        %v1915 = vld [vmem:[%s1907 + $0x38] sm:$0xff]
        %1916 = vmatprep.subr.mxu0 0.0
        %1917 = vmatpush1.msra.mxu0 0.0
        %1918 = vmatprep.subr.mxu0 0.0
        %1919 = vmatpush1.msra.mxu0 0.0
        %1920 = vmatprep.subr.mxu0 0.0
        %1921 = vmatpush1.msra.mxu0 0.0
        %1922 = vmatprep.subr.mxu0 0.0
        %1923 = vmatpush1.msra.mxu0 0.0
        %1924 = vmatprep.subr.mxu0 0.0
        %1925 = vmatpush1.msra.mxu0 0.0
        %1926 = vmatprep.subr.mxu0 0.0
        %1927 = vmatpush1.msra.mxu0 0.0
        %1928 = vmatprep.subr.mxu0 0.0
        %1929 = vmatpush1.msra.mxu0 0.0
        %1930 = vmatprep.subr.mxu0 0.0
        %1931 = vmatpush1.msra.mxu0 0.0
        %1932 = vmatprep.subr.mxu0 0.0
        %1933 = vmatpush1.msra.mxu0 %v1915
        %1934 = vmatprep.subr.mxu0 0.0
        %1935 = vmatpush1.msra.mxu0 %v1914
        %1936 = vmatprep.subr.mxu0 0.0
        %1937 = vmatpush1.msra.mxu0 %v1913
        %1938 = vmatprep.subr.mxu0 0.0
        %1939 = vmatpush1.msra.mxu0 %v1912
        %1940 = vmatprep.subr.mxu0 0.0
        %1941 = vmatpush1.msra.mxu0 %v1911
        %1942 = vmatprep.subr.mxu0 0.0
        %1943 = vmatpush1.msra.mxu0 %v1910
        %1944 = vmatprep.subr.mxu0 0.0
        %1945 = vmatpush1.msra.mxu0 %v1909
        %1946 = vmatprep.subr.mxu0 0.0
        %1947 = vmatpush1.msra.mxu0 %v1908
        %1948 = vmatprep.subr.mxu0 0.0
        %1949 = vmatpush2.msra.mxu0 0.0
        %1950 = vmatprep.subr.mxu0 0.0
        %1951 = vmatpush2.msra.mxu0 0.0
        %1952 = vmatprep.subr.mxu0 0.0
        %1953 = vmatpush2.msra.mxu0 0.0
        %1954 = vmatprep.subr.mxu0 0.0
        %1955 = vmatpush2.msra.mxu0 0.0
        %1956 = vmatprep.subr.mxu0 0.0
        %1957 = vmatpush2.msra.mxu0 0.0
        %1958 = vmatprep.subr.mxu0 0.0
        %1959 = vmatpush2.msra.mxu0 0.0
        %1960 = vmatprep.subr.mxu0 0.0
        %1961 = vmatpush2.msra.mxu0 0.0
        %1962 = vmatprep.subr.mxu0 0.0
        %1963 = vmatpush2.msra.mxu0 0.0
        %1964 = vmatprep.subr.mxu0 0.0
        %1965 = vmatpush2.msra.mxu0 0.0
        %1966 = vmatprep.subr.mxu0 0.0
        %1967 = vmatpush2.msra.mxu0 0.0
        %1968 = vmatprep.subr.mxu0 0.0
        %1969 = vmatpush2.msra.mxu0 0.0
        %1970 = vmatprep.subr.mxu0 0.0
        %1971 = vmatpush2.msra.mxu0 0.0
        %1972 = vmatprep.subr.mxu0 0.0
        %1973 = vmatpush2.msra.mxu0 0.0
        %1974 = vmatprep.subr.mxu0 0.0
        %1975 = vmatpush2.msra.mxu0 0.0
        %1976 = vmatprep.subr.mxu0 0.0
        %1977 = vmatpush2.msra.mxu0 0.0
        %1978 = vmatprep.subr.mxu0 0.0
        %1979 = vmatpush2.msra.mxu0 0.0
        %1980 = vmatprep.mubr.f32.mxu0 0.0
        %1981 = vmatmul.mubr.f32.gmra.mxu0 %v1603
        %v1982 = vpop.f32.mrf.mxu0
        %v1983 = vadd.f32 0.0, %v1982
        %v1984 = vpop.f32.mrf.mxu0
        %1985 = vdwg.mxu0
        %v1987 = vsel %vm1675, %v1906, 0
        %1989 = vmatprep.subr.mxu0 0.0
        %1990 = vmatpush1.msra.mxu0 0.0
        %1991 = vmatprep.subr.mxu0 0.0
        %1992 = vmatpush1.msra.mxu0 0.0
        %1993 = vmatprep.subr.mxu0 0.0
        %1994 = vmatpush1.msra.mxu0 0.0
        %1995 = vmatprep.subr.mxu0 0.0
        %1996 = vmatpush1.msra.mxu0 0.0
        %1997 = vmatprep.subr.mxu0 0.0
        %1998 = vmatpush1.msra.mxu0 0.0
        %1999 = vmatprep.subr.mxu0 0.0
        %2000 = vmatpush1.msra.mxu0 0.0
        %2001 = vmatprep.subr.mxu0 0.0
        %2002 = vmatpush1.msra.mxu0 0.0
        %2003 = vmatprep.subr.mxu0 0.0
        %2004 = vmatpush1.msra.mxu0 0.0
        %2005 = vmatprep.subr.mxu0 0.0
        %2006 = vmatpush1.msra.mxu0 0.0
        %2007 = vmatprep.subr.mxu0 0.0
        %2008 = vmatpush1.msra.mxu0 0.0
        %2009 = vmatprep.subr.mxu0 0.0
        %2010 = vmatpush1.msra.mxu0 0.0
        %2011 = vmatprep.subr.mxu0 0.0
        %2012 = vmatpush1.msra.mxu0 0.0
        %2013 = vmatprep.subr.mxu0 0.0
        %2014 = vmatpush1.msra.mxu0 0.0
        %2015 = vmatprep.subr.mxu0 0.0
        %2016 = vmatpush1.msra.mxu0 0.0
        %2017 = vmatprep.subr.mxu0 0.0
        %2018 = vmatpush1.msra.mxu0 0.0
        %2019 = vmatprep.subr.mxu0 0.0
        %2020 = vmatpush1.msra.mxu0 %v1983
        %2021 = vmatprep.subr.mxu0 0.0
        %2022 = vmatpush2.msra.mxu0 0.0
        %2023 = vmatprep.subr.mxu0 0.0
        %2024 = vmatpush2.msra.mxu0 0.0
        %2025 = vmatprep.subr.mxu0 0.0
        %2026 = vmatpush2.msra.mxu0 0.0
        %2027 = vmatprep.subr.mxu0 0.0
        %2028 = vmatpush2.msra.mxu0 0.0
        %2029 = vmatprep.subr.mxu0 0.0
        %2030 = vmatpush2.msra.mxu0 0.0
        %2031 = vmatprep.subr.mxu0 0.0
        %2032 = vmatpush2.msra.mxu0 0.0
        %2033 = vmatprep.subr.mxu0 0.0
        %2034 = vmatpush2.msra.mxu0 0.0
        %2035 = vmatprep.subr.mxu0 0.0
        %2036 = vmatpush2.msra.mxu0 0.0
        %2037 = vmatprep.subr.mxu0 0.0
        %2038 = vmatpush2.msra.mxu0 0.0
        %2039 = vmatprep.subr.mxu0 0.0
        %2040 = vmatpush2.msra.mxu0 0.0
        %2041 = vmatprep.subr.mxu0 0.0
        %2042 = vmatpush2.msra.mxu0 0.0
        %2043 = vmatprep.subr.mxu0 0.0
        %2044 = vmatpush2.msra.mxu0 0.0
        %2045 = vmatprep.subr.mxu0 0.0
        %2046 = vmatpush2.msra.mxu0 0.0
        %2047 = vmatprep.subr.mxu0 0.0
        %2048 = vmatpush2.msra.mxu0 0.0
        %2049 = vmatprep.subr.mxu0 0.0
        %2050 = vmatpush2.msra.mxu0 0.0
        %2051 = vmatprep.subr.mxu0 0.0
        %2052 = vmatpush2.msra.mxu0 0.0
        %2053 = vmatprep.mubr.f32.mxu0 0.0
        %2054 = vmatmul.mubr.f32.gmra.mxu0 %v1987
        %v2055 = vpop.f32.mrf.mxu0
        %v2056 = vadd.f32 0.0, %v2055
        %v2057 = vpop.f32.mrf.mxu0
        %2058 = vdwg.mxu0
        %v2059 = vadd.f32 %v1904, %v2056
        %v2060 = vld [vmem:[#allocation15] sm:$0xff]
        %v2061 = vld [vmem:[#allocation13] sm:$0xff]
        %v2062 = vld [vmem:[#allocation12] sm:$0xff]
        %v2063 = vld [vmem:[#allocation12 + $0x8] sm:$0xff]
        %v2064 = vld [vmem:[#allocation12 + $0x10] sm:$0xff]
        %v2065 = vld [vmem:[#allocation12 + $0x18] sm:$0xff]
        %v2066 = vld [vmem:[#allocation12 + $0x20] sm:$0xff]
        %v2067 = vld [vmem:[#allocation12 + $0x28] sm:$0xff]
        %v2068 = vld [vmem:[#allocation12 + $0x30] sm:$0xff]
        %v2069 = vld [vmem:[#allocation12 + $0x38] sm:$0xff]
        %v2071 = vsel %vm1601, %v1486, 0
        %2073 = vmatprep.subr.mxu0 0.0
        %2074 = vmatpush1.msra.mxu0 0.0
        %2075 = vmatprep.subr.mxu0 0.0
        %2076 = vmatpush1.msra.mxu0 0.0
        %2077 = vmatprep.subr.mxu0 0.0
        %2078 = vmatpush1.msra.mxu0 0.0
        %2079 = vmatprep.subr.mxu0 0.0
        %2080 = vmatpush1.msra.mxu0 0.0
        %2081 = vmatprep.subr.mxu0 0.0
        %2082 = vmatpush1.msra.mxu0 0.0
        %2083 = vmatprep.subr.mxu0 0.0
        %2084 = vmatpush1.msra.mxu0 0.0
        %2085 = vmatprep.subr.mxu0 0.0
        %2086 = vmatpush1.msra.mxu0 0.0
        %2087 = vmatprep.subr.mxu0 0.0
        %2088 = vmatpush1.msra.mxu0 0.0
        %2089 = vmatprep.subr.mxu0 0.0
        %2090 = vmatpush1.msra.mxu0 %v2069
        %2091 = vmatprep.subr.mxu0 0.0
        %2092 = vmatpush1.msra.mxu0 %v2068
        %2093 = vmatprep.subr.mxu0 0.0
        %2094 = vmatpush1.msra.mxu0 %v2067
        %2095 = vmatprep.subr.mxu0 0.0
        %2096 = vmatpush1.msra.mxu0 %v2066
        %2097 = vmatprep.subr.mxu0 0.0
        %2098 = vmatpush1.msra.mxu0 %v2065
        %2099 = vmatprep.subr.mxu0 0.0
        %2100 = vmatpush1.msra.mxu0 %v2064
        %2101 = vmatprep.subr.mxu0 0.0
        %2102 = vmatpush1.msra.mxu0 %v2063
        %2103 = vmatprep.subr.mxu0 0.0
        %2104 = vmatpush1.msra.mxu0 %v2062
        %2105 = vmatprep.subr.mxu0 0.0
        %2106 = vmatpush2.msra.mxu0 0.0
        %2107 = vmatprep.subr.mxu0 0.0
        %2108 = vmatpush2.msra.mxu0 0.0
        %2109 = vmatprep.subr.mxu0 0.0
        %2110 = vmatpush2.msra.mxu0 0.0
        %2111 = vmatprep.subr.mxu0 0.0
        %2112 = vmatpush2.msra.mxu0 0.0
        %2113 = vmatprep.subr.mxu0 0.0
        %2114 = vmatpush2.msra.mxu0 0.0
        %2115 = vmatprep.subr.mxu0 0.0
        %2116 = vmatpush2.msra.mxu0 0.0
        %2117 = vmatprep.subr.mxu0 0.0
        %2118 = vmatpush2.msra.mxu0 0.0
        %2119 = vmatprep.subr.mxu0 0.0
        %2120 = vmatpush2.msra.mxu0 0.0
        %2121 = vmatprep.subr.mxu0 0.0
        %2122 = vmatpush2.msra.mxu0 0.0
        %2123 = vmatprep.subr.mxu0 0.0
        %2124 = vmatpush2.msra.mxu0 0.0
        %2125 = vmatprep.subr.mxu0 0.0
        %2126 = vmatpush2.msra.mxu0 0.0
        %2127 = vmatprep.subr.mxu0 0.0
        %2128 = vmatpush2.msra.mxu0 0.0
        %2129 = vmatprep.subr.mxu0 0.0
        %2130 = vmatpush2.msra.mxu0 0.0
        %2131 = vmatprep.subr.mxu0 0.0
        %2132 = vmatpush2.msra.mxu0 0.0
        %2133 = vmatprep.subr.mxu0 0.0
        %2134 = vmatpush2.msra.mxu0 0.0
        %2135 = vmatprep.subr.mxu0 0.0
        %2136 = vmatpush2.msra.mxu0 0.0
        %2137 = vmatprep.mubr.f32.mxu0 0.0
        %2138 = vmatmul.mubr.f32.gmra.mxu0 %v2071
        %v2139 = vpop.f32.mrf.mxu0
        %v2140 = vadd.f32 0.0, %v2139
        %v2141 = vpop.f32.mrf.mxu0
        %2142 = vdwg.mxu0
        %v2144 = vsel %vm1675, %v2061, 0
        %2146 = vmatprep.subr.mxu0 0.0
        %2147 = vmatpush1.msra.mxu0 0.0
        %2148 = vmatprep.subr.mxu0 0.0
        %2149 = vmatpush1.msra.mxu0 0.0
        %2150 = vmatprep.subr.mxu0 0.0
        %2151 = vmatpush1.msra.mxu0 0.0
        %2152 = vmatprep.subr.mxu0 0.0
        %2153 = vmatpush1.msra.mxu0 0.0
        %2154 = vmatprep.subr.mxu0 0.0
        %2155 = vmatpush1.msra.mxu0 0.0
        %2156 = vmatprep.subr.mxu0 0.0
        %2157 = vmatpush1.msra.mxu0 0.0
        %2158 = vmatprep.subr.mxu0 0.0
        %2159 = vmatpush1.msra.mxu0 0.0
        %2160 = vmatprep.subr.mxu0 0.0
        %2161 = vmatpush1.msra.mxu0 0.0
        %2162 = vmatprep.subr.mxu0 0.0
        %2163 = vmatpush1.msra.mxu0 0.0
        %2164 = vmatprep.subr.mxu0 0.0
        %2165 = vmatpush1.msra.mxu0 0.0
        %2166 = vmatprep.subr.mxu0 0.0
        %2167 = vmatpush1.msra.mxu0 0.0
        %2168 = vmatprep.subr.mxu0 0.0
        %2169 = vmatpush1.msra.mxu0 0.0
        %2170 = vmatprep.subr.mxu0 0.0
        %2171 = vmatpush1.msra.mxu0 0.0
        %2172 = vmatprep.subr.mxu0 0.0
        %2173 = vmatpush1.msra.mxu0 0.0
        %2174 = vmatprep.subr.mxu0 0.0
        %2175 = vmatpush1.msra.mxu0 0.0
        %2176 = vmatprep.subr.mxu0 0.0
        %2177 = vmatpush1.msra.mxu0 %v2140
        %2178 = vmatprep.subr.mxu0 0.0
        %2179 = vmatpush2.msra.mxu0 0.0
        %2180 = vmatprep.subr.mxu0 0.0
        %2181 = vmatpush2.msra.mxu0 0.0
        %2182 = vmatprep.subr.mxu0 0.0
        %2183 = vmatpush2.msra.mxu0 0.0
        %2184 = vmatprep.subr.mxu0 0.0
        %2185 = vmatpush2.msra.mxu0 0.0
        %2186 = vmatprep.subr.mxu0 0.0
        %2187 = vmatpush2.msra.mxu0 0.0
        %2188 = vmatprep.subr.mxu0 0.0
        %2189 = vmatpush2.msra.mxu0 0.0
        %2190 = vmatprep.subr.mxu0 0.0
        %2191 = vmatpush2.msra.mxu0 0.0
        %2192 = vmatprep.subr.mxu0 0.0
        %2193 = vmatpush2.msra.mxu0 0.0
        %2194 = vmatprep.subr.mxu0 0.0
        %2195 = vmatpush2.msra.mxu0 0.0
        %2196 = vmatprep.subr.mxu0 0.0
        %2197 = vmatpush2.msra.mxu0 0.0
        %2198 = vmatprep.subr.mxu0 0.0
        %2199 = vmatpush2.msra.mxu0 0.0
        %2200 = vmatprep.subr.mxu0 0.0
        %2201 = vmatpush2.msra.mxu0 0.0
        %2202 = vmatprep.subr.mxu0 0.0
        %2203 = vmatpush2.msra.mxu0 0.0
        %2204 = vmatprep.subr.mxu0 0.0
        %2205 = vmatpush2.msra.mxu0 0.0
        %2206 = vmatprep.subr.mxu0 0.0
        %2207 = vmatpush2.msra.mxu0 0.0
        %2208 = vmatprep.subr.mxu0 0.0
        %2209 = vmatpush2.msra.mxu0 0.0
        %2210 = vmatprep.mubr.f32.mxu0 0.0
        %2211 = vmatmul.mubr.f32.gmra.mxu0 %v2144
        %v2212 = vpop.f32.mrf.mxu0
        %v2213 = vadd.f32 0.0, %v2212
        %v2214 = vpop.f32.mrf.mxu0
        %2215 = vdwg.mxu0
        %v2216 = vadd.f32 %v2060, %v2213
        %s2217 = scalar_lea.vmem [#allocation13], 8
        %v2218 = vld [vmem:[%s2217] sm:$0xff]
        %s2219 = scalar_lea.vmem [#allocation12], 64
        %v2220 = vld [vmem:[%s2219] sm:$0xff]
        %v2221 = vld [vmem:[%s2219 + $0x8] sm:$0xff]
        %v2222 = vld [vmem:[%s2219 + $0x10] sm:$0xff]
        %v2223 = vld [vmem:[%s2219 + $0x18] sm:$0xff]
        %v2224 = vld [vmem:[%s2219 + $0x20] sm:$0xff]
        %v2225 = vld [vmem:[%s2219 + $0x28] sm:$0xff]
        %v2226 = vld [vmem:[%s2219 + $0x30] sm:$0xff]
        %v2227 = vld [vmem:[%s2219 + $0x38] sm:$0xff]
        %2228 = vmatprep.subr.mxu0 0.0
        %2229 = vmatpush1.msra.mxu0 0.0
        %2230 = vmatprep.subr.mxu0 0.0
        %2231 = vmatpush1.msra.mxu0 0.0
        %2232 = vmatprep.subr.mxu0 0.0
        %2233 = vmatpush1.msra.mxu0 0.0
        %2234 = vmatprep.subr.mxu0 0.0
        %2235 = vmatpush1.msra.mxu0 0.0
        %2236 = vmatprep.subr.mxu0 0.0
        %2237 = vmatpush1.msra.mxu0 0.0
        %2238 = vmatprep.subr.mxu0 0.0
        %2239 = vmatpush1.msra.mxu0 0.0
        %2240 = vmatprep.subr.mxu0 0.0
        %2241 = vmatpush1.msra.mxu0 0.0
        %2242 = vmatprep.subr.mxu0 0.0
        %2243 = vmatpush1.msra.mxu0 0.0
        %2244 = vmatprep.subr.mxu0 0.0
        %2245 = vmatpush1.msra.mxu0 %v2227
        %2246 = vmatprep.subr.mxu0 0.0
        %2247 = vmatpush1.msra.mxu0 %v2226
        %2248 = vmatprep.subr.mxu0 0.0
        %2249 = vmatpush1.msra.mxu0 %v2225
        %2250 = vmatprep.subr.mxu0 0.0
        %2251 = vmatpush1.msra.mxu0 %v2224
        %2252 = vmatprep.subr.mxu0 0.0
        %2253 = vmatpush1.msra.mxu0 %v2223
        %2254 = vmatprep.subr.mxu0 0.0
        %2255 = vmatpush1.msra.mxu0 %v2222
        %2256 = vmatprep.subr.mxu0 0.0
        %2257 = vmatpush1.msra.mxu0 %v2221
        %2258 = vmatprep.subr.mxu0 0.0
        %2259 = vmatpush1.msra.mxu0 %v2220
        %2260 = vmatprep.subr.mxu0 0.0
        %2261 = vmatpush2.msra.mxu0 0.0
        %2262 = vmatprep.subr.mxu0 0.0
        %2263 = vmatpush2.msra.mxu0 0.0
        %2264 = vmatprep.subr.mxu0 0.0
        %2265 = vmatpush2.msra.mxu0 0.0
        %2266 = vmatprep.subr.mxu0 0.0
        %2267 = vmatpush2.msra.mxu0 0.0
        %2268 = vmatprep.subr.mxu0 0.0
        %2269 = vmatpush2.msra.mxu0 0.0
        %2270 = vmatprep.subr.mxu0 0.0
        %2271 = vmatpush2.msra.mxu0 0.0
        %2272 = vmatprep.subr.mxu0 0.0
        %2273 = vmatpush2.msra.mxu0 0.0
        %2274 = vmatprep.subr.mxu0 0.0
        %2275 = vmatpush2.msra.mxu0 0.0
        %2276 = vmatprep.subr.mxu0 0.0
        %2277 = vmatpush2.msra.mxu0 0.0
        %2278 = vmatprep.subr.mxu0 0.0
        %2279 = vmatpush2.msra.mxu0 0.0
        %2280 = vmatprep.subr.mxu0 0.0
        %2281 = vmatpush2.msra.mxu0 0.0
        %2282 = vmatprep.subr.mxu0 0.0
        %2283 = vmatpush2.msra.mxu0 0.0
        %2284 = vmatprep.subr.mxu0 0.0
        %2285 = vmatpush2.msra.mxu0 0.0
        %2286 = vmatprep.subr.mxu0 0.0
        %2287 = vmatpush2.msra.mxu0 0.0
        %2288 = vmatprep.subr.mxu0 0.0
        %2289 = vmatpush2.msra.mxu0 0.0
        %2290 = vmatprep.subr.mxu0 0.0
        %2291 = vmatpush2.msra.mxu0 0.0
        %2292 = vmatprep.mubr.f32.mxu0 0.0
        %2293 = vmatmul.mubr.f32.gmra.mxu0 %v2071
        %v2294 = vpop.f32.mrf.mxu0
        %v2295 = vadd.f32 0.0, %v2294
        %v2296 = vpop.f32.mrf.mxu0
        %2297 = vdwg.mxu0
        %v2299 = vsel %vm1675, %v2218, 0
        %2301 = vmatprep.subr.mxu0 0.0
        %2302 = vmatpush1.msra.mxu0 0.0
        %2303 = vmatprep.subr.mxu0 0.0
        %2304 = vmatpush1.msra.mxu0 0.0
        %2305 = vmatprep.subr.mxu0 0.0
        %2306 = vmatpush1.msra.mxu0 0.0
        %2307 = vmatprep.subr.mxu0 0.0
        %2308 = vmatpush1.msra.mxu0 0.0
        %2309 = vmatprep.subr.mxu0 0.0
        %2310 = vmatpush1.msra.mxu0 0.0
        %2311 = vmatprep.subr.mxu0 0.0
        %2312 = vmatpush1.msra.mxu0 0.0
        %2313 = vmatprep.subr.mxu0 0.0
        %2314 = vmatpush1.msra.mxu0 0.0
        %2315 = vmatprep.subr.mxu0 0.0
        %2316 = vmatpush1.msra.mxu0 0.0
        %2317 = vmatprep.subr.mxu0 0.0
        %2318 = vmatpush1.msra.mxu0 0.0
        %2319 = vmatprep.subr.mxu0 0.0
        %2320 = vmatpush1.msra.mxu0 0.0
        %2321 = vmatprep.subr.mxu0 0.0
        %2322 = vmatpush1.msra.mxu0 0.0
        %2323 = vmatprep.subr.mxu0 0.0
        %2324 = vmatpush1.msra.mxu0 0.0
        %2325 = vmatprep.subr.mxu0 0.0
        %2326 = vmatpush1.msra.mxu0 0.0
        %2327 = vmatprep.subr.mxu0 0.0
        %2328 = vmatpush1.msra.mxu0 0.0
        %2329 = vmatprep.subr.mxu0 0.0
        %2330 = vmatpush1.msra.mxu0 0.0
        %2331 = vmatprep.subr.mxu0 0.0
        %2332 = vmatpush1.msra.mxu0 %v2295
        %2333 = vmatprep.subr.mxu0 0.0
        %2334 = vmatpush2.msra.mxu0 0.0
        %2335 = vmatprep.subr.mxu0 0.0
        %2336 = vmatpush2.msra.mxu0 0.0
        %2337 = vmatprep.subr.mxu0 0.0
        %2338 = vmatpush2.msra.mxu0 0.0
        %2339 = vmatprep.subr.mxu0 0.0
        %2340 = vmatpush2.msra.mxu0 0.0
        %2341 = vmatprep.subr.mxu0 0.0
        %2342 = vmatpush2.msra.mxu0 0.0
        %2343 = vmatprep.subr.mxu0 0.0
        %2344 = vmatpush2.msra.mxu0 0.0
        %2345 = vmatprep.subr.mxu0 0.0
        %2346 = vmatpush2.msra.mxu0 0.0
        %2347 = vmatprep.subr.mxu0 0.0
        %2348 = vmatpush2.msra.mxu0 0.0
        %2349 = vmatprep.subr.mxu0 0.0
        %2350 = vmatpush2.msra.mxu0 0.0
        %2351 = vmatprep.subr.mxu0 0.0
        %2352 = vmatpush2.msra.mxu0 0.0
        %2353 = vmatprep.subr.mxu0 0.0
        %2354 = vmatpush2.msra.mxu0 0.0
        %2355 = vmatprep.subr.mxu0 0.0
        %2356 = vmatpush2.msra.mxu0 0.0
        %2357 = vmatprep.subr.mxu0 0.0
        %2358 = vmatpush2.msra.mxu0 0.0
        %2359 = vmatprep.subr.mxu0 0.0
        %2360 = vmatpush2.msra.mxu0 0.0
        %2361 = vmatprep.subr.mxu0 0.0
        %2362 = vmatpush2.msra.mxu0 0.0
        %2363 = vmatprep.subr.mxu0 0.0
        %2364 = vmatpush2.msra.mxu0 0.0
        %2365 = vmatprep.mubr.f32.mxu0 0.0
        %2366 = vmatmul.mubr.f32.gmra.mxu0 %v2299
        %v2367 = vpop.f32.mrf.mxu0
        %v2368 = vadd.f32 0.0, %v2367
        %v2369 = vpop.f32.mrf.mxu0
        %2370 = vdwg.mxu0
        %v2371 = vadd.f32 %v2216, %v2368
        %s2372 = scalar_lea.vmem [#allocation13], 16
        %v2373 = vld [vmem:[%s2372] sm:$0xff]
        %s2374 = scalar_lea.vmem [#allocation12], 128
        %v2375 = vld [vmem:[%s2374] sm:$0xff]
        %v2376 = vld [vmem:[%s2374 + $0x8] sm:$0xff]
        %v2377 = vld [vmem:[%s2374 + $0x10] sm:$0xff]
        %v2378 = vld [vmem:[%s2374 + $0x18] sm:$0xff]
        %v2379 = vld [vmem:[%s2374 + $0x20] sm:$0xff]
        %v2380 = vld [vmem:[%s2374 + $0x28] sm:$0xff]
        %v2381 = vld [vmem:[%s2374 + $0x30] sm:$0xff]
        %v2382 = vld [vmem:[%s2374 + $0x38] sm:$0xff]
        %2383 = vmatprep.subr.mxu0 0.0
        %2384 = vmatpush1.msra.mxu0 0.0
        %2385 = vmatprep.subr.mxu0 0.0
        %2386 = vmatpush1.msra.mxu0 0.0
        %2387 = vmatprep.subr.mxu0 0.0
        %2388 = vmatpush1.msra.mxu0 0.0
        %2389 = vmatprep.subr.mxu0 0.0
        %2390 = vmatpush1.msra.mxu0 0.0
        %2391 = vmatprep.subr.mxu0 0.0
        %2392 = vmatpush1.msra.mxu0 0.0
        %2393 = vmatprep.subr.mxu0 0.0
        %2394 = vmatpush1.msra.mxu0 0.0
        %2395 = vmatprep.subr.mxu0 0.0
        %2396 = vmatpush1.msra.mxu0 0.0
        %2397 = vmatprep.subr.mxu0 0.0
        %2398 = vmatpush1.msra.mxu0 0.0
        %2399 = vmatprep.subr.mxu0 0.0
        %2400 = vmatpush1.msra.mxu0 %v2382
        %2401 = vmatprep.subr.mxu0 0.0
        %2402 = vmatpush1.msra.mxu0 %v2381
        %2403 = vmatprep.subr.mxu0 0.0
        %2404 = vmatpush1.msra.mxu0 %v2380
        %2405 = vmatprep.subr.mxu0 0.0
        %2406 = vmatpush1.msra.mxu0 %v2379
        %2407 = vmatprep.subr.mxu0 0.0
        %2408 = vmatpush1.msra.mxu0 %v2378
        %2409 = vmatprep.subr.mxu0 0.0
        %2410 = vmatpush1.msra.mxu0 %v2377
        %2411 = vmatprep.subr.mxu0 0.0
        %2412 = vmatpush1.msra.mxu0 %v2376
        %2413 = vmatprep.subr.mxu0 0.0
        %2414 = vmatpush1.msra.mxu0 %v2375
        %2415 = vmatprep.subr.mxu0 0.0
        %2416 = vmatpush2.msra.mxu0 0.0
        %2417 = vmatprep.subr.mxu0 0.0
        %2418 = vmatpush2.msra.mxu0 0.0
        %2419 = vmatprep.subr.mxu0 0.0
        %2420 = vmatpush2.msra.mxu0 0.0
        %2421 = vmatprep.subr.mxu0 0.0
        %2422 = vmatpush2.msra.mxu0 0.0
        %2423 = vmatprep.subr.mxu0 0.0
        %2424 = vmatpush2.msra.mxu0 0.0
        %2425 = vmatprep.subr.mxu0 0.0
        %2426 = vmatpush2.msra.mxu0 0.0
        %2427 = vmatprep.subr.mxu0 0.0
        %2428 = vmatpush2.msra.mxu0 0.0
        %2429 = vmatprep.subr.mxu0 0.0
        %2430 = vmatpush2.msra.mxu0 0.0
        %2431 = vmatprep.subr.mxu0 0.0
        %2432 = vmatpush2.msra.mxu0 0.0
        %2433 = vmatprep.subr.mxu0 0.0
        %2434 = vmatpush2.msra.mxu0 0.0
        %2435 = vmatprep.subr.mxu0 0.0
        %2436 = vmatpush2.msra.mxu0 0.0
        %2437 = vmatprep.subr.mxu0 0.0
        %2438 = vmatpush2.msra.mxu0 0.0
        %2439 = vmatprep.subr.mxu0 0.0
        %2440 = vmatpush2.msra.mxu0 0.0
        %2441 = vmatprep.subr.mxu0 0.0
        %2442 = vmatpush2.msra.mxu0 0.0
        %2443 = vmatprep.subr.mxu0 0.0
        %2444 = vmatpush2.msra.mxu0 0.0
        %2445 = vmatprep.subr.mxu0 0.0
        %2446 = vmatpush2.msra.mxu0 0.0
        %2447 = vmatprep.mubr.f32.mxu0 0.0
        %2448 = vmatmul.mubr.f32.gmra.mxu0 %v2071
        %v2449 = vpop.f32.mrf.mxu0
        %v2450 = vadd.f32 0.0, %v2449
        %v2451 = vpop.f32.mrf.mxu0
        %2452 = vdwg.mxu0
        %v2454 = vsel %vm1675, %v2373, 0
        %2456 = vmatprep.subr.mxu0 0.0
        %2457 = vmatpush1.msra.mxu0 0.0
        %2458 = vmatprep.subr.mxu0 0.0
        %2459 = vmatpush1.msra.mxu0 0.0
        %2460 = vmatprep.subr.mxu0 0.0
        %2461 = vmatpush1.msra.mxu0 0.0
        %2462 = vmatprep.subr.mxu0 0.0
        %2463 = vmatpush1.msra.mxu0 0.0
        %2464 = vmatprep.subr.mxu0 0.0
        %2465 = vmatpush1.msra.mxu0 0.0
        %2466 = vmatprep.subr.mxu0 0.0
        %2467 = vmatpush1.msra.mxu0 0.0
        %2468 = vmatprep.subr.mxu0 0.0
        %2469 = vmatpush1.msra.mxu0 0.0
        %2470 = vmatprep.subr.mxu0 0.0
        %2471 = vmatpush1.msra.mxu0 0.0
        %2472 = vmatprep.subr.mxu0 0.0
        %2473 = vmatpush1.msra.mxu0 0.0
        %2474 = vmatprep.subr.mxu0 0.0
        %2475 = vmatpush1.msra.mxu0 0.0
        %2476 = vmatprep.subr.mxu0 0.0
        %2477 = vmatpush1.msra.mxu0 0.0
        %2478 = vmatprep.subr.mxu0 0.0
        %2479 = vmatpush1.msra.mxu0 0.0
        %2480 = vmatprep.subr.mxu0 0.0
        %2481 = vmatpush1.msra.mxu0 0.0
        %2482 = vmatprep.subr.mxu0 0.0
        %2483 = vmatpush1.msra.mxu0 0.0
        %2484 = vmatprep.subr.mxu0 0.0
        %2485 = vmatpush1.msra.mxu0 0.0
        %2486 = vmatprep.subr.mxu0 0.0
        %2487 = vmatpush1.msra.mxu0 %v2450
        %2488 = vmatprep.subr.mxu0 0.0
        %2489 = vmatpush2.msra.mxu0 0.0
        %2490 = vmatprep.subr.mxu0 0.0
        %2491 = vmatpush2.msra.mxu0 0.0
        %2492 = vmatprep.subr.mxu0 0.0
        %2493 = vmatpush2.msra.mxu0 0.0
        %2494 = vmatprep.subr.mxu0 0.0
        %2495 = vmatpush2.msra.mxu0 0.0
        %2496 = vmatprep.subr.mxu0 0.0
        %2497 = vmatpush2.msra.mxu0 0.0
        %2498 = vmatprep.subr.mxu0 0.0
        %2499 = vmatpush2.msra.mxu0 0.0
        %2500 = vmatprep.subr.mxu0 0.0
        %2501 = vmatpush2.msra.mxu0 0.0
        %2502 = vmatprep.subr.mxu0 0.0
        %2503 = vmatpush2.msra.mxu0 0.0
        %2504 = vmatprep.subr.mxu0 0.0
        %2505 = vmatpush2.msra.mxu0 0.0
        %2506 = vmatprep.subr.mxu0 0.0
        %2507 = vmatpush2.msra.mxu0 0.0
        %2508 = vmatprep.subr.mxu0 0.0
        %2509 = vmatpush2.msra.mxu0 0.0
        %2510 = vmatprep.subr.mxu0 0.0
        %2511 = vmatpush2.msra.mxu0 0.0
        %2512 = vmatprep.subr.mxu0 0.0
        %2513 = vmatpush2.msra.mxu0 0.0
        %2514 = vmatprep.subr.mxu0 0.0
        %2515 = vmatpush2.msra.mxu0 0.0
        %2516 = vmatprep.subr.mxu0 0.0
        %2517 = vmatpush2.msra.mxu0 0.0
        %2518 = vmatprep.subr.mxu0 0.0
        %2519 = vmatpush2.msra.mxu0 0.0
        %2520 = vmatprep.mubr.f32.mxu0 0.0
        %2521 = vmatmul.mubr.f32.gmra.mxu0 %v2454
        %v2522 = vpop.f32.mrf.mxu0
        %v2523 = vadd.f32 0.0, %v2522
        %v2524 = vpop.f32.mrf.mxu0
        %2525 = vdwg.mxu0
        %v2526 = vadd.f32 %v2371, %v2523
        %v2527 = vld [vmem:[#allocation18] sm:$0xff]
        %v2528 = vld [vmem:[#allocation16] sm:$0xff]
        %v2529 = vld [vmem:[%s11] sm:$0xff]
        %v2530 = vld [vmem:[%s11 + $0x8] sm:$0xff]
        %v2531 = vld [vmem:[%s11 + $0x10] sm:$0xff]
        %v2532 = vld [vmem:[%s11 + $0x18] sm:$0xff]
        %v2533 = vld [vmem:[%s11 + $0x20] sm:$0xff]
        %v2534 = vld [vmem:[%s11 + $0x28] sm:$0xff]
        %v2535 = vld [vmem:[%s11 + $0x30] sm:$0xff]
        %v2536 = vld [vmem:[%s11 + $0x38] sm:$0xff]
        %v2538 = vsel %vm1601, %v1588, 0
        %2540 = vmatprep.subr.mxu0 0.0
        %2541 = vmatpush1.msra.mxu0 0.0
        %2542 = vmatprep.subr.mxu0 0.0
        %2543 = vmatpush1.msra.mxu0 0.0
        %2544 = vmatprep.subr.mxu0 0.0
        %2545 = vmatpush1.msra.mxu0 0.0
        %2546 = vmatprep.subr.mxu0 0.0
        %2547 = vmatpush1.msra.mxu0 0.0
        %2548 = vmatprep.subr.mxu0 0.0
        %2549 = vmatpush1.msra.mxu0 0.0
        %2550 = vmatprep.subr.mxu0 0.0
        %2551 = vmatpush1.msra.mxu0 0.0
        %2552 = vmatprep.subr.mxu0 0.0
        %2553 = vmatpush1.msra.mxu0 0.0
        %2554 = vmatprep.subr.mxu0 0.0
        %2555 = vmatpush1.msra.mxu0 0.0
        %2556 = vmatprep.subr.mxu0 0.0
        %2557 = vmatpush1.msra.mxu0 %v2536
        %2558 = vmatprep.subr.mxu0 0.0
        %2559 = vmatpush1.msra.mxu0 %v2535
        %2560 = vmatprep.subr.mxu0 0.0
        %2561 = vmatpush1.msra.mxu0 %v2534
        %2562 = vmatprep.subr.mxu0 0.0
        %2563 = vmatpush1.msra.mxu0 %v2533
        %2564 = vmatprep.subr.mxu0 0.0
        %2565 = vmatpush1.msra.mxu0 %v2532
        %2566 = vmatprep.subr.mxu0 0.0
        %2567 = vmatpush1.msra.mxu0 %v2531
        %2568 = vmatprep.subr.mxu0 0.0
        %2569 = vmatpush1.msra.mxu0 %v2530
        %2570 = vmatprep.subr.mxu0 0.0
        %2571 = vmatpush1.msra.mxu0 %v2529
        %2572 = vmatprep.subr.mxu0 0.0
        %2573 = vmatpush2.msra.mxu0 0.0
        %2574 = vmatprep.subr.mxu0 0.0
        %2575 = vmatpush2.msra.mxu0 0.0
        %2576 = vmatprep.subr.mxu0 0.0
        %2577 = vmatpush2.msra.mxu0 0.0
        %2578 = vmatprep.subr.mxu0 0.0
        %2579 = vmatpush2.msra.mxu0 0.0
        %2580 = vmatprep.subr.mxu0 0.0
        %2581 = vmatpush2.msra.mxu0 0.0
        %2582 = vmatprep.subr.mxu0 0.0
        %2583 = vmatpush2.msra.mxu0 0.0
        %2584 = vmatprep.subr.mxu0 0.0
        %2585 = vmatpush2.msra.mxu0 0.0
        %2586 = vmatprep.subr.mxu0 0.0
        %2587 = vmatpush2.msra.mxu0 0.0
        %2588 = vmatprep.subr.mxu0 0.0
        %2589 = vmatpush2.msra.mxu0 0.0
        %2590 = vmatprep.subr.mxu0 0.0
        %2591 = vmatpush2.msra.mxu0 0.0
        %2592 = vmatprep.subr.mxu0 0.0
        %2593 = vmatpush2.msra.mxu0 0.0
        %2594 = vmatprep.subr.mxu0 0.0
        %2595 = vmatpush2.msra.mxu0 0.0
        %2596 = vmatprep.subr.mxu0 0.0
        %2597 = vmatpush2.msra.mxu0 0.0
        %2598 = vmatprep.subr.mxu0 0.0
        %2599 = vmatpush2.msra.mxu0 0.0
        %2600 = vmatprep.subr.mxu0 0.0
        %2601 = vmatpush2.msra.mxu0 0.0
        %2602 = vmatprep.subr.mxu0 0.0
        %2603 = vmatpush2.msra.mxu0 0.0
        %2604 = vmatprep.mubr.f32.mxu0 0.0
        %2605 = vmatmul.mubr.f32.gmra.mxu0 %v2538
        %v2606 = vpop.f32.mrf.mxu0
        %v2607 = vadd.f32 0.0, %v2606
        %v2608 = vpop.f32.mrf.mxu0
        %2609 = vdwg.mxu0
        %v2611 = vsel %vm1675, %v2528, 0
        %2613 = vmatprep.subr.mxu0 0.0
        %2614 = vmatpush1.msra.mxu0 0.0
        %2615 = vmatprep.subr.mxu0 0.0
        %2616 = vmatpush1.msra.mxu0 0.0
        %2617 = vmatprep.subr.mxu0 0.0
        %2618 = vmatpush1.msra.mxu0 0.0
        %2619 = vmatprep.subr.mxu0 0.0
        %2620 = vmatpush1.msra.mxu0 0.0
        %2621 = vmatprep.subr.mxu0 0.0
        %2622 = vmatpush1.msra.mxu0 0.0
        %2623 = vmatprep.subr.mxu0 0.0
        %2624 = vmatpush1.msra.mxu0 0.0
        %2625 = vmatprep.subr.mxu0 0.0
        %2626 = vmatpush1.msra.mxu0 0.0
        %2627 = vmatprep.subr.mxu0 0.0
        %2628 = vmatpush1.msra.mxu0 0.0
        %2629 = vmatprep.subr.mxu0 0.0
        %2630 = vmatpush1.msra.mxu0 0.0
        %2631 = vmatprep.subr.mxu0 0.0
        %2632 = vmatpush1.msra.mxu0 0.0
        %2633 = vmatprep.subr.mxu0 0.0
        %2634 = vmatpush1.msra.mxu0 0.0
        %2635 = vmatprep.subr.mxu0 0.0
        %2636 = vmatpush1.msra.mxu0 0.0
        %2637 = vmatprep.subr.mxu0 0.0
        %2638 = vmatpush1.msra.mxu0 0.0
        %2639 = vmatprep.subr.mxu0 0.0
        %2640 = vmatpush1.msra.mxu0 0.0
        %2641 = vmatprep.subr.mxu0 0.0
        %2642 = vmatpush1.msra.mxu0 0.0
        %2643 = vmatprep.subr.mxu0 0.0
        %2644 = vmatpush1.msra.mxu0 %v2607
        %2645 = vmatprep.subr.mxu0 0.0
        %2646 = vmatpush2.msra.mxu0 0.0
        %2647 = vmatprep.subr.mxu0 0.0
        %2648 = vmatpush2.msra.mxu0 0.0
        %2649 = vmatprep.subr.mxu0 0.0
        %2650 = vmatpush2.msra.mxu0 0.0
        %2651 = vmatprep.subr.mxu0 0.0
        %2652 = vmatpush2.msra.mxu0 0.0
        %2653 = vmatprep.subr.mxu0 0.0
        %2654 = vmatpush2.msra.mxu0 0.0
        %2655 = vmatprep.subr.mxu0 0.0
        %2656 = vmatpush2.msra.mxu0 0.0
        %2657 = vmatprep.subr.mxu0 0.0
        %2658 = vmatpush2.msra.mxu0 0.0
        %2659 = vmatprep.subr.mxu0 0.0
        %2660 = vmatpush2.msra.mxu0 0.0
        %2661 = vmatprep.subr.mxu0 0.0
        %2662 = vmatpush2.msra.mxu0 0.0
        %2663 = vmatprep.subr.mxu0 0.0
        %2664 = vmatpush2.msra.mxu0 0.0
        %2665 = vmatprep.subr.mxu0 0.0
        %2666 = vmatpush2.msra.mxu0 0.0
        %2667 = vmatprep.subr.mxu0 0.0
        %2668 = vmatpush2.msra.mxu0 0.0
        %2669 = vmatprep.subr.mxu0 0.0
        %2670 = vmatpush2.msra.mxu0 0.0
        %2671 = vmatprep.subr.mxu0 0.0
        %2672 = vmatpush2.msra.mxu0 0.0
        %2673 = vmatprep.subr.mxu0 0.0
        %2674 = vmatpush2.msra.mxu0 0.0
        %2675 = vmatprep.subr.mxu0 0.0
        %2676 = vmatpush2.msra.mxu0 0.0
        %2677 = vmatprep.mubr.f32.mxu0 0.0
        %2678 = vmatmul.mubr.f32.gmra.mxu0 %v2611
        %v2679 = vpop.f32.mrf.mxu0
        %v2680 = vadd.f32 0.0, %v2679
        %v2681 = vpop.f32.mrf.mxu0
        %2682 = vdwg.mxu0
        %v2683 = vadd.f32 %v2527, %v2680
        %s2684 = scalar_lea.vmem [#allocation16], 8
        %v2685 = vld [vmem:[%s2684] sm:$0xff]
        %s2686 = scalar_lea.vmem %s11, 64
        %v2687 = vld [vmem:[%s2686] sm:$0xff]
        %v2688 = vld [vmem:[%s2686 + $0x8] sm:$0xff]
        %v2689 = vld [vmem:[%s2686 + $0x10] sm:$0xff]
        %v2690 = vld [vmem:[%s2686 + $0x18] sm:$0xff]
        %v2691 = vld [vmem:[%s2686 + $0x20] sm:$0xff]
        %v2692 = vld [vmem:[%s2686 + $0x28] sm:$0xff]
        %v2693 = vld [vmem:[%s2686 + $0x30] sm:$0xff]
        %v2694 = vld [vmem:[%s2686 + $0x38] sm:$0xff]
        %2695 = vmatprep.subr.mxu0 0.0
        %2696 = vmatpush1.msra.mxu0 0.0
        %2697 = vmatprep.subr.mxu0 0.0
        %2698 = vmatpush1.msra.mxu0 0.0
        %2699 = vmatprep.subr.mxu0 0.0
        %2700 = vmatpush1.msra.mxu0 0.0
        %2701 = vmatprep.subr.mxu0 0.0
        %2702 = vmatpush1.msra.mxu0 0.0
        %2703 = vmatprep.subr.mxu0 0.0
        %2704 = vmatpush1.msra.mxu0 0.0
        %2705 = vmatprep.subr.mxu0 0.0
        %2706 = vmatpush1.msra.mxu0 0.0
        %2707 = vmatprep.subr.mxu0 0.0
        %2708 = vmatpush1.msra.mxu0 0.0
        %2709 = vmatprep.subr.mxu0 0.0
        %2710 = vmatpush1.msra.mxu0 0.0
        %2711 = vmatprep.subr.mxu0 0.0
        %2712 = vmatpush1.msra.mxu0 %v2694
        %2713 = vmatprep.subr.mxu0 0.0
        %2714 = vmatpush1.msra.mxu0 %v2693
        %2715 = vmatprep.subr.mxu0 0.0
        %2716 = vmatpush1.msra.mxu0 %v2692
        %2717 = vmatprep.subr.mxu0 0.0
        %2718 = vmatpush1.msra.mxu0 %v2691
        %2719 = vmatprep.subr.mxu0 0.0
        %2720 = vmatpush1.msra.mxu0 %v2690
        %2721 = vmatprep.subr.mxu0 0.0
        %2722 = vmatpush1.msra.mxu0 %v2689
        %2723 = vmatprep.subr.mxu0 0.0
        %2724 = vmatpush1.msra.mxu0 %v2688
        %2725 = vmatprep.subr.mxu0 0.0
        %2726 = vmatpush1.msra.mxu0 %v2687
        %2727 = vmatprep.subr.mxu0 0.0
        %2728 = vmatpush2.msra.mxu0 0.0
        %2729 = vmatprep.subr.mxu0 0.0
        %2730 = vmatpush2.msra.mxu0 0.0
        %2731 = vmatprep.subr.mxu0 0.0
        %2732 = vmatpush2.msra.mxu0 0.0
        %2733 = vmatprep.subr.mxu0 0.0
        %2734 = vmatpush2.msra.mxu0 0.0
        %2735 = vmatprep.subr.mxu0 0.0
        %2736 = vmatpush2.msra.mxu0 0.0
        %2737 = vmatprep.subr.mxu0 0.0
        %2738 = vmatpush2.msra.mxu0 0.0
        %2739 = vmatprep.subr.mxu0 0.0
        %2740 = vmatpush2.msra.mxu0 0.0
        %2741 = vmatprep.subr.mxu0 0.0
        %2742 = vmatpush2.msra.mxu0 0.0
        %2743 = vmatprep.subr.mxu0 0.0
        %2744 = vmatpush2.msra.mxu0 0.0
        %2745 = vmatprep.subr.mxu0 0.0
        %2746 = vmatpush2.msra.mxu0 0.0
        %2747 = vmatprep.subr.mxu0 0.0
        %2748 = vmatpush2.msra.mxu0 0.0
        %2749 = vmatprep.subr.mxu0 0.0
        %2750 = vmatpush2.msra.mxu0 0.0
        %2751 = vmatprep.subr.mxu0 0.0
        %2752 = vmatpush2.msra.mxu0 0.0
        %2753 = vmatprep.subr.mxu0 0.0
        %2754 = vmatpush2.msra.mxu0 0.0
        %2755 = vmatprep.subr.mxu0 0.0
        %2756 = vmatpush2.msra.mxu0 0.0
        %2757 = vmatprep.subr.mxu0 0.0
        %2758 = vmatpush2.msra.mxu0 0.0
        %2759 = vmatprep.mubr.f32.mxu0 0.0
        %2760 = vmatmul.mubr.f32.gmra.mxu0 %v2538
        %v2761 = vpop.f32.mrf.mxu0
        %v2762 = vadd.f32 0.0, %v2761
        %v2763 = vpop.f32.mrf.mxu0
        %2764 = vdwg.mxu0
        %v2766 = vsel %vm1675, %v2685, 0
        %2768 = vmatprep.subr.mxu0 0.0
        %2769 = vmatpush1.msra.mxu0 0.0
        %2770 = vmatprep.subr.mxu0 0.0
        %2771 = vmatpush1.msra.mxu0 0.0
        %2772 = vmatprep.subr.mxu0 0.0
        %2773 = vmatpush1.msra.mxu0 0.0
        %2774 = vmatprep.subr.mxu0 0.0
        %2775 = vmatpush1.msra.mxu0 0.0
        %2776 = vmatprep.subr.mxu0 0.0
        %2777 = vmatpush1.msra.mxu0 0.0
        %2778 = vmatprep.subr.mxu0 0.0
        %2779 = vmatpush1.msra.mxu0 0.0
        %2780 = vmatprep.subr.mxu0 0.0
        %2781 = vmatpush1.msra.mxu0 0.0
        %2782 = vmatprep.subr.mxu0 0.0
        %2783 = vmatpush1.msra.mxu0 0.0
        %2784 = vmatprep.subr.mxu0 0.0
        %2785 = vmatpush1.msra.mxu0 0.0
        %2786 = vmatprep.subr.mxu0 0.0
        %2787 = vmatpush1.msra.mxu0 0.0
        %2788 = vmatprep.subr.mxu0 0.0
        %2789 = vmatpush1.msra.mxu0 0.0
        %2790 = vmatprep.subr.mxu0 0.0
        %2791 = vmatpush1.msra.mxu0 0.0
        %2792 = vmatprep.subr.mxu0 0.0
        %2793 = vmatpush1.msra.mxu0 0.0
        %2794 = vmatprep.subr.mxu0 0.0
        %2795 = vmatpush1.msra.mxu0 0.0
        %2796 = vmatprep.subr.mxu0 0.0
        %2797 = vmatpush1.msra.mxu0 0.0
        %2798 = vmatprep.subr.mxu0 0.0
        %2799 = vmatpush1.msra.mxu0 %v2762
        %2800 = vmatprep.subr.mxu0 0.0
        %2801 = vmatpush2.msra.mxu0 0.0
        %2802 = vmatprep.subr.mxu0 0.0
        %2803 = vmatpush2.msra.mxu0 0.0
        %2804 = vmatprep.subr.mxu0 0.0
        %2805 = vmatpush2.msra.mxu0 0.0
        %2806 = vmatprep.subr.mxu0 0.0
        %2807 = vmatpush2.msra.mxu0 0.0
        %2808 = vmatprep.subr.mxu0 0.0
        %2809 = vmatpush2.msra.mxu0 0.0
        %2810 = vmatprep.subr.mxu0 0.0
        %2811 = vmatpush2.msra.mxu0 0.0
        %2812 = vmatprep.subr.mxu0 0.0
        %2813 = vmatpush2.msra.mxu0 0.0
        %2814 = vmatprep.subr.mxu0 0.0
        %2815 = vmatpush2.msra.mxu0 0.0
        %2816 = vmatprep.subr.mxu0 0.0
        %2817 = vmatpush2.msra.mxu0 0.0
        %2818 = vmatprep.subr.mxu0 0.0
        %2819 = vmatpush2.msra.mxu0 0.0
        %2820 = vmatprep.subr.mxu0 0.0
        %2821 = vmatpush2.msra.mxu0 0.0
        %2822 = vmatprep.subr.mxu0 0.0
        %2823 = vmatpush2.msra.mxu0 0.0
        %2824 = vmatprep.subr.mxu0 0.0
        %2825 = vmatpush2.msra.mxu0 0.0
        %2826 = vmatprep.subr.mxu0 0.0
        %2827 = vmatpush2.msra.mxu0 0.0
        %2828 = vmatprep.subr.mxu0 0.0
        %2829 = vmatpush2.msra.mxu0 0.0
        %2830 = vmatprep.subr.mxu0 0.0
        %2831 = vmatpush2.msra.mxu0 0.0
        %2832 = vmatprep.mubr.f32.mxu0 0.0
        %2833 = vmatmul.mubr.f32.gmra.mxu0 %v2766
        %v2834 = vpop.f32.mrf.mxu0
        %v2835 = vadd.f32 0.0, %v2834
        %v2836 = vpop.f32.mrf.mxu0
        %2837 = vdwg.mxu0
        %v2838 = vadd.f32 %v2683, %v2835
        %s2839 = scalar_lea.vmem [#allocation16], 16
        %v2840 = vld [vmem:[%s2839] sm:$0xff]
        %s2841 = scalar_lea.vmem %s11, 128
        %v2842 = vld [vmem:[%s2841] sm:$0xff]
        %v2843 = vld [vmem:[%s2841 + $0x8] sm:$0xff]
        %v2844 = vld [vmem:[%s2841 + $0x10] sm:$0xff]
        %v2845 = vld [vmem:[%s2841 + $0x18] sm:$0xff]
        %v2846 = vld [vmem:[%s2841 + $0x20] sm:$0xff]
        %v2847 = vld [vmem:[%s2841 + $0x28] sm:$0xff]
        %v2848 = vld [vmem:[%s2841 + $0x30] sm:$0xff]
        %v2849 = vld [vmem:[%s2841 + $0x38] sm:$0xff]
        %2850 = vmatprep.subr.mxu0 0.0
        %2851 = vmatpush1.msra.mxu0 0.0
        %2852 = vmatprep.subr.mxu0 0.0
        %2853 = vmatpush1.msra.mxu0 0.0
        %2854 = vmatprep.subr.mxu0 0.0
        %2855 = vmatpush1.msra.mxu0 0.0
        %2856 = vmatprep.subr.mxu0 0.0
        %2857 = vmatpush1.msra.mxu0 0.0
        %2858 = vmatprep.subr.mxu0 0.0
        %2859 = vmatpush1.msra.mxu0 0.0
        %2860 = vmatprep.subr.mxu0 0.0
        %2861 = vmatpush1.msra.mxu0 0.0
        %2862 = vmatprep.subr.mxu0 0.0
        %2863 = vmatpush1.msra.mxu0 0.0
        %2864 = vmatprep.subr.mxu0 0.0
        %2865 = vmatpush1.msra.mxu0 0.0
        %2866 = vmatprep.subr.mxu0 0.0
        %2867 = vmatpush1.msra.mxu0 %v2849
        %2868 = vmatprep.subr.mxu0 0.0
        %2869 = vmatpush1.msra.mxu0 %v2848
        %2870 = vmatprep.subr.mxu0 0.0
        %2871 = vmatpush1.msra.mxu0 %v2847
        %2872 = vmatprep.subr.mxu0 0.0
        %2873 = vmatpush1.msra.mxu0 %v2846
        %2874 = vmatprep.subr.mxu0 0.0
        %2875 = vmatpush1.msra.mxu0 %v2845
        %2876 = vmatprep.subr.mxu0 0.0
        %2877 = vmatpush1.msra.mxu0 %v2844
        %2878 = vmatprep.subr.mxu0 0.0
        %2879 = vmatpush1.msra.mxu0 %v2843
        %2880 = vmatprep.subr.mxu0 0.0
        %2881 = vmatpush1.msra.mxu0 %v2842
        %2882 = vmatprep.subr.mxu0 0.0
        %2883 = vmatpush2.msra.mxu0 0.0
        %2884 = vmatprep.subr.mxu0 0.0
        %2885 = vmatpush2.msra.mxu0 0.0
        %2886 = vmatprep.subr.mxu0 0.0
        %2887 = vmatpush2.msra.mxu0 0.0
        %2888 = vmatprep.subr.mxu0 0.0
        %2889 = vmatpush2.msra.mxu0 0.0
        %2890 = vmatprep.subr.mxu0 0.0
        %2891 = vmatpush2.msra.mxu0 0.0
        %2892 = vmatprep.subr.mxu0 0.0
        %2893 = vmatpush2.msra.mxu0 0.0
        %2894 = vmatprep.subr.mxu0 0.0
        %2895 = vmatpush2.msra.mxu0 0.0
        %2896 = vmatprep.subr.mxu0 0.0
        %2897 = vmatpush2.msra.mxu0 0.0
        %2898 = vmatprep.subr.mxu0 0.0
        %2899 = vmatpush2.msra.mxu0 0.0
        %2900 = vmatprep.subr.mxu0 0.0
        %2901 = vmatpush2.msra.mxu0 0.0
        %2902 = vmatprep.subr.mxu0 0.0
        %2903 = vmatpush2.msra.mxu0 0.0
        %2904 = vmatprep.subr.mxu0 0.0
        %2905 = vmatpush2.msra.mxu0 0.0
        %2906 = vmatprep.subr.mxu0 0.0
        %2907 = vmatpush2.msra.mxu0 0.0
        %2908 = vmatprep.subr.mxu0 0.0
        %2909 = vmatpush2.msra.mxu0 0.0
        %2910 = vmatprep.subr.mxu0 0.0
        %2911 = vmatpush2.msra.mxu0 0.0
        %2912 = vmatprep.subr.mxu0 0.0
        %2913 = vmatpush2.msra.mxu0 0.0
        %2914 = vmatprep.mubr.f32.mxu0 0.0
        %2915 = vmatmul.mubr.f32.gmra.mxu0 %v2538
        %v2916 = vpop.f32.mrf.mxu0
        %v2917 = vadd.f32 0.0, %v2916
        %v2918 = vpop.f32.mrf.mxu0
        %2919 = vdwg.mxu0
        %v2921 = vsel %vm1675, %v2840, 0
        %2923 = vmatprep.subr.mxu0 0.0
        %2924 = vmatpush1.msra.mxu0 0.0
        %2925 = vmatprep.subr.mxu0 0.0
        %2926 = vmatpush1.msra.mxu0 0.0
        %2927 = vmatprep.subr.mxu0 0.0
        %2928 = vmatpush1.msra.mxu0 0.0
        %2929 = vmatprep.subr.mxu0 0.0
        %2930 = vmatpush1.msra.mxu0 0.0
        %2931 = vmatprep.subr.mxu0 0.0
        %2932 = vmatpush1.msra.mxu0 0.0
        %2933 = vmatprep.subr.mxu0 0.0
        %2934 = vmatpush1.msra.mxu0 0.0
        %2935 = vmatprep.subr.mxu0 0.0
        %2936 = vmatpush1.msra.mxu0 0.0
        %2937 = vmatprep.subr.mxu0 0.0
        %2938 = vmatpush1.msra.mxu0 0.0
        %2939 = vmatprep.subr.mxu0 0.0
        %2940 = vmatpush1.msra.mxu0 0.0
        %2941 = vmatprep.subr.mxu0 0.0
        %2942 = vmatpush1.msra.mxu0 0.0
        %2943 = vmatprep.subr.mxu0 0.0
        %2944 = vmatpush1.msra.mxu0 0.0
        %2945 = vmatprep.subr.mxu0 0.0
        %2946 = vmatpush1.msra.mxu0 0.0
        %2947 = vmatprep.subr.mxu0 0.0
        %2948 = vmatpush1.msra.mxu0 0.0
        %2949 = vmatprep.subr.mxu0 0.0
        %2950 = vmatpush1.msra.mxu0 0.0
        %2951 = vmatprep.subr.mxu0 0.0
        %2952 = vmatpush1.msra.mxu0 0.0
        %2953 = vmatprep.subr.mxu0 0.0
        %2954 = vmatpush1.msra.mxu0 %v2917
        %2955 = vmatprep.subr.mxu0 0.0
        %2956 = vmatpush2.msra.mxu0 0.0
        %2957 = vmatprep.subr.mxu0 0.0
        %2958 = vmatpush2.msra.mxu0 0.0
        %2959 = vmatprep.subr.mxu0 0.0
        %2960 = vmatpush2.msra.mxu0 0.0
        %2961 = vmatprep.subr.mxu0 0.0
        %2962 = vmatpush2.msra.mxu0 0.0
        %2963 = vmatprep.subr.mxu0 0.0
        %2964 = vmatpush2.msra.mxu0 0.0
        %2965 = vmatprep.subr.mxu0 0.0
        %2966 = vmatpush2.msra.mxu0 0.0
        %2967 = vmatprep.subr.mxu0 0.0
        %2968 = vmatpush2.msra.mxu0 0.0
        %2969 = vmatprep.subr.mxu0 0.0
        %2970 = vmatpush2.msra.mxu0 0.0
        %2971 = vmatprep.subr.mxu0 0.0
        %2972 = vmatpush2.msra.mxu0 0.0
        %2973 = vmatprep.subr.mxu0 0.0
        %2974 = vmatpush2.msra.mxu0 0.0
        %2975 = vmatprep.subr.mxu0 0.0
        %2976 = vmatpush2.msra.mxu0 0.0
        %2977 = vmatprep.subr.mxu0 0.0
        %2978 = vmatpush2.msra.mxu0 0.0
        %2979 = vmatprep.subr.mxu0 0.0
        %2980 = vmatpush2.msra.mxu0 0.0
        %2981 = vmatprep.subr.mxu0 0.0
        %2982 = vmatpush2.msra.mxu0 0.0
        %2983 = vmatprep.subr.mxu0 0.0
        %2984 = vmatpush2.msra.mxu0 0.0
        %2985 = vmatprep.subr.mxu0 0.0
        %2986 = vmatpush2.msra.mxu0 0.0
        %2987 = vmatprep.mubr.f32.mxu0 0.0
        %2988 = vmatmul.mubr.f32.gmra.mxu0 %v2921
        %v2989 = vpop.f32.mrf.mxu0
        %v2990 = vadd.f32 0.0, %v2989
        %v2991 = vpop.f32.mrf.mxu0
        %2992 = vdwg.mxu0
        %v2993 = vadd.f32 %v2838, %v2990
        %s2994 = scalar_lea.vmem [#allocation16], 24
        %v2995 = vld [vmem:[%s2994] sm:$0xff]
        %s2996 = scalar_lea.vmem %s11, 192
        %v2997 = vld [vmem:[%s2996] sm:$0xff]
        %v2998 = vld [vmem:[%s2996 + $0x8] sm:$0xff]
        %v2999 = vld [vmem:[%s2996 + $0x10] sm:$0xff]
        %v3000 = vld [vmem:[%s2996 + $0x18] sm:$0xff]
        %v3001 = vld [vmem:[%s2996 + $0x20] sm:$0xff]
        %v3002 = vld [vmem:[%s2996 + $0x28] sm:$0xff]
        %v3003 = vld [vmem:[%s2996 + $0x30] sm:$0xff]
        %v3004 = vld [vmem:[%s2996 + $0x38] sm:$0xff]
        %3005 = vmatprep.subr.mxu0 0.0
        %3006 = vmatpush1.msra.mxu0 0.0
        %3007 = vmatprep.subr.mxu0 0.0
        %3008 = vmatpush1.msra.mxu0 0.0
        %3009 = vmatprep.subr.mxu0 0.0
        %3010 = vmatpush1.msra.mxu0 0.0
        %3011 = vmatprep.subr.mxu0 0.0
        %3012 = vmatpush1.msra.mxu0 0.0
        %3013 = vmatprep.subr.mxu0 0.0
        %3014 = vmatpush1.msra.mxu0 0.0
        %3015 = vmatprep.subr.mxu0 0.0
        %3016 = vmatpush1.msra.mxu0 0.0
        %3017 = vmatprep.subr.mxu0 0.0
        %3018 = vmatpush1.msra.mxu0 0.0
        %3019 = vmatprep.subr.mxu0 0.0
        %3020 = vmatpush1.msra.mxu0 0.0
        %3021 = vmatprep.subr.mxu0 0.0
        %3022 = vmatpush1.msra.mxu0 %v3004
        %3023 = vmatprep.subr.mxu0 0.0
        %3024 = vmatpush1.msra.mxu0 %v3003
        %3025 = vmatprep.subr.mxu0 0.0
        %3026 = vmatpush1.msra.mxu0 %v3002
        %3027 = vmatprep.subr.mxu0 0.0
        %3028 = vmatpush1.msra.mxu0 %v3001
        %3029 = vmatprep.subr.mxu0 0.0
        %3030 = vmatpush1.msra.mxu0 %v3000
        %3031 = vmatprep.subr.mxu0 0.0
        %3032 = vmatpush1.msra.mxu0 %v2999
        %3033 = vmatprep.subr.mxu0 0.0
        %3034 = vmatpush1.msra.mxu0 %v2998
        %3035 = vmatprep.subr.mxu0 0.0
        %3036 = vmatpush1.msra.mxu0 %v2997
        %3037 = vmatprep.subr.mxu0 0.0
        %3038 = vmatpush2.msra.mxu0 0.0
        %3039 = vmatprep.subr.mxu0 0.0
        %3040 = vmatpush2.msra.mxu0 0.0
        %3041 = vmatprep.subr.mxu0 0.0
        %3042 = vmatpush2.msra.mxu0 0.0
        %3043 = vmatprep.subr.mxu0 0.0
        %3044 = vmatpush2.msra.mxu0 0.0
        %3045 = vmatprep.subr.mxu0 0.0
        %3046 = vmatpush2.msra.mxu0 0.0
        %3047 = vmatprep.subr.mxu0 0.0
        %3048 = vmatpush2.msra.mxu0 0.0
        %3049 = vmatprep.subr.mxu0 0.0
        %3050 = vmatpush2.msra.mxu0 0.0
        %3051 = vmatprep.subr.mxu0 0.0
        %3052 = vmatpush2.msra.mxu0 0.0
        %3053 = vmatprep.subr.mxu0 0.0
        %3054 = vmatpush2.msra.mxu0 0.0
        %3055 = vmatprep.subr.mxu0 0.0
        %3056 = vmatpush2.msra.mxu0 0.0
        %3057 = vmatprep.subr.mxu0 0.0
        %3058 = vmatpush2.msra.mxu0 0.0
        %3059 = vmatprep.subr.mxu0 0.0
        %3060 = vmatpush2.msra.mxu0 0.0
        %3061 = vmatprep.subr.mxu0 0.0
        %3062 = vmatpush2.msra.mxu0 0.0
        %3063 = vmatprep.subr.mxu0 0.0
        %3064 = vmatpush2.msra.mxu0 0.0
        %3065 = vmatprep.subr.mxu0 0.0
        %3066 = vmatpush2.msra.mxu0 0.0
        %3067 = vmatprep.subr.mxu0 0.0
        %3068 = vmatpush2.msra.mxu0 0.0
        %3069 = vmatprep.mubr.f32.mxu0 0.0
        %3070 = vmatmul.mubr.f32.gmra.mxu0 %v2538
        %v3071 = vpop.f32.mrf.mxu0
        %v3072 = vadd.f32 0.0, %v3071
        %v3073 = vpop.f32.mrf.mxu0
        %3074 = vdwg.mxu0
        %v3076 = vsel %vm1675, %v2995, 0
        %3078 = vmatprep.subr.mxu0 0.0
        %3079 = vmatpush1.msra.mxu0 0.0
        %3080 = vmatprep.subr.mxu0 0.0
        %3081 = vmatpush1.msra.mxu0 0.0
        %3082 = vmatprep.subr.mxu0 0.0
        %3083 = vmatpush1.msra.mxu0 0.0
        %3084 = vmatprep.subr.mxu0 0.0
        %3085 = vmatpush1.msra.mxu0 0.0
        %3086 = vmatprep.subr.mxu0 0.0
        %3087 = vmatpush1.msra.mxu0 0.0
        %3088 = vmatprep.subr.mxu0 0.0
        %3089 = vmatpush1.msra.mxu0 0.0
        %3090 = vmatprep.subr.mxu0 0.0
        %3091 = vmatpush1.msra.mxu0 0.0
        %3092 = vmatprep.subr.mxu0 0.0
        %3093 = vmatpush1.msra.mxu0 0.0
        %3094 = vmatprep.subr.mxu0 0.0
        %3095 = vmatpush1.msra.mxu0 0.0
        %3096 = vmatprep.subr.mxu0 0.0
        %3097 = vmatpush1.msra.mxu0 0.0
        %3098 = vmatprep.subr.mxu0 0.0
        %3099 = vmatpush1.msra.mxu0 0.0
        %3100 = vmatprep.subr.mxu0 0.0
        %3101 = vmatpush1.msra.mxu0 0.0
        %3102 = vmatprep.subr.mxu0 0.0
        %3103 = vmatpush1.msra.mxu0 0.0
        %3104 = vmatprep.subr.mxu0 0.0
        %3105 = vmatpush1.msra.mxu0 0.0
        %3106 = vmatprep.subr.mxu0 0.0
        %3107 = vmatpush1.msra.mxu0 0.0
        %3108 = vmatprep.subr.mxu0 0.0
        %3109 = vmatpush1.msra.mxu0 %v3072
        %3110 = vmatprep.subr.mxu0 0.0
        %3111 = vmatpush2.msra.mxu0 0.0
        %3112 = vmatprep.subr.mxu0 0.0
        %3113 = vmatpush2.msra.mxu0 0.0
        %3114 = vmatprep.subr.mxu0 0.0
        %3115 = vmatpush2.msra.mxu0 0.0
        %3116 = vmatprep.subr.mxu0 0.0
        %3117 = vmatpush2.msra.mxu0 0.0
        %3118 = vmatprep.subr.mxu0 0.0
        %3119 = vmatpush2.msra.mxu0 0.0
        %3120 = vmatprep.subr.mxu0 0.0
        %3121 = vmatpush2.msra.mxu0 0.0
        %3122 = vmatprep.subr.mxu0 0.0
        %3123 = vmatpush2.msra.mxu0 0.0
        %3124 = vmatprep.subr.mxu0 0.0
        %3125 = vmatpush2.msra.mxu0 0.0
        %3126 = vmatprep.subr.mxu0 0.0
        %3127 = vmatpush2.msra.mxu0 0.0
        %3128 = vmatprep.subr.mxu0 0.0
        %3129 = vmatpush2.msra.mxu0 0.0
        %3130 = vmatprep.subr.mxu0 0.0
        %3131 = vmatpush2.msra.mxu0 0.0
        %3132 = vmatprep.subr.mxu0 0.0
        %3133 = vmatpush2.msra.mxu0 0.0
        %3134 = vmatprep.subr.mxu0 0.0
        %3135 = vmatpush2.msra.mxu0 0.0
        %3136 = vmatprep.subr.mxu0 0.0
        %3137 = vmatpush2.msra.mxu0 0.0
        %3138 = vmatprep.subr.mxu0 0.0
        %3139 = vmatpush2.msra.mxu0 0.0
        %3140 = vmatprep.subr.mxu0 0.0
        %3141 = vmatpush2.msra.mxu0 0.0
        %3142 = vmatprep.mubr.f32.mxu0 0.0
        %3143 = vmatmul.mubr.f32.gmra.mxu0 %v3076
        %v3144 = vpop.f32.mrf.mxu0
        %v3145 = vadd.f32 0.0, %v3144
        %v3146 = vpop.f32.mrf.mxu0
        %3147 = vdwg.mxu0
        %v3148 = vadd.f32 %v2993, %v3145
        %s3149 = scalar_lea.vmem [#allocation16], 32
        %v3150 = vld [vmem:[%s3149] sm:$0xff]
        %s3151 = scalar_lea.vmem %s11, 256
        %v3152 = vld [vmem:[%s3151] sm:$0xff]
        %v3153 = vld [vmem:[%s3151 + $0x8] sm:$0xff]
        %v3154 = vld [vmem:[%s3151 + $0x10] sm:$0xff]
        %v3155 = vld [vmem:[%s3151 + $0x18] sm:$0xff]
        %v3156 = vld [vmem:[%s3151 + $0x20] sm:$0xff]
        %v3157 = vld [vmem:[%s3151 + $0x28] sm:$0xff]
        %v3158 = vld [vmem:[%s3151 + $0x30] sm:$0xff]
        %v3159 = vld [vmem:[%s3151 + $0x38] sm:$0xff]
        %3160 = vmatprep.subr.mxu0 0.0
        %3161 = vmatpush1.msra.mxu0 0.0
        %3162 = vmatprep.subr.mxu0 0.0
        %3163 = vmatpush1.msra.mxu0 0.0
        %3164 = vmatprep.subr.mxu0 0.0
        %3165 = vmatpush1.msra.mxu0 0.0
        %3166 = vmatprep.subr.mxu0 0.0
        %3167 = vmatpush1.msra.mxu0 0.0
        %3168 = vmatprep.subr.mxu0 0.0
        %3169 = vmatpush1.msra.mxu0 0.0
        %3170 = vmatprep.subr.mxu0 0.0
        %3171 = vmatpush1.msra.mxu0 0.0
        %3172 = vmatprep.subr.mxu0 0.0
        %3173 = vmatpush1.msra.mxu0 0.0
        %3174 = vmatprep.subr.mxu0 0.0
        %3175 = vmatpush1.msra.mxu0 0.0
        %3176 = vmatprep.subr.mxu0 0.0
        %3177 = vmatpush1.msra.mxu0 %v3159
        %3178 = vmatprep.subr.mxu0 0.0
        %3179 = vmatpush1.msra.mxu0 %v3158
        %3180 = vmatprep.subr.mxu0 0.0
        %3181 = vmatpush1.msra.mxu0 %v3157
        %3182 = vmatprep.subr.mxu0 0.0
        %3183 = vmatpush1.msra.mxu0 %v3156
        %3184 = vmatprep.subr.mxu0 0.0
        %3185 = vmatpush1.msra.mxu0 %v3155
        %3186 = vmatprep.subr.mxu0 0.0
        %3187 = vmatpush1.msra.mxu0 %v3154
        %3188 = vmatprep.subr.mxu0 0.0
        %3189 = vmatpush1.msra.mxu0 %v3153
        %3190 = vmatprep.subr.mxu0 0.0
        %3191 = vmatpush1.msra.mxu0 %v3152
        %3192 = vmatprep.subr.mxu0 0.0
        %3193 = vmatpush2.msra.mxu0 0.0
        %3194 = vmatprep.subr.mxu0 0.0
        %3195 = vmatpush2.msra.mxu0 0.0
        %3196 = vmatprep.subr.mxu0 0.0
        %3197 = vmatpush2.msra.mxu0 0.0
        %3198 = vmatprep.subr.mxu0 0.0
        %3199 = vmatpush2.msra.mxu0 0.0
        %3200 = vmatprep.subr.mxu0 0.0
        %3201 = vmatpush2.msra.mxu0 0.0
        %3202 = vmatprep.subr.mxu0 0.0
        %3203 = vmatpush2.msra.mxu0 0.0
        %3204 = vmatprep.subr.mxu0 0.0
        %3205 = vmatpush2.msra.mxu0 0.0
        %3206 = vmatprep.subr.mxu0 0.0
        %3207 = vmatpush2.msra.mxu0 0.0
        %3208 = vmatprep.subr.mxu0 0.0
        %3209 = vmatpush2.msra.mxu0 0.0
        %3210 = vmatprep.subr.mxu0 0.0
        %3211 = vmatpush2.msra.mxu0 0.0
        %3212 = vmatprep.subr.mxu0 0.0
        %3213 = vmatpush2.msra.mxu0 0.0
        %3214 = vmatprep.subr.mxu0 0.0
        %3215 = vmatpush2.msra.mxu0 0.0
        %3216 = vmatprep.subr.mxu0 0.0
        %3217 = vmatpush2.msra.mxu0 0.0
        %3218 = vmatprep.subr.mxu0 0.0
        %3219 = vmatpush2.msra.mxu0 0.0
        %3220 = vmatprep.subr.mxu0 0.0
        %3221 = vmatpush2.msra.mxu0 0.0
        %3222 = vmatprep.subr.mxu0 0.0
        %3223 = vmatpush2.msra.mxu0 0.0
        %3224 = vmatprep.mubr.f32.mxu0 0.0
        %3225 = vmatmul.mubr.f32.gmra.mxu0 %v2538
        %v3226 = vpop.f32.mrf.mxu0
        %v3227 = vadd.f32 0.0, %v3226
        %v3228 = vpop.f32.mrf.mxu0
        %3229 = vdwg.mxu0
        %v3231 = vsel %vm1675, %v3150, 0
        %3233 = vmatprep.subr.mxu0 0.0
        %3234 = vmatpush1.msra.mxu0 0.0
        %3235 = vmatprep.subr.mxu0 0.0
        %3236 = vmatpush1.msra.mxu0 0.0
        %3237 = vmatprep.subr.mxu0 0.0
        %3238 = vmatpush1.msra.mxu0 0.0
        %3239 = vmatprep.subr.mxu0 0.0
        %3240 = vmatpush1.msra.mxu0 0.0
        %3241 = vmatprep.subr.mxu0 0.0
        %3242 = vmatpush1.msra.mxu0 0.0
        %3243 = vmatprep.subr.mxu0 0.0
        %3244 = vmatpush1.msra.mxu0 0.0
        %3245 = vmatprep.subr.mxu0 0.0
        %3246 = vmatpush1.msra.mxu0 0.0
        %3247 = vmatprep.subr.mxu0 0.0
        %3248 = vmatpush1.msra.mxu0 0.0
        %3249 = vmatprep.subr.mxu0 0.0
        %3250 = vmatpush1.msra.mxu0 0.0
        %3251 = vmatprep.subr.mxu0 0.0
        %3252 = vmatpush1.msra.mxu0 0.0
        %3253 = vmatprep.subr.mxu0 0.0
        %3254 = vmatpush1.msra.mxu0 0.0
        %3255 = vmatprep.subr.mxu0 0.0
        %3256 = vmatpush1.msra.mxu0 0.0
        %3257 = vmatprep.subr.mxu0 0.0
        %3258 = vmatpush1.msra.mxu0 0.0
        %3259 = vmatprep.subr.mxu0 0.0
        %3260 = vmatpush1.msra.mxu0 0.0
        %3261 = vmatprep.subr.mxu0 0.0
        %3262 = vmatpush1.msra.mxu0 0.0
        %3263 = vmatprep.subr.mxu0 0.0
        %3264 = vmatpush1.msra.mxu0 %v3227
        %3265 = vmatprep.subr.mxu0 0.0
        %3266 = vmatpush2.msra.mxu0 0.0
        %3267 = vmatprep.subr.mxu0 0.0
        %3268 = vmatpush2.msra.mxu0 0.0
        %3269 = vmatprep.subr.mxu0 0.0
        %3270 = vmatpush2.msra.mxu0 0.0
        %3271 = vmatprep.subr.mxu0 0.0
        %3272 = vmatpush2.msra.mxu0 0.0
        %3273 = vmatprep.subr.mxu0 0.0
        %3274 = vmatpush2.msra.mxu0 0.0
        %3275 = vmatprep.subr.mxu0 0.0
        %3276 = vmatpush2.msra.mxu0 0.0
        %3277 = vmatprep.subr.mxu0 0.0
        %3278 = vmatpush2.msra.mxu0 0.0
        %3279 = vmatprep.subr.mxu0 0.0
        %3280 = vmatpush2.msra.mxu0 0.0
        %3281 = vmatprep.subr.mxu0 0.0
        %3282 = vmatpush2.msra.mxu0 0.0
        %3283 = vmatprep.subr.mxu0 0.0
        %3284 = vmatpush2.msra.mxu0 0.0
        %3285 = vmatprep.subr.mxu0 0.0
        %3286 = vmatpush2.msra.mxu0 0.0
        %3287 = vmatprep.subr.mxu0 0.0
        %3288 = vmatpush2.msra.mxu0 0.0
        %3289 = vmatprep.subr.mxu0 0.0
        %3290 = vmatpush2.msra.mxu0 0.0
        %3291 = vmatprep.subr.mxu0 0.0
        %3292 = vmatpush2.msra.mxu0 0.0
        %3293 = vmatprep.subr.mxu0 0.0
        %3294 = vmatpush2.msra.mxu0 0.0
        %3295 = vmatprep.subr.mxu0 0.0
        %3296 = vmatpush2.msra.mxu0 0.0
        %3297 = vmatprep.mubr.f32.mxu0 0.0
        %3298 = vmatmul.mubr.f32.gmra.mxu0 %v3231
        %v3299 = vpop.f32.mrf.mxu0
        %v3300 = vadd.f32 0.0, %v3299
        %v3301 = vpop.f32.mrf.mxu0
        %3302 = vdwg.mxu0
        %v3303 = vadd.f32 %v3148, %v3300
        %s3304 = scalar_lea.vmem [#allocation16], 40
        %v3305 = vld [vmem:[%s3304] sm:$0xff]
        %s3306 = scalar_lea.vmem %s11, 320
        %v3307 = vld [vmem:[%s3306] sm:$0xff]
        %v3308 = vld [vmem:[%s3306 + $0x8] sm:$0xff]
        %v3309 = vld [vmem:[%s3306 + $0x10] sm:$0xff]
        %v3310 = vld [vmem:[%s3306 + $0x18] sm:$0xff]
        %v3311 = vld [vmem:[%s3306 + $0x20] sm:$0xff]
        %v3312 = vld [vmem:[%s3306 + $0x28] sm:$0xff]
        %v3313 = vld [vmem:[%s3306 + $0x30] sm:$0xff]
        %v3314 = vld [vmem:[%s3306 + $0x38] sm:$0xff]
        %3315 = vmatprep.subr.mxu0 0.0
        %3316 = vmatpush1.msra.mxu0 0.0
        %3317 = vmatprep.subr.mxu0 0.0
        %3318 = vmatpush1.msra.mxu0 0.0
        %3319 = vmatprep.subr.mxu0 0.0
        %3320 = vmatpush1.msra.mxu0 0.0
        %3321 = vmatprep.subr.mxu0 0.0
        %3322 = vmatpush1.msra.mxu0 0.0
        %3323 = vmatprep.subr.mxu0 0.0
        %3324 = vmatpush1.msra.mxu0 0.0
        %3325 = vmatprep.subr.mxu0 0.0
        %3326 = vmatpush1.msra.mxu0 0.0
        %3327 = vmatprep.subr.mxu0 0.0
        %3328 = vmatpush1.msra.mxu0 0.0
        %3329 = vmatprep.subr.mxu0 0.0
        %3330 = vmatpush1.msra.mxu0 0.0
        %3331 = vmatprep.subr.mxu0 0.0
        %3332 = vmatpush1.msra.mxu0 %v3314
        %3333 = vmatprep.subr.mxu0 0.0
        %3334 = vmatpush1.msra.mxu0 %v3313
        %3335 = vmatprep.subr.mxu0 0.0
        %3336 = vmatpush1.msra.mxu0 %v3312
        %3337 = vmatprep.subr.mxu0 0.0
        %3338 = vmatpush1.msra.mxu0 %v3311
        %3339 = vmatprep.subr.mxu0 0.0
        %3340 = vmatpush1.msra.mxu0 %v3310
        %3341 = vmatprep.subr.mxu0 0.0
        %3342 = vmatpush1.msra.mxu0 %v3309
        %3343 = vmatprep.subr.mxu0 0.0
        %3344 = vmatpush1.msra.mxu0 %v3308
        %3345 = vmatprep.subr.mxu0 0.0
        %3346 = vmatpush1.msra.mxu0 %v3307
        %3347 = vmatprep.subr.mxu0 0.0
        %3348 = vmatpush2.msra.mxu0 0.0
        %3349 = vmatprep.subr.mxu0 0.0
        %3350 = vmatpush2.msra.mxu0 0.0
        %3351 = vmatprep.subr.mxu0 0.0
        %3352 = vmatpush2.msra.mxu0 0.0
        %3353 = vmatprep.subr.mxu0 0.0
        %3354 = vmatpush2.msra.mxu0 0.0
        %3355 = vmatprep.subr.mxu0 0.0
        %3356 = vmatpush2.msra.mxu0 0.0
        %3357 = vmatprep.subr.mxu0 0.0
        %3358 = vmatpush2.msra.mxu0 0.0
        %3359 = vmatprep.subr.mxu0 0.0
        %3360 = vmatpush2.msra.mxu0 0.0
        %3361 = vmatprep.subr.mxu0 0.0
        %3362 = vmatpush2.msra.mxu0 0.0
        %3363 = vmatprep.subr.mxu0 0.0
        %3364 = vmatpush2.msra.mxu0 0.0
        %3365 = vmatprep.subr.mxu0 0.0
        %3366 = vmatpush2.msra.mxu0 0.0
        %3367 = vmatprep.subr.mxu0 0.0
        %3368 = vmatpush2.msra.mxu0 0.0
        %3369 = vmatprep.subr.mxu0 0.0
        %3370 = vmatpush2.msra.mxu0 0.0
        %3371 = vmatprep.subr.mxu0 0.0
        %3372 = vmatpush2.msra.mxu0 0.0
        %3373 = vmatprep.subr.mxu0 0.0
        %3374 = vmatpush2.msra.mxu0 0.0
        %3375 = vmatprep.subr.mxu0 0.0
        %3376 = vmatpush2.msra.mxu0 0.0
        %3377 = vmatprep.subr.mxu0 0.0
        %3378 = vmatpush2.msra.mxu0 0.0
        %3379 = vmatprep.mubr.f32.mxu0 0.0
        %3380 = vmatmul.mubr.f32.gmra.mxu0 %v2538
        %v3381 = vpop.f32.mrf.mxu0
        %v3382 = vadd.f32 0.0, %v3381
        %v3383 = vpop.f32.mrf.mxu0
        %3384 = vdwg.mxu0
        %v3386 = vsel %vm1675, %v3305, 0
        %3388 = vmatprep.subr.mxu0 0.0
        %3389 = vmatpush1.msra.mxu0 0.0
        %3390 = vmatprep.subr.mxu0 0.0
        %3391 = vmatpush1.msra.mxu0 0.0
        %3392 = vmatprep.subr.mxu0 0.0
        %3393 = vmatpush1.msra.mxu0 0.0
        %3394 = vmatprep.subr.mxu0 0.0
        %3395 = vmatpush1.msra.mxu0 0.0
        %3396 = vmatprep.subr.mxu0 0.0
        %3397 = vmatpush1.msra.mxu0 0.0
        %3398 = vmatprep.subr.mxu0 0.0
        %3399 = vmatpush1.msra.mxu0 0.0
        %3400 = vmatprep.subr.mxu0 0.0
        %3401 = vmatpush1.msra.mxu0 0.0
        %3402 = vmatprep.subr.mxu0 0.0
        %3403 = vmatpush1.msra.mxu0 0.0
        %3404 = vmatprep.subr.mxu0 0.0
        %3405 = vmatpush1.msra.mxu0 0.0
        %3406 = vmatprep.subr.mxu0 0.0
        %3407 = vmatpush1.msra.mxu0 0.0
        %3408 = vmatprep.subr.mxu0 0.0
        %3409 = vmatpush1.msra.mxu0 0.0
        %3410 = vmatprep.subr.mxu0 0.0
        %3411 = vmatpush1.msra.mxu0 0.0
        %3412 = vmatprep.subr.mxu0 0.0
        %3413 = vmatpush1.msra.mxu0 0.0
        %3414 = vmatprep.subr.mxu0 0.0
        %3415 = vmatpush1.msra.mxu0 0.0
        %3416 = vmatprep.subr.mxu0 0.0
        %3417 = vmatpush1.msra.mxu0 0.0
        %3418 = vmatprep.subr.mxu0 0.0
        %3419 = vmatpush1.msra.mxu0 %v3382
        %3420 = vmatprep.subr.mxu0 0.0
        %3421 = vmatpush2.msra.mxu0 0.0
        %3422 = vmatprep.subr.mxu0 0.0
        %3423 = vmatpush2.msra.mxu0 0.0
        %3424 = vmatprep.subr.mxu0 0.0
        %3425 = vmatpush2.msra.mxu0 0.0
        %3426 = vmatprep.subr.mxu0 0.0
        %3427 = vmatpush2.msra.mxu0 0.0
        %3428 = vmatprep.subr.mxu0 0.0
        %3429 = vmatpush2.msra.mxu0 0.0
        %3430 = vmatprep.subr.mxu0 0.0
        %3431 = vmatpush2.msra.mxu0 0.0
        %3432 = vmatprep.subr.mxu0 0.0
        %3433 = vmatpush2.msra.mxu0 0.0
        %3434 = vmatprep.subr.mxu0 0.0
        %3435 = vmatpush2.msra.mxu0 0.0
        %3436 = vmatprep.subr.mxu0 0.0
        %3437 = vmatpush2.msra.mxu0 0.0
        %3438 = vmatprep.subr.mxu0 0.0
        %3439 = vmatpush2.msra.mxu0 0.0
        %3440 = vmatprep.subr.mxu0 0.0
        %3441 = vmatpush2.msra.mxu0 0.0
        %3442 = vmatprep.subr.mxu0 0.0
        %3443 = vmatpush2.msra.mxu0 0.0
        %3444 = vmatprep.subr.mxu0 0.0
        %3445 = vmatpush2.msra.mxu0 0.0
        %3446 = vmatprep.subr.mxu0 0.0
        %3447 = vmatpush2.msra.mxu0 0.0
        %3448 = vmatprep.subr.mxu0 0.0
        %3449 = vmatpush2.msra.mxu0 0.0
        %3450 = vmatprep.subr.mxu0 0.0
        %3451 = vmatpush2.msra.mxu0 0.0
        %3452 = vmatprep.mubr.f32.mxu0 0.0
        %3453 = vmatmul.mubr.f32.gmra.mxu0 %v3386
        %v3454 = vpop.f32.mrf.mxu0
        %v3455 = vadd.f32 0.0, %v3454
        %v3456 = vpop.f32.mrf.mxu0
        %3457 = vdwg.mxu0
        %v3458 = vadd.f32 %v3303, %v3455
        %s3459 = scalar_lea.vmem [#allocation16], 48
        %v3460 = vld [vmem:[%s3459] sm:$0xff]
        %s3461 = scalar_lea.vmem %s11, 384
        %v3462 = vld [vmem:[%s3461] sm:$0xff]
        %v3463 = vld [vmem:[%s3461 + $0x8] sm:$0xff]
        %v3464 = vld [vmem:[%s3461 + $0x10] sm:$0xff]
        %v3465 = vld [vmem:[%s3461 + $0x18] sm:$0xff]
        %v3466 = vld [vmem:[%s3461 + $0x20] sm:$0xff]
        %v3467 = vld [vmem:[%s3461 + $0x28] sm:$0xff]
        %v3468 = vld [vmem:[%s3461 + $0x30] sm:$0xff]
        %v3469 = vld [vmem:[%s3461 + $0x38] sm:$0xff]
        %3470 = vmatprep.subr.mxu0 0.0
        %3471 = vmatpush1.msra.mxu0 0.0
        %3472 = vmatprep.subr.mxu0 0.0
        %3473 = vmatpush1.msra.mxu0 0.0
        %3474 = vmatprep.subr.mxu0 0.0
        %3475 = vmatpush1.msra.mxu0 0.0
        %3476 = vmatprep.subr.mxu0 0.0
        %3477 = vmatpush1.msra.mxu0 0.0
        %3478 = vmatprep.subr.mxu0 0.0
        %3479 = vmatpush1.msra.mxu0 0.0
        %3480 = vmatprep.subr.mxu0 0.0
        %3481 = vmatpush1.msra.mxu0 0.0
        %3482 = vmatprep.subr.mxu0 0.0
        %3483 = vmatpush1.msra.mxu0 0.0
        %3484 = vmatprep.subr.mxu0 0.0
        %3485 = vmatpush1.msra.mxu0 0.0
        %3486 = vmatprep.subr.mxu0 0.0
        %3487 = vmatpush1.msra.mxu0 %v3469
        %3488 = vmatprep.subr.mxu0 0.0
        %3489 = vmatpush1.msra.mxu0 %v3468
        %3490 = vmatprep.subr.mxu0 0.0
        %3491 = vmatpush1.msra.mxu0 %v3467
        %3492 = vmatprep.subr.mxu0 0.0
        %3493 = vmatpush1.msra.mxu0 %v3466
        %3494 = vmatprep.subr.mxu0 0.0
        %3495 = vmatpush1.msra.mxu0 %v3465
        %3496 = vmatprep.subr.mxu0 0.0
        %3497 = vmatpush1.msra.mxu0 %v3464
        %3498 = vmatprep.subr.mxu0 0.0
        %3499 = vmatpush1.msra.mxu0 %v3463
        %3500 = vmatprep.subr.mxu0 0.0
        %3501 = vmatpush1.msra.mxu0 %v3462
        %3502 = vmatprep.subr.mxu0 0.0
        %3503 = vmatpush2.msra.mxu0 0.0
        %3504 = vmatprep.subr.mxu0 0.0
        %3505 = vmatpush2.msra.mxu0 0.0
        %3506 = vmatprep.subr.mxu0 0.0
        %3507 = vmatpush2.msra.mxu0 0.0
        %3508 = vmatprep.subr.mxu0 0.0
        %3509 = vmatpush2.msra.mxu0 0.0
        %3510 = vmatprep.subr.mxu0 0.0
        %3511 = vmatpush2.msra.mxu0 0.0
        %3512 = vmatprep.subr.mxu0 0.0
        %3513 = vmatpush2.msra.mxu0 0.0
        %3514 = vmatprep.subr.mxu0 0.0
        %3515 = vmatpush2.msra.mxu0 0.0
        %3516 = vmatprep.subr.mxu0 0.0
        %3517 = vmatpush2.msra.mxu0 0.0
        %3518 = vmatprep.subr.mxu0 0.0
        %3519 = vmatpush2.msra.mxu0 0.0
        %3520 = vmatprep.subr.mxu0 0.0
        %3521 = vmatpush2.msra.mxu0 0.0
        %3522 = vmatprep.subr.mxu0 0.0
        %3523 = vmatpush2.msra.mxu0 0.0
        %3524 = vmatprep.subr.mxu0 0.0
        %3525 = vmatpush2.msra.mxu0 0.0
        %3526 = vmatprep.subr.mxu0 0.0
        %3527 = vmatpush2.msra.mxu0 0.0
        %3528 = vmatprep.subr.mxu0 0.0
        %3529 = vmatpush2.msra.mxu0 0.0
        %3530 = vmatprep.subr.mxu0 0.0
        %3531 = vmatpush2.msra.mxu0 0.0
        %3532 = vmatprep.subr.mxu0 0.0
        %3533 = vmatpush2.msra.mxu0 0.0
        %3534 = vmatprep.mubr.f32.mxu0 0.0
        %3535 = vmatmul.mubr.f32.gmra.mxu0 %v2538
        %v3536 = vpop.f32.mrf.mxu0
        %v3537 = vadd.f32 0.0, %v3536
        %v3538 = vpop.f32.mrf.mxu0
        %3539 = vdwg.mxu0
        %v3541 = vsel %vm1675, %v3460, 0
        %3543 = vmatprep.subr.mxu0 0.0
        %3544 = vmatpush1.msra.mxu0 0.0
        %3545 = vmatprep.subr.mxu0 0.0
        %3546 = vmatpush1.msra.mxu0 0.0
        %3547 = vmatprep.subr.mxu0 0.0
        %3548 = vmatpush1.msra.mxu0 0.0
        %3549 = vmatprep.subr.mxu0 0.0
        %3550 = vmatpush1.msra.mxu0 0.0
        %3551 = vmatprep.subr.mxu0 0.0
        %3552 = vmatpush1.msra.mxu0 0.0
        %3553 = vmatprep.subr.mxu0 0.0
        %3554 = vmatpush1.msra.mxu0 0.0
        %3555 = vmatprep.subr.mxu0 0.0
        %3556 = vmatpush1.msra.mxu0 0.0
        %3557 = vmatprep.subr.mxu0 0.0
        %3558 = vmatpush1.msra.mxu0 0.0
        %3559 = vmatprep.subr.mxu0 0.0
        %3560 = vmatpush1.msra.mxu0 0.0
        %3561 = vmatprep.subr.mxu0 0.0
        %3562 = vmatpush1.msra.mxu0 0.0
        %3563 = vmatprep.subr.mxu0 0.0
        %3564 = vmatpush1.msra.mxu0 0.0
        %3565 = vmatprep.subr.mxu0 0.0
        %3566 = vmatpush1.msra.mxu0 0.0
        %3567 = vmatprep.subr.mxu0 0.0
        %3568 = vmatpush1.msra.mxu0 0.0
        %3569 = vmatprep.subr.mxu0 0.0
        %3570 = vmatpush1.msra.mxu0 0.0
        %3571 = vmatprep.subr.mxu0 0.0
        %3572 = vmatpush1.msra.mxu0 0.0
        %3573 = vmatprep.subr.mxu0 0.0
        %3574 = vmatpush1.msra.mxu0 %v3537
        %3575 = vmatprep.subr.mxu0 0.0
        %3576 = vmatpush2.msra.mxu0 0.0
        %3577 = vmatprep.subr.mxu0 0.0
        %3578 = vmatpush2.msra.mxu0 0.0
        %3579 = vmatprep.subr.mxu0 0.0
        %3580 = vmatpush2.msra.mxu0 0.0
        %3581 = vmatprep.subr.mxu0 0.0
        %3582 = vmatpush2.msra.mxu0 0.0
        %3583 = vmatprep.subr.mxu0 0.0
        %3584 = vmatpush2.msra.mxu0 0.0
        %3585 = vmatprep.subr.mxu0 0.0
        %3586 = vmatpush2.msra.mxu0 0.0
        %3587 = vmatprep.subr.mxu0 0.0
        %3588 = vmatpush2.msra.mxu0 0.0
        %3589 = vmatprep.subr.mxu0 0.0
        %3590 = vmatpush2.msra.mxu0 0.0
        %3591 = vmatprep.subr.mxu0 0.0
        %3592 = vmatpush2.msra.mxu0 0.0
        %3593 = vmatprep.subr.mxu0 0.0
        %3594 = vmatpush2.msra.mxu0 0.0
        %3595 = vmatprep.subr.mxu0 0.0
        %3596 = vmatpush2.msra.mxu0 0.0
        %3597 = vmatprep.subr.mxu0 0.0
        %3598 = vmatpush2.msra.mxu0 0.0
        %3599 = vmatprep.subr.mxu0 0.0
        %3600 = vmatpush2.msra.mxu0 0.0
        %3601 = vmatprep.subr.mxu0 0.0
        %3602 = vmatpush2.msra.mxu0 0.0
        %3603 = vmatprep.subr.mxu0 0.0
        %3604 = vmatpush2.msra.mxu0 0.0
        %3605 = vmatprep.subr.mxu0 0.0
        %3606 = vmatpush2.msra.mxu0 0.0
        %3607 = vmatprep.mubr.f32.mxu0 0.0
        %3608 = vmatmul.mubr.f32.gmra.mxu0 %v3541
        %v3609 = vpop.f32.mrf.mxu0
        %v3610 = vadd.f32 0.0, %v3609
        %v3611 = vpop.f32.mrf.mxu0
        %3612 = vdwg.mxu0
        %v3613 = vadd.f32 %v3458, %v3610
        %s3614 = scalar_lea.vmem [#allocation16], 56
        %v3615 = vld [vmem:[%s3614] sm:$0xff]
        %s3616 = scalar_lea.vmem %s11, 448
        %v3617 = vld [vmem:[%s3616] sm:$0xff]
        %v3618 = vld [vmem:[%s3616 + $0x8] sm:$0xff]
        %v3619 = vld [vmem:[%s3616 + $0x10] sm:$0xff]
        %v3620 = vld [vmem:[%s3616 + $0x18] sm:$0xff]
        %v3621 = vld [vmem:[%s3616 + $0x20] sm:$0xff]
        %v3622 = vld [vmem:[%s3616 + $0x28] sm:$0xff]
        %v3623 = vld [vmem:[%s3616 + $0x30] sm:$0xff]
        %v3624 = vld [vmem:[%s3616 + $0x38] sm:$0xff]
        %3625 = vmatprep.subr.mxu0 0.0
        %3626 = vmatpush1.msra.mxu0 0.0
        %3627 = vmatprep.subr.mxu0 0.0
        %3628 = vmatpush1.msra.mxu0 0.0
        %3629 = vmatprep.subr.mxu0 0.0
        %3630 = vmatpush1.msra.mxu0 0.0
        %3631 = vmatprep.subr.mxu0 0.0
        %3632 = vmatpush1.msra.mxu0 0.0
        %3633 = vmatprep.subr.mxu0 0.0
        %3634 = vmatpush1.msra.mxu0 0.0
        %3635 = vmatprep.subr.mxu0 0.0
        %3636 = vmatpush1.msra.mxu0 0.0
        %3637 = vmatprep.subr.mxu0 0.0
        %3638 = vmatpush1.msra.mxu0 0.0
        %3639 = vmatprep.subr.mxu0 0.0
        %3640 = vmatpush1.msra.mxu0 0.0
        %3641 = vmatprep.subr.mxu0 0.0
        %3642 = vmatpush1.msra.mxu0 %v3624
        %3643 = vmatprep.subr.mxu0 0.0
        %3644 = vmatpush1.msra.mxu0 %v3623
        %3645 = vmatprep.subr.mxu0 0.0
        %3646 = vmatpush1.msra.mxu0 %v3622
        %3647 = vmatprep.subr.mxu0 0.0
        %3648 = vmatpush1.msra.mxu0 %v3621
        %3649 = vmatprep.subr.mxu0 0.0
        %3650 = vmatpush1.msra.mxu0 %v3620
        %3651 = vmatprep.subr.mxu0 0.0
        %3652 = vmatpush1.msra.mxu0 %v3619
        %3653 = vmatprep.subr.mxu0 0.0
        %3654 = vmatpush1.msra.mxu0 %v3618
        %3655 = vmatprep.subr.mxu0 0.0
        %3656 = vmatpush1.msra.mxu0 %v3617
        %3657 = vmatprep.subr.mxu0 0.0
        %3658 = vmatpush2.msra.mxu0 0.0
        %3659 = vmatprep.subr.mxu0 0.0
        %3660 = vmatpush2.msra.mxu0 0.0
        %3661 = vmatprep.subr.mxu0 0.0
        %3662 = vmatpush2.msra.mxu0 0.0
        %3663 = vmatprep.subr.mxu0 0.0
        %3664 = vmatpush2.msra.mxu0 0.0
        %3665 = vmatprep.subr.mxu0 0.0
        %3666 = vmatpush2.msra.mxu0 0.0
        %3667 = vmatprep.subr.mxu0 0.0
        %3668 = vmatpush2.msra.mxu0 0.0
        %3669 = vmatprep.subr.mxu0 0.0
        %3670 = vmatpush2.msra.mxu0 0.0
        %3671 = vmatprep.subr.mxu0 0.0
        %3672 = vmatpush2.msra.mxu0 0.0
        %3673 = vmatprep.subr.mxu0 0.0
        %3674 = vmatpush2.msra.mxu0 0.0
        %3675 = vmatprep.subr.mxu0 0.0
        %3676 = vmatpush2.msra.mxu0 0.0
        %3677 = vmatprep.subr.mxu0 0.0
        %3678 = vmatpush2.msra.mxu0 0.0
        %3679 = vmatprep.subr.mxu0 0.0
        %3680 = vmatpush2.msra.mxu0 0.0
        %3681 = vmatprep.subr.mxu0 0.0
        %3682 = vmatpush2.msra.mxu0 0.0
        %3683 = vmatprep.subr.mxu0 0.0
        %3684 = vmatpush2.msra.mxu0 0.0
        %3685 = vmatprep.subr.mxu0 0.0
        %3686 = vmatpush2.msra.mxu0 0.0
        %3687 = vmatprep.subr.mxu0 0.0
        %3688 = vmatpush2.msra.mxu0 0.0
        %3689 = vmatprep.mubr.f32.mxu0 0.0
        %3690 = vmatmul.mubr.f32.gmra.mxu0 %v2538
        %v3691 = vpop.f32.mrf.mxu0
        %v3692 = vadd.f32 0.0, %v3691
        %v3693 = vpop.f32.mrf.mxu0
        %3694 = vdwg.mxu0
        %v3696 = vsel %vm1675, %v3615, 0
        %3698 = vmatprep.subr.mxu0 0.0
        %3699 = vmatpush1.msra.mxu0 0.0
        %3700 = vmatprep.subr.mxu0 0.0
        %3701 = vmatpush1.msra.mxu0 0.0
        %3702 = vmatprep.subr.mxu0 0.0
        %3703 = vmatpush1.msra.mxu0 0.0
        %3704 = vmatprep.subr.mxu0 0.0
        %3705 = vmatpush1.msra.mxu0 0.0
        %3706 = vmatprep.subr.mxu0 0.0
        %3707 = vmatpush1.msra.mxu0 0.0
        %3708 = vmatprep.subr.mxu0 0.0
        %3709 = vmatpush1.msra.mxu0 0.0
        %3710 = vmatprep.subr.mxu0 0.0
        %3711 = vmatpush1.msra.mxu0 0.0
        %3712 = vmatprep.subr.mxu0 0.0
        %3713 = vmatpush1.msra.mxu0 0.0
        %3714 = vmatprep.subr.mxu0 0.0
        %3715 = vmatpush1.msra.mxu0 0.0
        %3716 = vmatprep.subr.mxu0 0.0
        %3717 = vmatpush1.msra.mxu0 0.0
        %3718 = vmatprep.subr.mxu0 0.0
        %3719 = vmatpush1.msra.mxu0 0.0
        %3720 = vmatprep.subr.mxu0 0.0
        %3721 = vmatpush1.msra.mxu0 0.0
        %3722 = vmatprep.subr.mxu0 0.0
        %3723 = vmatpush1.msra.mxu0 0.0
        %3724 = vmatprep.subr.mxu0 0.0
        %3725 = vmatpush1.msra.mxu0 0.0
        %3726 = vmatprep.subr.mxu0 0.0
        %3727 = vmatpush1.msra.mxu0 0.0
        %3728 = vmatprep.subr.mxu0 0.0
        %3729 = vmatpush1.msra.mxu0 %v3692
        %3730 = vmatprep.subr.mxu0 0.0
        %3731 = vmatpush2.msra.mxu0 0.0
        %3732 = vmatprep.subr.mxu0 0.0
        %3733 = vmatpush2.msra.mxu0 0.0
        %3734 = vmatprep.subr.mxu0 0.0
        %3735 = vmatpush2.msra.mxu0 0.0
        %3736 = vmatprep.subr.mxu0 0.0
        %3737 = vmatpush2.msra.mxu0 0.0
        %3738 = vmatprep.subr.mxu0 0.0
        %3739 = vmatpush2.msra.mxu0 0.0
        %3740 = vmatprep.subr.mxu0 0.0
        %3741 = vmatpush2.msra.mxu0 0.0
        %3742 = vmatprep.subr.mxu0 0.0
        %3743 = vmatpush2.msra.mxu0 0.0
        %3744 = vmatprep.subr.mxu0 0.0
        %3745 = vmatpush2.msra.mxu0 0.0
        %3746 = vmatprep.subr.mxu0 0.0
        %3747 = vmatpush2.msra.mxu0 0.0
        %3748 = vmatprep.subr.mxu0 0.0
        %3749 = vmatpush2.msra.mxu0 0.0
        %3750 = vmatprep.subr.mxu0 0.0
        %3751 = vmatpush2.msra.mxu0 0.0
        %3752 = vmatprep.subr.mxu0 0.0
        %3753 = vmatpush2.msra.mxu0 0.0
        %3754 = vmatprep.subr.mxu0 0.0
        %3755 = vmatpush2.msra.mxu0 0.0
        %3756 = vmatprep.subr.mxu0 0.0
        %3757 = vmatpush2.msra.mxu0 0.0
        %3758 = vmatprep.subr.mxu0 0.0
        %3759 = vmatpush2.msra.mxu0 0.0
        %3760 = vmatprep.subr.mxu0 0.0
        %3761 = vmatpush2.msra.mxu0 0.0
        %3762 = vmatprep.mubr.f32.mxu0 0.0
        %3763 = vmatmul.mubr.f32.gmra.mxu0 %v3696
        %v3764 = vpop.f32.mrf.mxu0
        %v3765 = vadd.f32 0.0, %v3764
        %v3766 = vpop.f32.mrf.mxu0
        %3767 = vdwg.mxu0
        %v3768 = vadd.f32 %v3613, %v3765
        %s3769 = scalar_lea.vmem [#allocation16], 64
        %v3770 = vld [vmem:[%s3769] sm:$0xff]
        %s3771 = scalar_lea.vmem %s11, 512
        %v3772 = vld [vmem:[%s3771] sm:$0xff]
        %v3773 = vld [vmem:[%s3771 + $0x8] sm:$0xff]
        %v3774 = vld [vmem:[%s3771 + $0x10] sm:$0xff]
        %v3775 = vld [vmem:[%s3771 + $0x18] sm:$0xff]
        %v3776 = vld [vmem:[%s3771 + $0x20] sm:$0xff]
        %v3777 = vld [vmem:[%s3771 + $0x28] sm:$0xff]
        %v3778 = vld [vmem:[%s3771 + $0x30] sm:$0xff]
        %v3779 = vld [vmem:[%s3771 + $0x38] sm:$0xff]
        %3780 = vmatprep.subr.mxu0 0.0
        %3781 = vmatpush1.msra.mxu0 0.0
        %3782 = vmatprep.subr.mxu0 0.0
        %3783 = vmatpush1.msra.mxu0 0.0
        %3784 = vmatprep.subr.mxu0 0.0
        %3785 = vmatpush1.msra.mxu0 0.0
        %3786 = vmatprep.subr.mxu0 0.0
        %3787 = vmatpush1.msra.mxu0 0.0
        %3788 = vmatprep.subr.mxu0 0.0
        %3789 = vmatpush1.msra.mxu0 0.0
        %3790 = vmatprep.subr.mxu0 0.0
        %3791 = vmatpush1.msra.mxu0 0.0
        %3792 = vmatprep.subr.mxu0 0.0
        %3793 = vmatpush1.msra.mxu0 0.0
        %3794 = vmatprep.subr.mxu0 0.0
        %3795 = vmatpush1.msra.mxu0 0.0
        %3796 = vmatprep.subr.mxu0 0.0
        %3797 = vmatpush1.msra.mxu0 %v3779
        %3798 = vmatprep.subr.mxu0 0.0
        %3799 = vmatpush1.msra.mxu0 %v3778
        %3800 = vmatprep.subr.mxu0 0.0
        %3801 = vmatpush1.msra.mxu0 %v3777
        %3802 = vmatprep.subr.mxu0 0.0
        %3803 = vmatpush1.msra.mxu0 %v3776
        %3804 = vmatprep.subr.mxu0 0.0
        %3805 = vmatpush1.msra.mxu0 %v3775
        %3806 = vmatprep.subr.mxu0 0.0
        %3807 = vmatpush1.msra.mxu0 %v3774
        %3808 = vmatprep.subr.mxu0 0.0
        %3809 = vmatpush1.msra.mxu0 %v3773
        %3810 = vmatprep.subr.mxu0 0.0
        %3811 = vmatpush1.msra.mxu0 %v3772
        %3812 = vmatprep.subr.mxu0 0.0
        %3813 = vmatpush2.msra.mxu0 0.0
        %3814 = vmatprep.subr.mxu0 0.0
        %3815 = vmatpush2.msra.mxu0 0.0
        %3816 = vmatprep.subr.mxu0 0.0
        %3817 = vmatpush2.msra.mxu0 0.0
        %3818 = vmatprep.subr.mxu0 0.0
        %3819 = vmatpush2.msra.mxu0 0.0
        %3820 = vmatprep.subr.mxu0 0.0
        %3821 = vmatpush2.msra.mxu0 0.0
        %3822 = vmatprep.subr.mxu0 0.0
        %3823 = vmatpush2.msra.mxu0 0.0
        %3824 = vmatprep.subr.mxu0 0.0
        %3825 = vmatpush2.msra.mxu0 0.0
        %3826 = vmatprep.subr.mxu0 0.0
        %3827 = vmatpush2.msra.mxu0 0.0
        %3828 = vmatprep.subr.mxu0 0.0
        %3829 = vmatpush2.msra.mxu0 0.0
        %3830 = vmatprep.subr.mxu0 0.0
        %3831 = vmatpush2.msra.mxu0 0.0
        %3832 = vmatprep.subr.mxu0 0.0
        %3833 = vmatpush2.msra.mxu0 0.0
        %3834 = vmatprep.subr.mxu0 0.0
        %3835 = vmatpush2.msra.mxu0 0.0
        %3836 = vmatprep.subr.mxu0 0.0
        %3837 = vmatpush2.msra.mxu0 0.0
        %3838 = vmatprep.subr.mxu0 0.0
        %3839 = vmatpush2.msra.mxu0 0.0
        %3840 = vmatprep.subr.mxu0 0.0
        %3841 = vmatpush2.msra.mxu0 0.0
        %3842 = vmatprep.subr.mxu0 0.0
        %3843 = vmatpush2.msra.mxu0 0.0
        %3844 = vmatprep.mubr.f32.mxu0 0.0
        %3845 = vmatmul.mubr.f32.gmra.mxu0 %v2538
        %v3846 = vpop.f32.mrf.mxu0
        %v3847 = vadd.f32 0.0, %v3846
        %v3848 = vpop.f32.mrf.mxu0
        %3849 = vdwg.mxu0
        %v3851 = vsel %vm1675, %v3770, 0
        %3853 = vmatprep.subr.mxu0 0.0
        %3854 = vmatpush1.msra.mxu0 0.0
        %3855 = vmatprep.subr.mxu0 0.0
        %3856 = vmatpush1.msra.mxu0 0.0
        %3857 = vmatprep.subr.mxu0 0.0
        %3858 = vmatpush1.msra.mxu0 0.0
        %3859 = vmatprep.subr.mxu0 0.0
        %3860 = vmatpush1.msra.mxu0 0.0
        %3861 = vmatprep.subr.mxu0 0.0
        %3862 = vmatpush1.msra.mxu0 0.0
        %3863 = vmatprep.subr.mxu0 0.0
        %3864 = vmatpush1.msra.mxu0 0.0
        %3865 = vmatprep.subr.mxu0 0.0
        %3866 = vmatpush1.msra.mxu0 0.0
        %3867 = vmatprep.subr.mxu0 0.0
        %3868 = vmatpush1.msra.mxu0 0.0
        %3869 = vmatprep.subr.mxu0 0.0
        %3870 = vmatpush1.msra.mxu0 0.0
        %3871 = vmatprep.subr.mxu0 0.0
        %3872 = vmatpush1.msra.mxu0 0.0
        %3873 = vmatprep.subr.mxu0 0.0
        %3874 = vmatpush1.msra.mxu0 0.0
        %3875 = vmatprep.subr.mxu0 0.0
        %3876 = vmatpush1.msra.mxu0 0.0
        %3877 = vmatprep.subr.mxu0 0.0
        %3878 = vmatpush1.msra.mxu0 0.0
        %3879 = vmatprep.subr.mxu0 0.0
        %3880 = vmatpush1.msra.mxu0 0.0
        %3881 = vmatprep.subr.mxu0 0.0
        %3882 = vmatpush1.msra.mxu0 0.0
        %3883 = vmatprep.subr.mxu0 0.0
        %3884 = vmatpush1.msra.mxu0 %v3847
        %3885 = vmatprep.subr.mxu0 0.0
        %3886 = vmatpush2.msra.mxu0 0.0
        %3887 = vmatprep.subr.mxu0 0.0
        %3888 = vmatpush2.msra.mxu0 0.0
        %3889 = vmatprep.subr.mxu0 0.0
        %3890 = vmatpush2.msra.mxu0 0.0
        %3891 = vmatprep.subr.mxu0 0.0
        %3892 = vmatpush2.msra.mxu0 0.0
        %3893 = vmatprep.subr.mxu0 0.0
        %3894 = vmatpush2.msra.mxu0 0.0
        %3895 = vmatprep.subr.mxu0 0.0
        %3896 = vmatpush2.msra.mxu0 0.0
        %3897 = vmatprep.subr.mxu0 0.0
        %3898 = vmatpush2.msra.mxu0 0.0
        %3899 = vmatprep.subr.mxu0 0.0
        %3900 = vmatpush2.msra.mxu0 0.0
        %3901 = vmatprep.subr.mxu0 0.0
        %3902 = vmatpush2.msra.mxu0 0.0
        %3903 = vmatprep.subr.mxu0 0.0
        %3904 = vmatpush2.msra.mxu0 0.0
        %3905 = vmatprep.subr.mxu0 0.0
        %3906 = vmatpush2.msra.mxu0 0.0
        %3907 = vmatprep.subr.mxu0 0.0
        %3908 = vmatpush2.msra.mxu0 0.0
        %3909 = vmatprep.subr.mxu0 0.0
        %3910 = vmatpush2.msra.mxu0 0.0
        %3911 = vmatprep.subr.mxu0 0.0
        %3912 = vmatpush2.msra.mxu0 0.0
        %3913 = vmatprep.subr.mxu0 0.0
        %3914 = vmatpush2.msra.mxu0 0.0
        %3915 = vmatprep.subr.mxu0 0.0
        %3916 = vmatpush2.msra.mxu0 0.0
        %3917 = vmatprep.mubr.f32.mxu0 0.0
        %3918 = vmatmul.mubr.f32.gmra.mxu0 %v3851
        %v3919 = vpop.f32.mrf.mxu0
        %v3920 = vadd.f32 0.0, %v3919
        %v3921 = vpop.f32.mrf.mxu0
        %3922 = vdwg.mxu0
        %v3923 = vadd.f32 %v3768, %v3920
        %v3924 = vld [vmem:[#allocation19] sm:$0xff]
        %v3925 = vld [vmem:[#allocation21] sm:$0xff]
        %v3927 = vsel %vm1675, %v3925, 0
        %3929 = vmatprep.subr.mxu0 0.0
        %3930 = vmatpush1.msra.mxu0 0.0
        %3931 = vmatprep.subr.mxu0 0.0
        %3932 = vmatpush1.msra.mxu0 0.0
        %3933 = vmatprep.subr.mxu0 0.0
        %3934 = vmatpush1.msra.mxu0 0.0
        %3935 = vmatprep.subr.mxu0 0.0
        %3936 = vmatpush1.msra.mxu0 0.0
        %3937 = vmatprep.subr.mxu0 0.0
        %3938 = vmatpush1.msra.mxu0 0.0
        %3939 = vmatprep.subr.mxu0 0.0
        %3940 = vmatpush1.msra.mxu0 0.0
        %3941 = vmatprep.subr.mxu0 0.0
        %3942 = vmatpush1.msra.mxu0 0.0
        %3943 = vmatprep.subr.mxu0 0.0
        %3944 = vmatpush1.msra.mxu0 0.0
        %3945 = vmatprep.subr.mxu0 0.0
        %3946 = vmatpush1.msra.mxu0 0.0
        %3947 = vmatprep.subr.mxu0 0.0
        %3948 = vmatpush1.msra.mxu0 0.0
        %3949 = vmatprep.subr.mxu0 0.0
        %3950 = vmatpush1.msra.mxu0 0.0
        %3951 = vmatprep.subr.mxu0 0.0
        %3952 = vmatpush1.msra.mxu0 0.0
        %3953 = vmatprep.subr.mxu0 0.0
        %3954 = vmatpush1.msra.mxu0 0.0
        %3955 = vmatprep.subr.mxu0 0.0
        %3956 = vmatpush1.msra.mxu0 0.0
        %3957 = vmatprep.subr.mxu0 0.0
        %3958 = vmatpush1.msra.mxu0 0.0
        %3959 = vmatprep.subr.mxu0 0.0
        %3960 = vmatpush1.msra.mxu0 %v2526
        %3961 = vmatprep.subr.mxu0 0.0
        %3962 = vmatpush2.msra.mxu0 0.0
        %3963 = vmatprep.subr.mxu0 0.0
        %3964 = vmatpush2.msra.mxu0 0.0
        %3965 = vmatprep.subr.mxu0 0.0
        %3966 = vmatpush2.msra.mxu0 0.0
        %3967 = vmatprep.subr.mxu0 0.0
        %3968 = vmatpush2.msra.mxu0 0.0
        %3969 = vmatprep.subr.mxu0 0.0
        %3970 = vmatpush2.msra.mxu0 0.0
        %3971 = vmatprep.subr.mxu0 0.0
        %3972 = vmatpush2.msra.mxu0 0.0
        %3973 = vmatprep.subr.mxu0 0.0
        %3974 = vmatpush2.msra.mxu0 0.0
        %3975 = vmatprep.subr.mxu0 0.0
        %3976 = vmatpush2.msra.mxu0 0.0
        %3977 = vmatprep.subr.mxu0 0.0
        %3978 = vmatpush2.msra.mxu0 0.0
        %3979 = vmatprep.subr.mxu0 0.0
        %3980 = vmatpush2.msra.mxu0 0.0
        %3981 = vmatprep.subr.mxu0 0.0
        %3982 = vmatpush2.msra.mxu0 0.0
        %3983 = vmatprep.subr.mxu0 0.0
        %3984 = vmatpush2.msra.mxu0 0.0
        %3985 = vmatprep.subr.mxu0 0.0
        %3986 = vmatpush2.msra.mxu0 0.0
        %3987 = vmatprep.subr.mxu0 0.0
        %3988 = vmatpush2.msra.mxu0 0.0
        %3989 = vmatprep.subr.mxu0 0.0
        %3990 = vmatpush2.msra.mxu0 0.0
        %3991 = vmatprep.subr.mxu0 0.0
        %3992 = vmatpush2.msra.mxu0 0.0
        %3993 = vmatprep.mubr.f32.mxu0 0.0
        %3994 = vmatmul.mubr.f32.gmra.mxu0 %v3927
        %v3995 = vpop.f32.mrf.mxu0
        %v3996 = vadd.f32 0.0, %v3995
        %v3997 = vpop.f32.mrf.mxu0
        %3998 = vdwg.mxu0
        %v4000 = vsel %vm1675, %v3924, 0
        %4002 = vmatprep.subr.mxu0 0.0
        %4003 = vmatpush1.msra.mxu0 0.0
        %4004 = vmatprep.subr.mxu0 0.0
        %4005 = vmatpush1.msra.mxu0 0.0
        %4006 = vmatprep.subr.mxu0 0.0
        %4007 = vmatpush1.msra.mxu0 0.0
        %4008 = vmatprep.subr.mxu0 0.0
        %4009 = vmatpush1.msra.mxu0 0.0
        %4010 = vmatprep.subr.mxu0 0.0
        %4011 = vmatpush1.msra.mxu0 0.0
        %4012 = vmatprep.subr.mxu0 0.0
        %4013 = vmatpush1.msra.mxu0 0.0
        %4014 = vmatprep.subr.mxu0 0.0
        %4015 = vmatpush1.msra.mxu0 0.0
        %4016 = vmatprep.subr.mxu0 0.0
        %4017 = vmatpush1.msra.mxu0 0.0
        %4018 = vmatprep.subr.mxu0 0.0
        %4019 = vmatpush1.msra.mxu0 0.0
        %4020 = vmatprep.subr.mxu0 0.0
        %4021 = vmatpush1.msra.mxu0 0.0
        %4022 = vmatprep.subr.mxu0 0.0
        %4023 = vmatpush1.msra.mxu0 0.0
        %4024 = vmatprep.subr.mxu0 0.0
        %4025 = vmatpush1.msra.mxu0 0.0
        %4026 = vmatprep.subr.mxu0 0.0
        %4027 = vmatpush1.msra.mxu0 0.0
        %4028 = vmatprep.subr.mxu0 0.0
        %4029 = vmatpush1.msra.mxu0 0.0
        %4030 = vmatprep.subr.mxu0 0.0
        %4031 = vmatpush1.msra.mxu0 0.0
        %4032 = vmatprep.subr.mxu0 0.0
        %4033 = vmatpush1.msra.mxu0 %v2059
        %4034 = vmatprep.subr.mxu0 0.0
        %4035 = vmatpush2.msra.mxu0 0.0
        %4036 = vmatprep.subr.mxu0 0.0
        %4037 = vmatpush2.msra.mxu0 0.0
        %4038 = vmatprep.subr.mxu0 0.0
        %4039 = vmatpush2.msra.mxu0 0.0
        %4040 = vmatprep.subr.mxu0 0.0
        %4041 = vmatpush2.msra.mxu0 0.0
        %4042 = vmatprep.subr.mxu0 0.0
        %4043 = vmatpush2.msra.mxu0 0.0
        %4044 = vmatprep.subr.mxu0 0.0
        %4045 = vmatpush2.msra.mxu0 0.0
        %4046 = vmatprep.subr.mxu0 0.0
        %4047 = vmatpush2.msra.mxu0 0.0
        %4048 = vmatprep.subr.mxu0 0.0
        %4049 = vmatpush2.msra.mxu0 0.0
        %4050 = vmatprep.subr.mxu0 0.0
        %4051 = vmatpush2.msra.mxu0 0.0
        %4052 = vmatprep.subr.mxu0 0.0
        %4053 = vmatpush2.msra.mxu0 0.0
        %4054 = vmatprep.subr.mxu0 0.0
        %4055 = vmatpush2.msra.mxu0 0.0
        %4056 = vmatprep.subr.mxu0 0.0
        %4057 = vmatpush2.msra.mxu0 0.0
        %4058 = vmatprep.subr.mxu0 0.0
        %4059 = vmatpush2.msra.mxu0 0.0
        %4060 = vmatprep.subr.mxu0 0.0
        %4061 = vmatpush2.msra.mxu0 0.0
        %4062 = vmatprep.subr.mxu0 0.0
        %4063 = vmatpush2.msra.mxu0 0.0
        %4064 = vmatprep.subr.mxu0 0.0
        %4065 = vmatpush2.msra.mxu0 0.0
        %4066 = vmatprep.mubr.f32.mxu0 0.0
        %4067 = vmatmul.mubr.f32.gmra.mxu0 %v4000
        %v4068 = vpop.f32.mrf.mxu0
        %v4069 = vadd.f32 %v3996, %v4068
        %v4070 = vpop.f32.mrf.mxu0
        %4071 = vdwg.mxu0
        %v4072 = vld [vmem:[#allocation22] sm:$0xff]
        %v4074 = vsel %vm1675, %v4072, 0
        %4076 = vmatprep.subr.mxu0 0.0
        %4077 = vmatpush1.msra.mxu0 0.0
        %4078 = vmatprep.subr.mxu0 0.0
        %4079 = vmatpush1.msra.mxu0 0.0
        %4080 = vmatprep.subr.mxu0 0.0
        %4081 = vmatpush1.msra.mxu0 0.0
        %4082 = vmatprep.subr.mxu0 0.0
        %4083 = vmatpush1.msra.mxu0 0.0
        %4084 = vmatprep.subr.mxu0 0.0
        %4085 = vmatpush1.msra.mxu0 0.0
        %4086 = vmatprep.subr.mxu0 0.0
        %4087 = vmatpush1.msra.mxu0 0.0
        %4088 = vmatprep.subr.mxu0 0.0
        %4089 = vmatpush1.msra.mxu0 0.0
        %4090 = vmatprep.subr.mxu0 0.0
        %4091 = vmatpush1.msra.mxu0 0.0
        %4092 = vmatprep.subr.mxu0 0.0
        %4093 = vmatpush1.msra.mxu0 0.0
        %4094 = vmatprep.subr.mxu0 0.0
        %4095 = vmatpush1.msra.mxu0 0.0
        %4096 = vmatprep.subr.mxu0 0.0
        %4097 = vmatpush1.msra.mxu0 0.0
        %4098 = vmatprep.subr.mxu0 0.0
        %4099 = vmatpush1.msra.mxu0 0.0
        %4100 = vmatprep.subr.mxu0 0.0
        %4101 = vmatpush1.msra.mxu0 0.0
        %4102 = vmatprep.subr.mxu0 0.0
        %4103 = vmatpush1.msra.mxu0 0.0
        %4104 = vmatprep.subr.mxu0 0.0
        %4105 = vmatpush1.msra.mxu0 0.0
        %4106 = vmatprep.subr.mxu0 0.0
        %4107 = vmatpush1.msra.mxu0 %v3923
        %4108 = vmatprep.subr.mxu0 0.0
        %4109 = vmatpush2.msra.mxu0 0.0
        %4110 = vmatprep.subr.mxu0 0.0
        %4111 = vmatpush2.msra.mxu0 0.0
        %4112 = vmatprep.subr.mxu0 0.0
        %4113 = vmatpush2.msra.mxu0 0.0
        %4114 = vmatprep.subr.mxu0 0.0
        %4115 = vmatpush2.msra.mxu0 0.0
        %4116 = vmatprep.subr.mxu0 0.0
        %4117 = vmatpush2.msra.mxu0 0.0
        %4118 = vmatprep.subr.mxu0 0.0
        %4119 = vmatpush2.msra.mxu0 0.0
        %4120 = vmatprep.subr.mxu0 0.0
        %4121 = vmatpush2.msra.mxu0 0.0
        %4122 = vmatprep.subr.mxu0 0.0
        %4123 = vmatpush2.msra.mxu0 0.0
        %4124 = vmatprep.subr.mxu0 0.0
        %4125 = vmatpush2.msra.mxu0 0.0
        %4126 = vmatprep.subr.mxu0 0.0
        %4127 = vmatpush2.msra.mxu0 0.0
        %4128 = vmatprep.subr.mxu0 0.0
        %4129 = vmatpush2.msra.mxu0 0.0
        %4130 = vmatprep.subr.mxu0 0.0
        %4131 = vmatpush2.msra.mxu0 0.0
        %4132 = vmatprep.subr.mxu0 0.0
        %4133 = vmatpush2.msra.mxu0 0.0
        %4134 = vmatprep.subr.mxu0 0.0
        %4135 = vmatpush2.msra.mxu0 0.0
        %4136 = vmatprep.subr.mxu0 0.0
        %4137 = vmatpush2.msra.mxu0 0.0
        %4138 = vmatprep.subr.mxu0 0.0
        %4139 = vmatpush2.msra.mxu0 0.0
        %4140 = vmatprep.mubr.f32.mxu0 0.0
        %4141 = vmatmul.mubr.f32.gmra.mxu0 %v4074
        %v4142 = vpop.f32.mrf.mxu0
        %v4143 = vadd.f32 0.0, %v4142
        %v4144 = vpop.f32.mrf.mxu0
        %4145 = vdwg.mxu0
        %v4146 = vadd.f32 %v4069, %v4143
        %v4147 = vld [vmem:[#allocation24] sm:$0xff]
        %v4148 = vadd.f32 %v4146, %v4147
        %v4149 = vmax.f32 %v4148, 0.0
        %v4150 = vld [vmem:[#allocation25] sm:$0xff]
        %v4151 = vld [vmem:[#allocation27] sm:$0xff]
        %v4153 = vsel %vm1675, %v4150, 0
        %4155 = vmatprep.subr.mxu0 0.0
        %4156 = vmatpush1.msra.mxu0 0.0
        %4157 = vmatprep.subr.mxu0 0.0
        %4158 = vmatpush1.msra.mxu0 0.0
        %4159 = vmatprep.subr.mxu0 0.0
        %4160 = vmatpush1.msra.mxu0 0.0
        %4161 = vmatprep.subr.mxu0 0.0
        %4162 = vmatpush1.msra.mxu0 0.0
        %4163 = vmatprep.subr.mxu0 0.0
        %4164 = vmatpush1.msra.mxu0 0.0
        %4165 = vmatprep.subr.mxu0 0.0
        %4166 = vmatpush1.msra.mxu0 0.0
        %4167 = vmatprep.subr.mxu0 0.0
        %4168 = vmatpush1.msra.mxu0 0.0
        %4169 = vmatprep.subr.mxu0 0.0
        %4170 = vmatpush1.msra.mxu0 0.0
        %4171 = vmatprep.subr.mxu0 0.0
        %4172 = vmatpush1.msra.mxu0 0.0
        %4173 = vmatprep.subr.mxu0 0.0
        %4174 = vmatpush1.msra.mxu0 0.0
        %4175 = vmatprep.subr.mxu0 0.0
        %4176 = vmatpush1.msra.mxu0 0.0
        %4177 = vmatprep.subr.mxu0 0.0
        %4178 = vmatpush1.msra.mxu0 0.0
        %4179 = vmatprep.subr.mxu0 0.0
        %4180 = vmatpush1.msra.mxu0 0.0
        %4181 = vmatprep.subr.mxu0 0.0
        %4182 = vmatpush1.msra.mxu0 0.0
        %4183 = vmatprep.subr.mxu0 0.0
        %4184 = vmatpush1.msra.mxu0 0.0
        %4185 = vmatprep.subr.mxu0 0.0
        %4186 = vmatpush1.msra.mxu0 %v4149
        %4187 = vmatprep.subr.mxu0 0.0
        %4188 = vmatpush2.msra.mxu0 0.0
        %4189 = vmatprep.subr.mxu0 0.0
        %4190 = vmatpush2.msra.mxu0 0.0
        %4191 = vmatprep.subr.mxu0 0.0
        %4192 = vmatpush2.msra.mxu0 0.0
        %4193 = vmatprep.subr.mxu0 0.0
        %4194 = vmatpush2.msra.mxu0 0.0
        %4195 = vmatprep.subr.mxu0 0.0
        %4196 = vmatpush2.msra.mxu0 0.0
        %4197 = vmatprep.subr.mxu0 0.0
        %4198 = vmatpush2.msra.mxu0 0.0
        %4199 = vmatprep.subr.mxu0 0.0
        %4200 = vmatpush2.msra.mxu0 0.0
        %4201 = vmatprep.subr.mxu0 0.0
        %4202 = vmatpush2.msra.mxu0 0.0
        %4203 = vmatprep.subr.mxu0 0.0
        %4204 = vmatpush2.msra.mxu0 0.0
        %4205 = vmatprep.subr.mxu0 0.0
        %4206 = vmatpush2.msra.mxu0 0.0
        %4207 = vmatprep.subr.mxu0 0.0
        %4208 = vmatpush2.msra.mxu0 0.0
        %4209 = vmatprep.subr.mxu0 0.0
        %4210 = vmatpush2.msra.mxu0 0.0
        %4211 = vmatprep.subr.mxu0 0.0
        %4212 = vmatpush2.msra.mxu0 0.0
        %4213 = vmatprep.subr.mxu0 0.0
        %4214 = vmatpush2.msra.mxu0 0.0
        %4215 = vmatprep.subr.mxu0 0.0
        %4216 = vmatpush2.msra.mxu0 0.0
        %4217 = vmatprep.subr.mxu0 0.0
        %4218 = vmatpush2.msra.mxu0 0.0
        %4219 = vmatprep.mubr.f32.mxu0 0.0
        %4220 = vmatmul.mubr.f32.gmra.mxu0 %v4153
        %v4221 = vpop.f32.mrf.mxu0
        %v4222 = vadd.f32 %v4151, %v4221
        %v4223 = vpop.f32.mrf.mxu0
        %4224 = vdwg.mxu0
        %v4225 = vld [vmem:[#allocation28] sm:$0xff]
        %v4226 = vld [vmem:[#allocation28 + $0x8] sm:$0xff]
        %v4227 = vld [vmem:[#allocation28 + $0x10] sm:$0xff]
        %v4228 = vld [vmem:[#allocation28 + $0x18] sm:$0xff]
        %v4229 = vld [vmem:[#allocation28 + $0x20] sm:$0xff]
        %v4230 = vld [vmem:[#allocation28 + $0x28] sm:$0xff]
        %v4231 = vld [vmem:[#allocation28 + $0x30] sm:$0xff]
        %v4232 = vld [vmem:[#allocation28 + $0x38] sm:$0xff]
        %v4233 = vld [vmem:[#allocation28 + $0x40] sm:$0xff]
        %v4234 = vld [vmem:[#allocation28 + $0x48] sm:$0xff]
        %v4235 = vld [vmem:[#allocation28 + $0x50] sm:$0xff]
        %v4236 = vld [vmem:[#allocation28 + $0x58] sm:$0xff]
        %v4237 = vld [vmem:[#allocation28 + $0x60] sm:$0xff]
        %v4238 = vld [vmem:[#allocation28 + $0x68] sm:$0xff]
        %v4239 = vld [vmem:[#allocation28 + $0x70] sm:$0xff]
        %v4240 = vld [vmem:[#allocation28 + $0x78] sm:$0xff]
        %v4242 = vsel %vm1601, %v4222, 0
        %4244 = vmatprep.subr.mxu0 0.0
        %4245 = vmatpush1.msra.mxu0 0.0
        %4246 = vmatprep.subr.mxu0 0.0
        %4247 = vmatpush1.msra.mxu0 0.0
        %4248 = vmatprep.subr.mxu0 0.0
        %4249 = vmatpush1.msra.mxu0 0.0
        %4250 = vmatprep.subr.mxu0 0.0
        %4251 = vmatpush1.msra.mxu0 0.0
        %4252 = vmatprep.subr.mxu0 0.0
        %4253 = vmatpush1.msra.mxu0 0.0
        %4254 = vmatprep.subr.mxu0 0.0
        %4255 = vmatpush1.msra.mxu0 0.0
        %4256 = vmatprep.subr.mxu0 0.0
        %4257 = vmatpush1.msra.mxu0 0.0
        %4258 = vmatprep.subr.mxu0 0.0
        %4259 = vmatpush1.msra.mxu0 0.0
        %4260 = vmatprep.subr.mxu0 %v4240
        %4261 = vmatpush1.msra.mxu0 %v4239
        %4262 = vmatprep.subr.mxu0 %v4238
        %4263 = vmatpush1.msra.mxu0 %v4237
        %4264 = vmatprep.subr.mxu0 %v4236
        %4265 = vmatpush1.msra.mxu0 %v4235
        %4266 = vmatprep.subr.mxu0 %v4234
        %4267 = vmatpush1.msra.mxu0 %v4233
        %4268 = vmatprep.subr.mxu0 %v4232
        %4269 = vmatpush1.msra.mxu0 %v4231
        %4270 = vmatprep.subr.mxu0 %v4230
        %4271 = vmatpush1.msra.mxu0 %v4229
        %4272 = vmatprep.subr.mxu0 %v4228
        %4273 = vmatpush1.msra.mxu0 %v4227
        %4274 = vmatprep.subr.mxu0 %v4226
        %4275 = vmatpush1.msra.mxu0 %v4225
        %4276 = vmatprep.subr.mxu0 0.0
        %4277 = vmatpush2.msra.mxu0 0.0
        %4278 = vmatprep.subr.mxu0 0.0
        %4279 = vmatpush2.msra.mxu0 0.0
        %4280 = vmatprep.subr.mxu0 0.0
        %4281 = vmatpush2.msra.mxu0 0.0
        %4282 = vmatprep.subr.mxu0 0.0
        %4283 = vmatpush2.msra.mxu0 0.0
        %4284 = vmatprep.subr.mxu0 0.0
        %4285 = vmatpush2.msra.mxu0 0.0
        %4286 = vmatprep.subr.mxu0 0.0
        %4287 = vmatpush2.msra.mxu0 0.0
        %4288 = vmatprep.subr.mxu0 0.0
        %4289 = vmatpush2.msra.mxu0 0.0
        %4290 = vmatprep.subr.mxu0 0.0
        %4291 = vmatpush2.msra.mxu0 0.0
        %4292 = vmatprep.subr.mxu0 0.0
        %4293 = vmatpush2.msra.mxu0 0.0
        %4294 = vmatprep.subr.mxu0 0.0
        %4295 = vmatpush2.msra.mxu0 0.0
        %4296 = vmatprep.subr.mxu0 0.0
        %4297 = vmatpush2.msra.mxu0 0.0
        %4298 = vmatprep.subr.mxu0 0.0
        %4299 = vmatpush2.msra.mxu0 0.0
        %4300 = vmatprep.subr.mxu0 0.0
        %4301 = vmatpush2.msra.mxu0 0.0
        %4302 = vmatprep.subr.mxu0 0.0
        %4303 = vmatpush2.msra.mxu0 0.0
        %4304 = vmatprep.subr.mxu0 0.0
        %4305 = vmatpush2.msra.mxu0 0.0
        %4306 = vmatprep.subr.mxu0 0.0
        %4307 = vmatpush2.msra.mxu0 0.0
        %4308 = vmatprep.mubr.f32.mxu0 0.0
        %4309 = vmatmul.mubr.f32.gmra.mxu0 %v4242
        %v4310 = vpop.f32.mrf.mxu0
        %v4311 = vadd.f32 0.0, %v4310
        %v4312 = vpop.f32.mrf.mxu0
        %v4313 = vadd.f32 0.0, %v4312
        %4314 = vdwg.mxu0
        %v4315 = vld [vmem:[#allocation30] sm:$0xff]
        %v4316 = vld [vmem:[#allocation30 + $0x8] sm:$0xff]
        %v4317 = vld [vmem:[#allocation30 + $0x10] sm:$0xff]
        %v4318 = vld [vmem:[#allocation30 + $0x18] sm:$0xff]
        %v4319 = vld [vmem:[#allocation30 + $0x20] sm:$0xff]
        %v4320 = vld [vmem:[#allocation30 + $0x28] sm:$0xff]
        %v4321 = vld [vmem:[#allocation30 + $0x30] sm:$0xff]
        %v4322 = vld [vmem:[#allocation30 + $0x38] sm:$0xff]
        %v4323 = vld [vmem:[#allocation30 + $0x40] sm:$0xff]
        %v4324 = vld [vmem:[#allocation30 + $0x48] sm:$0xff]
        %v4325 = vld [vmem:[#allocation30 + $0x50] sm:$0xff]
        %v4326 = vld [vmem:[#allocation30 + $0x58] sm:$0xff]
        %v4327 = vld [vmem:[#allocation30 + $0x60] sm:$0xff]
        %v4328 = vld [vmem:[#allocation30 + $0x68] sm:$0xff]
        %v4329 = vld [vmem:[#allocation30 + $0x70] sm:$0xff]
        %v4330 = vld [vmem:[#allocation30 + $0x78] sm:$0xff]
        %v4331 = vld [vmem:[#allocation31] sm:$0xff]
        %v4332 = vld [vmem:[#allocation31 + $0x8] sm:$0xff]
        %v4333 = vld [vmem:[#allocation31 + $0x10] sm:$0xff]
        %v4334 = vld [vmem:[#allocation31 + $0x18] sm:$0xff]
        %v4335 = vld [vmem:[#allocation31 + $0x20] sm:$0xff]
        %v4336 = vld [vmem:[#allocation31 + $0x28] sm:$0xff]
        %v4337 = vld [vmem:[#allocation31 + $0x30] sm:$0xff]
        %v4338 = vld [vmem:[#allocation31 + $0x38] sm:$0xff]
        %v4339 = vld [vmem:[#allocation31 + $0x40] sm:$0xff]
        %v4340 = vld [vmem:[#allocation31 + $0x48] sm:$0xff]
        %v4341 = vld [vmem:[#allocation31 + $0x50] sm:$0xff]
        %v4342 = vld [vmem:[#allocation31 + $0x58] sm:$0xff]
        %v4343 = vld [vmem:[#allocation31 + $0x60] sm:$0xff]
        %v4344 = vld [vmem:[#allocation31 + $0x68] sm:$0xff]
        %v4345 = vld [vmem:[#allocation31 + $0x70] sm:$0xff]
        %v4346 = vld [vmem:[#allocation31 + $0x78] sm:$0xff]
        %v4348 = vsel %vm1601, %v2059, 0
        %4350 = vmatprep.subr.mxu0 0.0
        %4351 = vmatpush1.msra.mxu0 0.0
        %4352 = vmatprep.subr.mxu0 0.0
        %4353 = vmatpush1.msra.mxu0 0.0
        %4354 = vmatprep.subr.mxu0 0.0
        %4355 = vmatpush1.msra.mxu0 0.0
        %4356 = vmatprep.subr.mxu0 0.0
        %4357 = vmatpush1.msra.mxu0 0.0
        %4358 = vmatprep.subr.mxu0 0.0
        %4359 = vmatpush1.msra.mxu0 0.0
        %4360 = vmatprep.subr.mxu0 0.0
        %4361 = vmatpush1.msra.mxu0 0.0
        %4362 = vmatprep.subr.mxu0 0.0
        %4363 = vmatpush1.msra.mxu0 0.0
        %4364 = vmatprep.subr.mxu0 0.0
        %4365 = vmatpush1.msra.mxu0 0.0
        %4366 = vmatprep.subr.mxu0 %v4346
        %4367 = vmatpush1.msra.mxu0 %v4345
        %4368 = vmatprep.subr.mxu0 %v4344
        %4369 = vmatpush1.msra.mxu0 %v4343
        %4370 = vmatprep.subr.mxu0 %v4342
        %4371 = vmatpush1.msra.mxu0 %v4341
        %4372 = vmatprep.subr.mxu0 %v4340
        %4373 = vmatpush1.msra.mxu0 %v4339
        %4374 = vmatprep.subr.mxu0 %v4338
        %4375 = vmatpush1.msra.mxu0 %v4337
        %4376 = vmatprep.subr.mxu0 %v4336
        %4377 = vmatpush1.msra.mxu0 %v4335
        %4378 = vmatprep.subr.mxu0 %v4334
        %4379 = vmatpush1.msra.mxu0 %v4333
        %4380 = vmatprep.subr.mxu0 %v4332
        %4381 = vmatpush1.msra.mxu0 %v4331
        %4382 = vmatprep.subr.mxu0 0.0
        %4383 = vmatpush2.msra.mxu0 0.0
        %4384 = vmatprep.subr.mxu0 0.0
        %4385 = vmatpush2.msra.mxu0 0.0
        %4386 = vmatprep.subr.mxu0 0.0
        %4387 = vmatpush2.msra.mxu0 0.0
        %4388 = vmatprep.subr.mxu0 0.0
        %4389 = vmatpush2.msra.mxu0 0.0
        %4390 = vmatprep.subr.mxu0 0.0
        %4391 = vmatpush2.msra.mxu0 0.0
        %4392 = vmatprep.subr.mxu0 0.0
        %4393 = vmatpush2.msra.mxu0 0.0
        %4394 = vmatprep.subr.mxu0 0.0
        %4395 = vmatpush2.msra.mxu0 0.0
        %4396 = vmatprep.subr.mxu0 0.0
        %4397 = vmatpush2.msra.mxu0 0.0
        %4398 = vmatprep.subr.mxu0 0.0
        %4399 = vmatpush2.msra.mxu0 0.0
        %4400 = vmatprep.subr.mxu0 0.0
        %4401 = vmatpush2.msra.mxu0 0.0
        %4402 = vmatprep.subr.mxu0 0.0
        %4403 = vmatpush2.msra.mxu0 0.0
        %4404 = vmatprep.subr.mxu0 0.0
        %4405 = vmatpush2.msra.mxu0 0.0
        %4406 = vmatprep.subr.mxu0 0.0
        %4407 = vmatpush2.msra.mxu0 0.0
        %4408 = vmatprep.subr.mxu0 0.0
        %4409 = vmatpush2.msra.mxu0 0.0
        %4410 = vmatprep.subr.mxu0 0.0
        %4411 = vmatpush2.msra.mxu0 0.0
        %4412 = vmatprep.subr.mxu0 0.0
        %4413 = vmatpush2.msra.mxu0 0.0
        %4414 = vmatprep.mubr.f32.mxu0 0.0
        %4415 = vmatmul.mubr.f32.gmra.mxu0 %v4348
        %v4416 = vpop.f32.mrf.mxu0
        %v4417 = vadd.f32 0.0, %v4416
        %v4418 = vpop.f32.mrf.mxu0
        %v4419 = vadd.f32 0.0, %v4418
        %4420 = vdwg.mxu0
        %v4422 = vsel %vm1601, %v1282, 0
        %4424 = vmatprep.subr.mxu0 0.0
        %4425 = vmatpush1.msra.mxu0 0.0
        %4426 = vmatprep.subr.mxu0 0.0
        %4427 = vmatpush1.msra.mxu0 0.0
        %4428 = vmatprep.subr.mxu0 0.0
        %4429 = vmatpush1.msra.mxu0 0.0
        %4430 = vmatprep.subr.mxu0 0.0
        %4431 = vmatpush1.msra.mxu0 0.0
        %4432 = vmatprep.subr.mxu0 0.0
        %4433 = vmatpush1.msra.mxu0 0.0
        %4434 = vmatprep.subr.mxu0 0.0
        %4435 = vmatpush1.msra.mxu0 0.0
        %4436 = vmatprep.subr.mxu0 0.0
        %4437 = vmatpush1.msra.mxu0 0.0
        %4438 = vmatprep.subr.mxu0 0.0
        %4439 = vmatpush1.msra.mxu0 0.0
        %4440 = vmatprep.subr.mxu0 %v4330
        %4441 = vmatpush1.msra.mxu0 %v4329
        %4442 = vmatprep.subr.mxu0 %v4328
        %4443 = vmatpush1.msra.mxu0 %v4327
        %4444 = vmatprep.subr.mxu0 %v4326
        %4445 = vmatpush1.msra.mxu0 %v4325
        %4446 = vmatprep.subr.mxu0 %v4324
        %4447 = vmatpush1.msra.mxu0 %v4323
        %4448 = vmatprep.subr.mxu0 %v4322
        %4449 = vmatpush1.msra.mxu0 %v4321
        %4450 = vmatprep.subr.mxu0 %v4320
        %4451 = vmatpush1.msra.mxu0 %v4319
        %4452 = vmatprep.subr.mxu0 %v4318
        %4453 = vmatpush1.msra.mxu0 %v4317
        %4454 = vmatprep.subr.mxu0 %v4316
        %4455 = vmatpush1.msra.mxu0 %v4315
        %4456 = vmatprep.subr.mxu0 0.0
        %4457 = vmatpush2.msra.mxu0 0.0
        %4458 = vmatprep.subr.mxu0 0.0
        %4459 = vmatpush2.msra.mxu0 0.0
        %4460 = vmatprep.subr.mxu0 0.0
        %4461 = vmatpush2.msra.mxu0 0.0
        %4462 = vmatprep.subr.mxu0 0.0
        %4463 = vmatpush2.msra.mxu0 0.0
        %4464 = vmatprep.subr.mxu0 0.0
        %4465 = vmatpush2.msra.mxu0 0.0
        %4466 = vmatprep.subr.mxu0 0.0
        %4467 = vmatpush2.msra.mxu0 0.0
        %4468 = vmatprep.subr.mxu0 0.0
        %4469 = vmatpush2.msra.mxu0 0.0
        %4470 = vmatprep.subr.mxu0 0.0
        %4471 = vmatpush2.msra.mxu0 0.0
        %4472 = vmatprep.subr.mxu0 0.0
        %4473 = vmatpush2.msra.mxu0 0.0
        %4474 = vmatprep.subr.mxu0 0.0
        %4475 = vmatpush2.msra.mxu0 0.0
        %4476 = vmatprep.subr.mxu0 0.0
        %4477 = vmatpush2.msra.mxu0 0.0
        %4478 = vmatprep.subr.mxu0 0.0
        %4479 = vmatpush2.msra.mxu0 0.0
        %4480 = vmatprep.subr.mxu0 0.0
        %4481 = vmatpush2.msra.mxu0 0.0
        %4482 = vmatprep.subr.mxu0 0.0
        %4483 = vmatpush2.msra.mxu0 0.0
        %4484 = vmatprep.subr.mxu0 0.0
        %4485 = vmatpush2.msra.mxu0 0.0
        %4486 = vmatprep.subr.mxu0 0.0
        %4487 = vmatpush2.msra.mxu0 0.0
        %4488 = vmatprep.mubr.f32.mxu0 0.0
        %4489 = vmatmul.mubr.f32.gmra.mxu0 %v4422
        %v4490 = vpop.f32.mrf.mxu0
        %v4491 = vadd.f32 %v4417, %v4490
        %v4492 = vpop.f32.mrf.mxu0
        %v4493 = vadd.f32 %v4419, %v4492
        %4494 = vdwg.mxu0
        %v4495 = vld [vmem:[#allocation33] sm:$0xff]
        %v4496 = vld [vmem:[#allocation34] sm:$0xff]
        %v4498 = vsel %vm1675, %v4496, 0
        %4500 = vmatprep.subr.mxu0 0.0
        %4501 = vmatpush1.msra.mxu0 0.0
        %4502 = vmatprep.subr.mxu0 0.0
        %4503 = vmatpush1.msra.mxu0 0.0
        %4504 = vmatprep.subr.mxu0 0.0
        %4505 = vmatpush1.msra.mxu0 0.0
        %4506 = vmatprep.subr.mxu0 0.0
        %4507 = vmatpush1.msra.mxu0 0.0
        %4508 = vmatprep.subr.mxu0 0.0
        %4509 = vmatpush1.msra.mxu0 0.0
        %4510 = vmatprep.subr.mxu0 0.0
        %4511 = vmatpush1.msra.mxu0 0.0
        %4512 = vmatprep.subr.mxu0 0.0
        %4513 = vmatpush1.msra.mxu0 0.0
        %4514 = vmatprep.subr.mxu0 0.0
        %4515 = vmatpush1.msra.mxu0 0.0
        %4516 = vmatprep.subr.mxu0 0.0
        %4517 = vmatpush1.msra.mxu0 0.0
        %4518 = vmatprep.subr.mxu0 0.0
        %4519 = vmatpush1.msra.mxu0 0.0
        %4520 = vmatprep.subr.mxu0 0.0
        %4521 = vmatpush1.msra.mxu0 0.0
        %4522 = vmatprep.subr.mxu0 0.0
        %4523 = vmatpush1.msra.mxu0 0.0
        %4524 = vmatprep.subr.mxu0 0.0
        %4525 = vmatpush1.msra.mxu0 0.0
        %4526 = vmatprep.subr.mxu0 0.0
        %4527 = vmatpush1.msra.mxu0 0.0
        %4528 = vmatprep.subr.mxu0 0.0
        %4529 = vmatpush1.msra.mxu0 0.0
        %4530 = vmatprep.subr.mxu0 %v4313
        %4531 = vmatpush1.msra.mxu0 %v4311
        %4532 = vmatprep.subr.mxu0 0.0
        %4533 = vmatpush2.msra.mxu0 0.0
        %4534 = vmatprep.subr.mxu0 0.0
        %4535 = vmatpush2.msra.mxu0 0.0
        %4536 = vmatprep.subr.mxu0 0.0
        %4537 = vmatpush2.msra.mxu0 0.0
        %4538 = vmatprep.subr.mxu0 0.0
        %4539 = vmatpush2.msra.mxu0 0.0
        %4540 = vmatprep.subr.mxu0 0.0
        %4541 = vmatpush2.msra.mxu0 0.0
        %4542 = vmatprep.subr.mxu0 0.0
        %4543 = vmatpush2.msra.mxu0 0.0
        %4544 = vmatprep.subr.mxu0 0.0
        %4545 = vmatpush2.msra.mxu0 0.0
        %4546 = vmatprep.subr.mxu0 0.0
        %4547 = vmatpush2.msra.mxu0 0.0
        %4548 = vmatprep.subr.mxu0 0.0
        %4549 = vmatpush2.msra.mxu0 0.0
        %4550 = vmatprep.subr.mxu0 0.0
        %4551 = vmatpush2.msra.mxu0 0.0
        %4552 = vmatprep.subr.mxu0 0.0
        %4553 = vmatpush2.msra.mxu0 0.0
        %4554 = vmatprep.subr.mxu0 0.0
        %4555 = vmatpush2.msra.mxu0 0.0
        %4556 = vmatprep.subr.mxu0 0.0
        %4557 = vmatpush2.msra.mxu0 0.0
        %4558 = vmatprep.subr.mxu0 0.0
        %4559 = vmatpush2.msra.mxu0 0.0
        %4560 = vmatprep.subr.mxu0 0.0
        %4561 = vmatpush2.msra.mxu0 0.0
        %4562 = vmatprep.subr.mxu0 0.0
        %4563 = vmatpush2.msra.mxu0 0.0
        %4564 = vmatprep.mubr.f32.mxu0 0.0
        %4565 = vmatmul.mubr.f32.gmra.mxu0 %v4498
        %v4566 = vpop.f32.mrf.mxu0
        %v4567 = vadd.f32 0.0, %v4566
        %v4568 = vpop.f32.mrf.mxu0
        %v4569 = vadd.f32 0.0, %v4568
        %4570 = vdwg.mxu0
        %v4572 = vsel %vm1675, %v4495, 0
        %4574 = vmatprep.subr.mxu0 0.0
        %4575 = vmatpush1.msra.mxu0 0.0
        %4576 = vmatprep.subr.mxu0 0.0
        %4577 = vmatpush1.msra.mxu0 0.0
        %4578 = vmatprep.subr.mxu0 0.0
        %4579 = vmatpush1.msra.mxu0 0.0
        %4580 = vmatprep.subr.mxu0 0.0
        %4581 = vmatpush1.msra.mxu0 0.0
        %4582 = vmatprep.subr.mxu0 0.0
        %4583 = vmatpush1.msra.mxu0 0.0
        %4584 = vmatprep.subr.mxu0 0.0
        %4585 = vmatpush1.msra.mxu0 0.0
        %4586 = vmatprep.subr.mxu0 0.0
        %4587 = vmatpush1.msra.mxu0 0.0
        %4588 = vmatprep.subr.mxu0 0.0
        %4589 = vmatpush1.msra.mxu0 0.0
        %4590 = vmatprep.subr.mxu0 0.0
        %4591 = vmatpush1.msra.mxu0 0.0
        %4592 = vmatprep.subr.mxu0 0.0
        %4593 = vmatpush1.msra.mxu0 0.0
        %4594 = vmatprep.subr.mxu0 0.0
        %4595 = vmatpush1.msra.mxu0 0.0
        %4596 = vmatprep.subr.mxu0 0.0
        %4597 = vmatpush1.msra.mxu0 0.0
        %4598 = vmatprep.subr.mxu0 0.0
        %4599 = vmatpush1.msra.mxu0 0.0
        %4600 = vmatprep.subr.mxu0 0.0
        %4601 = vmatpush1.msra.mxu0 0.0
        %4602 = vmatprep.subr.mxu0 0.0
        %4603 = vmatpush1.msra.mxu0 0.0
        %4604 = vmatprep.subr.mxu0 %v4493
        %4605 = vmatpush1.msra.mxu0 %v4491
        %4606 = vmatprep.subr.mxu0 0.0
        %4607 = vmatpush2.msra.mxu0 0.0
        %4608 = vmatprep.subr.mxu0 0.0
        %4609 = vmatpush2.msra.mxu0 0.0
        %4610 = vmatprep.subr.mxu0 0.0
        %4611 = vmatpush2.msra.mxu0 0.0
        %4612 = vmatprep.subr.mxu0 0.0
        %4613 = vmatpush2.msra.mxu0 0.0
        %4614 = vmatprep.subr.mxu0 0.0
        %4615 = vmatpush2.msra.mxu0 0.0
        %4616 = vmatprep.subr.mxu0 0.0
        %4617 = vmatpush2.msra.mxu0 0.0
        %4618 = vmatprep.subr.mxu0 0.0
        %4619 = vmatpush2.msra.mxu0 0.0
        %4620 = vmatprep.subr.mxu0 0.0
        %4621 = vmatpush2.msra.mxu0 0.0
        %4622 = vmatprep.subr.mxu0 0.0
        %4623 = vmatpush2.msra.mxu0 0.0
        %4624 = vmatprep.subr.mxu0 0.0
        %4625 = vmatpush2.msra.mxu0 0.0
        %4626 = vmatprep.subr.mxu0 0.0
        %4627 = vmatpush2.msra.mxu0 0.0
        %4628 = vmatprep.subr.mxu0 0.0
        %4629 = vmatpush2.msra.mxu0 0.0
        %4630 = vmatprep.subr.mxu0 0.0
        %4631 = vmatpush2.msra.mxu0 0.0
        %4632 = vmatprep.subr.mxu0 0.0
        %4633 = vmatpush2.msra.mxu0 0.0
        %4634 = vmatprep.subr.mxu0 0.0
        %4635 = vmatpush2.msra.mxu0 0.0
        %4636 = vmatprep.subr.mxu0 0.0
        %4637 = vmatpush2.msra.mxu0 0.0
        %4638 = vmatprep.mubr.f32.mxu0 0.0
        %4639 = vmatmul.mubr.f32.gmra.mxu0 %v4572
        %v4640 = vpop.f32.mrf.mxu0
        %v4641 = vadd.f32 %v4567, %v4640
        %v4642 = vpop.f32.mrf.mxu0
        %v4643 = vadd.f32 %v4569, %v4642
        %4644 = vdwg.mxu0
        %v4645 = vld [vmem:[#allocation36] sm:$0xff]
        %v4646 = vld [vmem:[#allocation36 + $0x8] sm:$0xff]
        %v4647 = vadd.f32 %v4641, %v4645
        %v4648 = vadd.f32 %v4643, %v4646
        %v4649 = vmax.f32 %v4647, 0.0
        %v4650 = vmax.f32 %v4648, 0.0
        %v4651 = vld [vmem:[#allocation37] sm:$0xff]
        %v4652 = vld [vmem:[#allocation39] sm:$0xff]
        %v4653 = vld [vmem:[#allocation39 + $0x8] sm:$0xff]
        %v4655 = vsel %vm1675, %v4651, 0
        %4657 = vmatprep.subr.mxu0 0.0
        %4658 = vmatpush1.msra.mxu0 0.0
        %4659 = vmatprep.subr.mxu0 0.0
        %4660 = vmatpush1.msra.mxu0 0.0
        %4661 = vmatprep.subr.mxu0 0.0
        %4662 = vmatpush1.msra.mxu0 0.0
        %4663 = vmatprep.subr.mxu0 0.0
        %4664 = vmatpush1.msra.mxu0 0.0
        %4665 = vmatprep.subr.mxu0 0.0
        %4666 = vmatpush1.msra.mxu0 0.0
        %4667 = vmatprep.subr.mxu0 0.0
        %4668 = vmatpush1.msra.mxu0 0.0
        %4669 = vmatprep.subr.mxu0 0.0
        %4670 = vmatpush1.msra.mxu0 0.0
        %4671 = vmatprep.subr.mxu0 0.0
        %4672 = vmatpush1.msra.mxu0 0.0
        %4673 = vmatprep.subr.mxu0 0.0
        %4674 = vmatpush1.msra.mxu0 0.0
        %4675 = vmatprep.subr.mxu0 0.0
        %4676 = vmatpush1.msra.mxu0 0.0
        %4677 = vmatprep.subr.mxu0 0.0
        %4678 = vmatpush1.msra.mxu0 0.0
        %4679 = vmatprep.subr.mxu0 0.0
        %4680 = vmatpush1.msra.mxu0 0.0
        %4681 = vmatprep.subr.mxu0 0.0
        %4682 = vmatpush1.msra.mxu0 0.0
        %4683 = vmatprep.subr.mxu0 0.0
        %4684 = vmatpush1.msra.mxu0 0.0
        %4685 = vmatprep.subr.mxu0 0.0
        %4686 = vmatpush1.msra.mxu0 0.0
        %4687 = vmatprep.subr.mxu0 %v4650
        %4688 = vmatpush1.msra.mxu0 %v4649
        %4689 = vmatprep.subr.mxu0 0.0
        %4690 = vmatpush2.msra.mxu0 0.0
        %4691 = vmatprep.subr.mxu0 0.0
        %4692 = vmatpush2.msra.mxu0 0.0
        %4693 = vmatprep.subr.mxu0 0.0
        %4694 = vmatpush2.msra.mxu0 0.0
        %4695 = vmatprep.subr.mxu0 0.0
        %4696 = vmatpush2.msra.mxu0 0.0
        %4697 = vmatprep.subr.mxu0 0.0
        %4698 = vmatpush2.msra.mxu0 0.0
        %4699 = vmatprep.subr.mxu0 0.0
        %4700 = vmatpush2.msra.mxu0 0.0
        %4701 = vmatprep.subr.mxu0 0.0
        %4702 = vmatpush2.msra.mxu0 0.0
        %4703 = vmatprep.subr.mxu0 0.0
        %4704 = vmatpush2.msra.mxu0 0.0
        %4705 = vmatprep.subr.mxu0 0.0
        %4706 = vmatpush2.msra.mxu0 0.0
        %4707 = vmatprep.subr.mxu0 0.0
        %4708 = vmatpush2.msra.mxu0 0.0
        %4709 = vmatprep.subr.mxu0 0.0
        %4710 = vmatpush2.msra.mxu0 0.0
        %4711 = vmatprep.subr.mxu0 0.0
        %4712 = vmatpush2.msra.mxu0 0.0
        %4713 = vmatprep.subr.mxu0 0.0
        %4714 = vmatpush2.msra.mxu0 0.0
        %4715 = vmatprep.subr.mxu0 0.0
        %4716 = vmatpush2.msra.mxu0 0.0
        %4717 = vmatprep.subr.mxu0 0.0
        %4718 = vmatpush2.msra.mxu0 0.0
        %4719 = vmatprep.subr.mxu0 0.0
        %4720 = vmatpush2.msra.mxu0 0.0
        %4721 = vmatprep.mubr.f32.mxu0 0.0
        %4722 = vmatmul.mubr.f32.gmra.mxu0 %v4655
        %v4723 = vpop.f32.mrf.mxu0
        %v4724 = vadd.f32 %v4652, %v4723
        %v4725 = vpop.f32.mrf.mxu0
        %v4726 = vadd.f32 %v4653, %v4725
        %4727 = vdwg.mxu0
        %v4728 = vadd.f32 %v4724, %v1181
        %v4729 = vadd.f32 %v4726, %v1182
        %4730 = vst [vmem:[%s1180] sm:$0xff] %v4728
        %4731 = vst [vmem:[%s1180 + $0x8] sm:$0xff] %v4729
        %p4732 = scmp.lt.s32.totalorder %s52, 1
        %s4733 = scalar_select %p4732, %s52, 1
        %s4734 = smul.addr %s4733, 2
        %s4735 = smul.addr %s4734, 8
        %s4736 = scalar_lea.vmem %s28, %s4735
        // Predicated region
        $region233: #{wtab_forward.1} parent=131 // pred_check
          %p4737 = pneg %p663
        $region234: #{wtab_forward.1} parent=131 // pred_check_branch
          %4739 = sbr.rel (%p4737) target = $region236
        $region235: #{wtab_forward.1} parent=131 // pred_region
          _
        $region236: #{wtab_forward.1} parent=131 // pred_fallthru
          _
      $region132: #{wtab_forward.1} parent=5 // pred_fallthru
        _
      %p4740 = scmp.le.s32.totalorder 2, %s47
      // Predicated region
      $region237: #{wtab_forward.1} parent=5 // pred_check
        %p4741 = pneg %p4740
      $region238: #{wtab_forward.1} parent=5 // pred_check_branch
        %4743 = sbr.rel (%p4741) target = $region240
      $region239: #{wtab_forward.1} parent=5 // pred_region
        %s4744 = ssub.s32 %s47, 2
        // Predicated region
        $region241: #{wtab_forward.1} parent=239 // pred_check
          %p4745 = pneg %p669
        $region242: #{wtab_forward.1} parent=239 // pred_check_branch
          %4747 = sbr.rel (%p4745) target = $region244
        $region243: #{wtab_forward.1} parent=239 // pred_region
          %p4748 = scmp.lt.s32.totalorder %s53, 1
          %s4749 = scalar_select %p4748, %s53, 1
          %s4750 = smul.addr %s4749, 2
          %s4751 = smul.addr %s4750, 8
          %s4752 = scalar_lea.vmem %s28, %s4751
        $region244: #{wtab_forward.1} parent=239 // pred_fallthru
          _
      $region240: #{wtab_forward.1} parent=5 // pred_fallthru
        _
    $region6: #{wtab_forward.1} parent=1 // loop_footer
      %s51 = sadd.s32 1, %s47
    $region7: #{wtab_forward.1} parent=1 // loop_footer_branch
      %46 = sbr.rel target = $region3
    $region8: #{wtab_forward.1} parent=1 // loop_exit
      _
    %4753 = vsyncpa [#allocation3], 1
    %s4754 = scalar_lea.sflag [#allocation3], 1
    %4755 = vsyncpa %s4754, 1
    %4756 = vsyncpa [#allocation5], 1
    %4757 = vsyncpa [#allocation8], 1
    %4758 = vsyncpa [#allocation11], 1
    %4759 = vsyncpa [#allocation14], 1
    %4760 = vsyncpa [#allocation17], 1
    %4761 = vsyncpa [#allocation20], 1
    %4762 = vsyncpa [#allocation23], 1
    %4763 = vsyncpa [#allocation26], 1
    %4764 = vsyncpa [#allocation29], 1
    %4765 = vsyncpa [#allocation32], 1
    %4766 = vsyncpa [#allocation35], 1
    %4767 = vsyncpa [#allocation38], 1

</llo_original>
